<compile_context>
chip_gen: v7x
topology: tpu7x:2x2x1
jax: 0.10.0
libtpu: 0.0.40
codegen_flags: <defaults>
</compile_context>

<pallas_src>
import functools

import jax
import jax.numpy as jnp
from jax.experimental import pallas as pl
from jax.experimental.pallas import tpu as pltpu

LANE = 128


def _round_up(x, m):
    return ((x + m - 1) // m) * m


def _nbytes(a):
    return int(a.size) * int(a.dtype.itemsize)


# -----------------------------------------------------------------------------
# Pallas kernel: the whole K-step RGCN stack in one invocation (no grid).
# -----------------------------------------------------------------------------
def _kstep_rgcn_kernel(a_ref, x_ref, wcat_ref, wroot_ref, b_ref, out_ref,
                       xc_ref, z_ref, acc_ref, *,
                       K, R, n_pad, c_pad, compute_dtype):
    """a_ref    : (n_pad, R*n_pad)      adjacency, relations stacked on lanes
       x_ref    : (n_pad, c_pad)        padded node features (compute dtype)
       wcat_ref : (K, c_pad, R*c_pad)   per-layer relation weights, lane-concat
       wroot_ref: (K, c_pad, c_pad)     per-layer self-loop (root) weight
       b_ref    : (K, 1, c_pad)         per-layer bias (f32)
       out_ref  : (n_pad, c_pad)        f32 output of the last layer
       xc_ref   : scratch (n_pad, c_pad)      inter-layer activation
       z_ref    : scratch (R*n_pad, c_pad)    stacked Z_r = x @ W_r
       acc_ref  : scratch (n_pad, c_pad) f32  per-layer accumulator"""
    xc_ref[...] = x_ref[...]
    for l in range(K):                       # K small & static -> unrolled
        # (1) Relation weight stage: one wide matmul x @ W_cat fills the MXU
        #     columns (R*c_pad >= 384 on v6e/v7x's 256-wide MXU).
        z_wide = jnp.dot(xc_ref[...], wcat_ref[l],
                         preferred_element_type=jnp.float32)   # (n_pad, R*c_pad)
        zc = z_wide.astype(compute_dtype)
        # Re-layout lane-blocks -> sublane-blocks of the Z_stack scratch
        # (static, 128-aligned slices; cheap VMEM stores).
        for r in range(R):
            z_ref[r * n_pad:(r + 1) * n_pad, :] = zc[:, r * c_pad:(r + 1) * c_pad]
        # (2) Single aggregation matmul over ALL relations (contraction depth
        #     R*n_pad), plus root/self-loop transform, plus bias. Adjacency is
        #     read straight from its VMEM ref (never hoisted/copied).
        acc_ref[...] = (
            jnp.dot(a_ref[...], z_ref[...], preferred_element_type=jnp.float32)
            + jnp.dot(xc_ref[...], wroot_ref[l], preferred_element_type=jnp.float32)
            + b_ref[l])                      # (1, c_pad) broadcasts over rows
        if l != K - 1:                       # ReLU on all but the last layer
            xc_ref[...] = jnp.maximum(acc_ref[...], 0.0).astype(compute_dtype)
    out_ref[...] = acc_ref[...]


def _kstep_rgcn_pallas(a_h, x_pad, w_cat, w_root, b, *, K, R, n_pad, c_pad,
                       compute_dtype):
    kernel = functools.partial(_kstep_rgcn_kernel, K=K, R=R, n_pad=n_pad,
                               c_pad=c_pad, compute_dtype=compute_dtype)
    itemsize = jnp.dtype(compute_dtype).itemsize
    out_bytes = n_pad * c_pad * 4
    operand_bytes = (_nbytes(a_h) + _nbytes(x_pad) + _nbytes(w_cat)
                     + _nbytes(w_root) + _nbytes(b) + out_bytes)
    scratch_bytes = (n_pad * c_pad * itemsize            # xc
                     + R * n_pad * c_pad * itemsize      # z_stack
                     + n_pad * c_pad * 4)                # acc (f32)
    vmem_limit = min(100 * 1024 * 1024,
                     max(8 * 1024 * 1024,
                         int(1.25 * (operand_bytes + scratch_bytes))))
    flops_per_layer = (2 * n_pad * c_pad * (R * c_pad)      # weight stage
                       + 2 * n_pad * (R * n_pad) * c_pad    # aggregation
                       + 2 * n_pad * c_pad * c_pad)         # root
    cost = pl.CostEstimate(flops=K * flops_per_layer, transcendentals=0,
                           bytes_accessed=operand_bytes)
    return pl.pallas_call(
        kernel,
        out_shape=jax.ShapeDtypeStruct((n_pad, c_pad), jnp.float32),
        in_specs=[pl.BlockSpec(memory_space=pltpu.MemorySpace.VMEM)] * 5,
        out_specs=pl.BlockSpec(memory_space=pltpu.MemorySpace.VMEM),
        scratch_shapes=[
            pltpu.VMEM((n_pad, c_pad), compute_dtype),        # xc
            pltpu.VMEM((R * n_pad, c_pad), compute_dtype),    # z_stack
            pltpu.VMEM((n_pad, c_pad), jnp.float32),          # acc
        ],
        compiler_params=pltpu.CompilerParams(vmem_limit_bytes=vmem_limit),
        cost_estimate=cost,
    )(a_h, x_pad, w_cat, w_root, b)


# -----------------------------------------------------------------------------
# Host-side preparation (hoist out of the per-step hot path when static).
# -----------------------------------------------------------------------------
def prepare_adjacency(edge_index, edge_attr, num_nodes, num_relations, n_pad,
                      compute_dtype):
    """Dense per-relation adjacency, lane-concatenated: (n_pad, R*n_pad) with
    A_h[i, r*n_pad + j] = #edges(j -> i, relation r). Built in f32 (exact
    counts); bf16 cast is exact while duplicate-edge counts stay <= 256
    (always true at PVCGN multigraph sizes)."""
    del num_nodes  # padding rows/cols beyond real nodes stay zero
    src, dst = edge_index[0], edge_index[1]
    adj = jnp.zeros((num_relations, n_pad, n_pad), jnp.float32)
    adj = adj.at[edge_attr, dst, src].add(1.0)            # sum aggregation
    a_h = jnp.transpose(adj, (1, 0, 2)).reshape(n_pad, num_relations * n_pad)
    return a_h.astype(compute_dtype)


def prepare_params(layer_params, num_relations, in_channels, c_pad,
                   compute_dtype):
    """Pack per-layer weights: W_cat (relations concatenated along the output
    lane axis), W_root (self-loop), bias. Basis decomposition is resolved here
    (tiny einsum, one-time cost)."""
    w_cat_layers, w_root_layers, b_layers = [], [], []
    c_in = in_channels
    for att, basis, root, bias in layer_params:
        c_out = root.shape[1]
        w_r = jnp.einsum('rb,bio->rio', att, basis)            # (R, c_in, c_out)
        wc = jnp.zeros((num_relations, c_pad, c_pad), jnp.float32)
        wc = wc.at[:, :c_in, :c_out].set(w_r)
        # (c_pad, R*c_pad): block r occupies lanes [r*c_pad, (r+1)*c_pad)
        w_cat_layers.append(
            jnp.transpose(wc, (1, 0, 2)).reshape(c_pad, num_relations * c_pad))
        wr = jnp.zeros((c_pad, c_pad), jnp.float32).at[:c_in, :c_out].set(root)
        w_root_layers.append(wr)
        b_layers.append(jnp.zeros((1, c_pad), jnp.float32).at[0, :c_out].set(bias))
        c_in = c_out
    w_cat = jnp.stack(w_cat_layers).astype(compute_dtype)     # (K, c_pad, R*c_pad)
    w_root = jnp.stack(w_root_layers).astype(compute_dtype)   # (K, c_pad, c_pad)
    b = jnp.stack(b_layers)                                    # (K, 1, c_pad) f32
    return w_cat, w_root, b


def kstep_rgcn_forward(x, edge_index, edge_attr, layer_params, num_nodes,
                       num_relations, compute_dtype=jnp.bfloat16):
    """Matches KStepRGCN.forward: K RGCNConv layers (sum aggregation, basis
    decomposition, root + bias) with ReLU between layers (not after the last)."""
    K = len(layer_params)
    R = num_relations
    in_channels = x.shape[1]
    out_channels = layer_params[-1][2].shape[1]
    c_pad = _round_up(max(in_channels, out_channels), LANE)
    n_pad = _round_up(num_nodes, LANE)

    a_h = prepare_adjacency(edge_index, edge_attr, num_nodes, num_relations,
                            n_pad, compute_dtype)
    w_cat, w_root, b = prepare_params(layer_params, num_relations, in_channels,
                                      c_pad, compute_dtype)

    x_pad = jnp.zeros((n_pad, c_pad), jnp.float32)
    x_pad = x_pad.at[:num_nodes, :in_channels].set(x.astype(jnp.float32))
    x_pad = x_pad.astype(compute_dtype)

    out_pad = _kstep_rgcn_pallas(a_h, x_pad, w_cat, w_root, b, K=K, R=R,
                                 n_pad=n_pad, c_pad=c_pad,
                                 compute_dtype=compute_dtype)
    return out_pad[:num_nodes, :out_channels].astype(x.dtype)


# -----------------------------------------------------------------------------
# Pure-JAX reference (per-edge gather / segment-sum) for correctness checks.
# -----------------------------------------------------------------------------
def kstep_rgcn_reference(x, edge_index, edge_attr, layer_params, num_nodes):
    src, dst = edge_index[0], edge_index[1]
    K = len(layer_params)
    for i, (att, basis, root, bias) in enumerate(layer_params):
        w = jnp.einsum('rb,bio->rio', att, basis)
        w_e = w[edge_attr]                                   # (E, C_in, C_out)
        msg = jnp.einsum('ec,eco->eo', x[src], w_e)          # (E, C_out)
        aggr = jax.ops.segment_sum(msg, dst, num_segments=num_nodes)
        x_new = aggr + x @ root + bias
        x = jnp.maximum(x_new, 0.0) if i != K - 1 else x_new
    return x


# -----------------------------------------------------------------------------
# Deterministic parameter init (shapes per RGCNConv.__init__)
# -----------------------------------------------------------------------------
def init_params(key, in_channels, out_channels, num_relations, num_bases, K):
    params = []
    c_in = in_channels
    for _ in range(K):
        c_out = out_channels
        key, k1, k2, k3, k4 = jax.random.split(key, 5)
        scale = 1.0 / jnp.sqrt(jnp.float32(c_in))
        basis = jax.random.normal(k1, (num_bases, c_in, c_out), jnp.float32) * scale
        att = jax.random.normal(k2, (num_relations, num_bases), jnp.float32) * scale
        root = jax.random.normal(k3, (c_in, c_out), jnp.float32) * scale
        bias = jax.random.normal(k4, (c_out,), jnp.float32) * 0.1
        params.append((att, basis, root, bias))
        c_in = out_channels
    return params


if __name__ == "__main__":
    # Small, module-consistent shapes.
    num_nodes = 16
    in_channels = 16
    out_channels = 32
    num_relations = 3
    num_bases = 2
    K = 3
    num_edges = 48

    key = jax.random.PRNGKey(0)
    kx, ke_src, ke_dst, ke_rel, kp = jax.random.split(key, 5)

    x = jax.random.normal(kx, (num_nodes, in_channels), jnp.float32)
    src = jax.random.randint(ke_src, (num_edges,), 0, num_nodes, jnp.int32)
    dst = jax.random.randint(ke_dst, (num_edges,), 0, num_nodes, jnp.int32)
    edge_index = jnp.stack([src, dst], axis=0)                 # (2, E)
    edge_attr = jax.random.randint(ke_rel, (num_edges,), 0, num_relations,
                                   jnp.int32)                  # (E,)

    layer_params = init_params(kp, in_channels, out_channels, num_relations,
                               num_bases, K)

    ref = kstep_rgcn_reference(x, edge_index, edge_attr, layer_params, num_nodes)

    # 1) Exact-semantics check: f32 compute path vs. per-edge reference.
    out_f32 = kstep_rgcn_forward(x, edge_index, edge_attr, layer_params,
                                 num_nodes, num_relations,
                                 compute_dtype=jnp.float32)
    out_f32 = jax.block_until_ready(out_f32)
    assert out_f32.shape == (num_nodes, out_channels)
    assert jnp.allclose(out_f32, ref, rtol=1e-3, atol=1e-3), (
        float(jnp.max(jnp.abs(out_f32 - ref))))

    # 2) Performance path: bf16 operands, f32 accumulation (loose tolerance;
    #    inter-layer activations are bf16 so error compounds mildly over K).
    out_bf16 = kstep_rgcn_forward(x, edge_index, edge_attr, layer_params,
                                  num_nodes, num_relations,
                                  compute_dtype=jnp.bfloat16)
    out_bf16 = jax.block_until_ready(out_bf16)
    assert out_bf16.shape == (num_nodes, out_channels)
    err = float(jnp.max(jnp.abs(out_bf16 - ref)))
    scale = float(jnp.max(jnp.abs(ref)))
    assert err <= 5e-2 * scale + 5e-2, (err, scale)

    print("KERNEL_OK")
</pallas_src>

<mosaic_0001>
module attributes {stable_mosaic.version = 11 : i64} {
  func.func @_kstep_rgcn_kernel(%arg0: memref<128x384xf32, #tpu.memory_space<vmem>>, %arg1: memref<128x128xf32, #tpu.memory_space<vmem>>, %arg2: memref<3x128x384xf32, #tpu.memory_space<vmem>>, %arg3: memref<3x128x128xf32, #tpu.memory_space<vmem>>, %arg4: memref<3x1x128xf32, #tpu.memory_space<vmem>>, %arg5: memref<128x128xf32, #tpu.memory_space<vmem>>, %arg6: memref<128x128xf32, #tpu.memory_space<vmem>>, %arg7: memref<384x128xf32, #tpu.memory_space<vmem>>, %arg8: memref<128x128xf32, #tpu.memory_space<vmem>>) attributes {dimension_semantics = [], scalar_prefetch = 0 : i64, scratch_operands = 3 : i64, tpu.core_type = #tpu.core_type<tc>} {
    %c0 = arith.constant 0 : index
    %c0_0 = arith.constant 0 : index
    %0 = vector.load %arg1[%c0, %c0_0] : memref<128x128xf32, #tpu.memory_space<vmem>>, vector<128x128xf32>
    %c0_1 = arith.constant 0 : index
    %c0_2 = arith.constant 0 : index
    %1 = vector.load %arg6[%c0_1, %c0_2] : memref<128x128xf32, #tpu.memory_space<vmem>>, vector<128x128xf32>
    tpu.vector_store %arg6[%c0_1, %c0_2], %0 {strides = array<i32>} : memref<128x128xf32, #tpu.memory_space<vmem>>, vector<128x128xf32>,
    %c0_3 = arith.constant 0 : index
    %c0_4 = arith.constant 0 : index
    %2 = vector.load %arg6[%c0_3, %c0_4] : memref<128x128xf32, #tpu.memory_space<vmem>>, vector<128x128xf32>
    %c0_5 = arith.constant 0 : index
    %c0_6 = arith.constant 0 : index
    %c0_7 = arith.constant 0 : index
    %3 = vector.load %arg2[%c0_5, %c0_6, %c0_7] : memref<3x128x384xf32, #tpu.memory_space<vmem>>, vector<1x128x384xf32>
    %4 = vector.shape_cast %3 : vector<1x128x384xf32> to vector<128x384xf32>
    %cst = arith.constant dense<0.000000e+00> : vector<128x384xf32>
    %5 = tpu.matmul %2, %4, %cst {dimension_numbers = #tpu.dot_dimension_numbers<[1], [0], [0], [1], [0, 0, 1, 1], [], []>} : vector<128x128xf32>, vector<128x384xf32>, vector<128x384xf32> -> vector<128x384xf32>
    %6 = vector.extract_strided_slice %5 {offsets = [0, 0], sizes = [128, 128], strides = [1, 1]} : vector<128x384xf32> to vector<128x128xf32>
    %c0_8 = arith.constant 0 : index
    %c0_9 = arith.constant 0 : index
    %7 = vector.load %arg7[%c0_8, %c0_9] : memref<384x128xf32, #tpu.memory_space<vmem>>, vector<128x128xf32>
    tpu.vector_store %arg7[%c0_8, %c0_9], %6 {strides = array<i32>} : memref<384x128xf32, #tpu.memory_space<vmem>>, vector<128x128xf32>,
    %8 = vector.extract_strided_slice %5 {offsets = [0, 128], sizes = [128, 128], strides = [1, 1]} : vector<128x384xf32> to vector<128x128xf32>
    %c128 = arith.constant 128 : index
    %c0_10 = arith.constant 0 : index
    %9 = vector.load %arg7[%c128, %c0_10] : memref<384x128xf32, #tpu.memory_space<vmem>>, vector<128x128xf32>
    tpu.vector_store %arg7[%c128, %c0_10], %8 {strides = array<i32>} : memref<384x128xf32, #tpu.memory_space<vmem>>, vector<128x128xf32>,
    %10 = vector.extract_strided_slice %5 {offsets = [0, 256], sizes = [128, 128], strides = [1, 1]} : vector<128x384xf32> to vector<128x128xf32>
    %c256 = arith.constant 256 : index
    %c0_11 = arith.constant 0 : index
    %11 = vector.load %arg7[%c256, %c0_11] : memref<384x128xf32, #tpu.memory_space<vmem>>, vector<128x128xf32>
    tpu.vector_store %arg7[%c256, %c0_11], %10 {strides = array<i32>} : memref<384x128xf32, #tpu.memory_space<vmem>>, vector<128x128xf32>,
    %c0_12 = arith.constant 0 : index
    %c0_13 = arith.constant 0 : index
    %12 = vector.load %arg0[%c0_12, %c0_13] : memref<128x384xf32, #tpu.memory_space<vmem>>, vector<128x384xf32>
    %c0_14 = arith.constant 0 : index
    %c0_15 = arith.constant 0 : index
    %13 = vector.load %arg7[%c0_14, %c0_15] : memref<384x128xf32, #tpu.memory_space<vmem>>, vector<384x128xf32>
    %cst_16 = arith.constant dense<0.000000e+00> : vector<128x128xf32>
    %14 = tpu.matmul %12, %13, %cst_16 {dimension_numbers = #tpu.dot_dimension_numbers<[1], [0], [0], [1], [0, 0, 1, 1], [], []>} : vector<128x384xf32>, vector<384x128xf32>, vector<128x128xf32> -> vector<128x128xf32>
    %c0_17 = arith.constant 0 : index
    %c0_18 = arith.constant 0 : index
    %15 = vector.load %arg6[%c0_17, %c0_18] : memref<128x128xf32, #tpu.memory_space<vmem>>, vector<128x128xf32>
    %c0_19 = arith.constant 0 : index
    %c0_20 = arith.constant 0 : index
    %c0_21 = arith.constant 0 : index
    %16 = vector.load %arg3[%c0_19, %c0_20, %c0_21] : memref<3x128x128xf32, #tpu.memory_space<vmem>>, vector<1x128x128xf32>
    %17 = vector.shape_cast %16 : vector<1x128x128xf32> to vector<128x128xf32>
    %cst_22 = arith.constant dense<0.000000e+00> : vector<128x128xf32>
    %18 = tpu.matmul %15, %17, %cst_22 {dimension_numbers = #tpu.dot_dimension_numbers<[1], [0], [0], [1], [0, 0, 1, 1], [], []>} : vector<128x128xf32>, vector<128x128xf32>, vector<128x128xf32> -> vector<128x128xf32>
    %19 = arith.addf %14, %18 : vector<128x128xf32>
    %c0_23 = arith.constant 0 : index
    %c0_24 = arith.constant 0 : index
    %c0_25 = arith.constant 0 : index
    %20 = vector.load %arg4[%c0_23, %c0_24, %c0_25] : memref<3x1x128xf32, #tpu.memory_space<vmem>>, vector<1x1x128xf32>
    %21 = vector.shape_cast %20 : vector<1x1x128xf32> to vector<1x128xf32>
    %22 = vector.broadcast %21 : vector<1x128xf32> to vector<128x128xf32>
    %23 = arith.addf %19, %22 : vector<128x128xf32>
    %c0_26 = arith.constant 0 : index
    %c0_27 = arith.constant 0 : index
    %24 = vector.load %arg8[%c0_26, %c0_27] : memref<128x128xf32, #tpu.memory_space<vmem>>, vector<128x128xf32>
    tpu.vector_store %arg8[%c0_26, %c0_27], %23 {strides = array<i32>} : memref<128x128xf32, #tpu.memory_space<vmem>>, vector<128x128xf32>,
    %c0_28 = arith.constant 0 : index
    %c0_29 = arith.constant 0 : index
    %25 = vector.load %arg8[%c0_28, %c0_29] : memref<128x128xf32, #tpu.memory_space<vmem>>, vector<128x128xf32>
    %cst_30 = arith.constant 0.000000e+00 : f32
    %26 = vector.broadcast %cst_30 : f32 to vector<128x128xf32>
    %27 = arith.maximumf %25, %26 : vector<128x128xf32>
    %c0_31 = arith.constant 0 : index
    %c0_32 = arith.constant 0 : index
    %28 = vector.load %arg6[%c0_31, %c0_32] : memref<128x128xf32, #tpu.memory_space<vmem>>, vector<128x128xf32>
    tpu.vector_store %arg6[%c0_31, %c0_32], %27 {strides = array<i32>} : memref<128x128xf32, #tpu.memory_space<vmem>>, vector<128x128xf32>,
    %c0_33 = arith.constant 0 : index
    %c0_34 = arith.constant 0 : index
    %29 = vector.load %arg6[%c0_33, %c0_34] : memref<128x128xf32, #tpu.memory_space<vmem>>, vector<128x128xf32>
    %c1 = arith.constant 1 : index
    %c0_35 = arith.constant 0 : index
    %c0_36 = arith.constant 0 : index
    %30 = vector.load %arg2[%c1, %c0_35, %c0_36] : memref<3x128x384xf32, #tpu.memory_space<vmem>>, vector<1x128x384xf32>
    %31 = vector.shape_cast %30 : vector<1x128x384xf32> to vector<128x384xf32>
    %cst_37 = arith.constant dense<0.000000e+00> : vector<128x384xf32>
    %32 = tpu.matmul %29, %31, %cst_37 {dimension_numbers = #tpu.dot_dimension_numbers<[1], [0], [0], [1], [0, 0, 1, 1], [], []>} : vector<128x128xf32>, vector<128x384xf32>, vector<128x384xf32> -> vector<128x384xf32>
    %33 = vector.extract_strided_slice %32 {offsets = [0, 0], sizes = [128, 128], strides = [1, 1]} : vector<128x384xf32> to vector<128x128xf32>
    %c0_38 = arith.constant 0 : index
    %c0_39 = arith.constant 0 : index
    %34 = vector.load %arg7[%c0_38, %c0_39] : memref<384x128xf32, #tpu.memory_space<vmem>>, vector<128x128xf32>
    tpu.vector_store %arg7[%c0_38, %c0_39], %33 {strides = array<i32>} : memref<384x128xf32, #tpu.memory_space<vmem>>, vector<128x128xf32>,
    %35 = vector.extract_strided_slice %32 {offsets = [0, 128], sizes = [128, 128], strides = [1, 1]} : vector<128x384xf32> to vector<128x128xf32>
    %c128_40 = arith.constant 128 : index
    %c0_41 = arith.constant 0 : index
    %36 = vector.load %arg7[%c128_40, %c0_41] : memref<384x128xf32, #tpu.memory_space<vmem>>, vector<128x128xf32>
    tpu.vector_store %arg7[%c128_40, %c0_41], %35 {strides = array<i32>} : memref<384x128xf32, #tpu.memory_space<vmem>>, vector<128x128xf32>,
    %37 = vector.extract_strided_slice %32 {offsets = [0, 256], sizes = [128, 128], strides = [1, 1]} : vector<128x384xf32> to vector<128x128xf32>
    %c256_42 = arith.constant 256 : index
    %c0_43 = arith.constant 0 : index
    %38 = vector.load %arg7[%c256_42, %c0_43] : memref<384x128xf32, #tpu.memory_space<vmem>>, vector<128x128xf32>
    tpu.vector_store %arg7[%c256_42, %c0_43], %37 {strides = array<i32>} : memref<384x128xf32, #tpu.memory_space<vmem>>, vector<128x128xf32>,
    %c0_44 = arith.constant 0 : index
    %c0_45 = arith.constant 0 : index
    %39 = vector.load %arg0[%c0_44, %c0_45] : memref<128x384xf32, #tpu.memory_space<vmem>>, vector<128x384xf32>
    %c0_46 = arith.constant 0 : index
    %c0_47 = arith.constant 0 : index
    %40 = vector.load %arg7[%c0_46, %c0_47] : memref<384x128xf32, #tpu.memory_space<vmem>>, vector<384x128xf32>
    %cst_48 = arith.constant dense<0.000000e+00> : vector<128x128xf32>
    %41 = tpu.matmul %39, %40, %cst_48 {dimension_numbers = #tpu.dot_dimension_numbers<[1], [0], [0], [1], [0, 0, 1, 1], [], []>} : vector<128x384xf32>, vector<384x128xf32>, vector<128x128xf32> -> vector<128x128xf32>
    %c0_49 = arith.constant 0 : index
    %c0_50 = arith.constant 0 : index
    %42 = vector.load %arg6[%c0_49, %c0_50] : memref<128x128xf32, #tpu.memory_space<vmem>>, vector<128x128xf32>
    %c1_51 = arith.constant 1 : index
    %c0_52 = arith.constant 0 : index
    %c0_53 = arith.constant 0 : index
    %43 = vector.load %arg3[%c1_51, %c0_52, %c0_53] : memref<3x128x128xf32, #tpu.memory_space<vmem>>, vector<1x128x128xf32>
    %44 = vector.shape_cast %43 : vector<1x128x128xf32> to vector<128x128xf32>
    %cst_54 = arith.constant dense<0.000000e+00> : vector<128x128xf32>
    %45 = tpu.matmul %42, %44, %cst_54 {dimension_numbers = #tpu.dot_dimension_numbers<[1], [0], [0], [1], [0, 0, 1, 1], [], []>} : vector<128x128xf32>, vector<128x128xf32>, vector<128x128xf32> -> vector<128x128xf32>
    %46 = arith.addf %41, %45 : vector<128x128xf32>
    %c1_55 = arith.constant 1 : index
    %c0_56 = arith.constant 0 : index
    %c0_57 = arith.constant 0 : index
    %47 = vector.load %arg4[%c1_55, %c0_56, %c0_57] : memref<3x1x128xf32, #tpu.memory_space<vmem>>, vector<1x1x128xf32>
    %48 = vector.shape_cast %47 : vector<1x1x128xf32> to vector<1x128xf32>
    %49 = vector.broadcast %48 : vector<1x128xf32> to vector<128x128xf32>
    %50 = arith.addf %46, %49 : vector<128x128xf32>
    %c0_58 = arith.constant 0 : index
    %c0_59 = arith.constant 0 : index
    %51 = vector.load %arg8[%c0_58, %c0_59] : memref<128x128xf32, #tpu.memory_space<vmem>>, vector<128x128xf32>
    tpu.vector_store %arg8[%c0_58, %c0_59], %50 {strides = array<i32>} : memref<128x128xf32, #tpu.memory_space<vmem>>, vector<128x128xf32>,
    %c0_60 = arith.constant 0 : index
    %c0_61 = arith.constant 0 : index
    %52 = vector.load %arg8[%c0_60, %c0_61] : memref<128x128xf32, #tpu.memory_space<vmem>>, vector<128x128xf32>
    %cst_62 = arith.constant 0.000000e+00 : f32
    %53 = vector.broadcast %cst_62 : f32 to vector<128x128xf32>
    %54 = arith.maximumf %52, %53 : vector<128x128xf32>
    %c0_63 = arith.constant 0 : index
    %c0_64 = arith.constant 0 : index
    %55 = vector.load %arg6[%c0_63, %c0_64] : memref<128x128xf32, #tpu.memory_space<vmem>>, vector<128x128xf32>
    tpu.vector_store %arg6[%c0_63, %c0_64], %54 {strides = array<i32>} : memref<128x128xf32, #tpu.memory_space<vmem>>, vector<128x128xf32>,
    %c0_65 = arith.constant 0 : index
    %c0_66 = arith.constant 0 : index
    %56 = vector.load %arg6[%c0_65, %c0_66] : memref<128x128xf32, #tpu.memory_space<vmem>>, vector<128x128xf32>
    %c2 = arith.constant 2 : index
    %c0_67 = arith.constant 0 : index
    %c0_68 = arith.constant 0 : index
    %57 = vector.load %arg2[%c2, %c0_67, %c0_68] : memref<3x128x384xf32, #tpu.memory_space<vmem>>, vector<1x128x384xf32>
    %58 = vector.shape_cast %57 : vector<1x128x384xf32> to vector<128x384xf32>
    %cst_69 = arith.constant dense<0.000000e+00> : vector<128x384xf32>
    %59 = tpu.matmul %56, %58, %cst_69 {dimension_numbers = #tpu.dot_dimension_numbers<[1], [0], [0], [1], [0, 0, 1, 1], [], []>} : vector<128x128xf32>, vector<128x384xf32>, vector<128x384xf32> -> vector<128x384xf32>
    %60 = vector.extract_strided_slice %59 {offsets = [0, 0], sizes = [128, 128], strides = [1, 1]} : vector<128x384xf32> to vector<128x128xf32>
    %c0_70 = arith.constant 0 : index
    %c0_71 = arith.constant 0 : index
    %61 = vector.load %arg7[%c0_70, %c0_71] : memref<384x128xf32, #tpu.memory_space<vmem>>, vector<128x128xf32>
    tpu.vector_store %arg7[%c0_70, %c0_71], %60 {strides = array<i32>} : memref<384x128xf32, #tpu.memory_space<vmem>>, vector<128x128xf32>,
    %62 = vector.extract_strided_slice %59 {offsets = [0, 128], sizes = [128, 128], strides = [1, 1]} : vector<128x384xf32> to vector<128x128xf32>
    %c128_72 = arith.constant 128 : index
    %c0_73 = arith.constant 0 : index
    %63 = vector.load %arg7[%c128_72, %c0_73] : memref<384x128xf32, #tpu.memory_space<vmem>>, vector<128x128xf32>
    tpu.vector_store %arg7[%c128_72, %c0_73], %62 {strides = array<i32>} : memref<384x128xf32, #tpu.memory_space<vmem>>, vector<128x128xf32>,
    %64 = vector.extract_strided_slice %59 {offsets = [0, 256], sizes = [128, 128], strides = [1, 1]} : vector<128x384xf32> to vector<128x128xf32>
    %c256_74 = arith.constant 256 : index
    %c0_75 = arith.constant 0 : index
    %65 = vector.load %arg7[%c256_74, %c0_75] : memref<384x128xf32, #tpu.memory_space<vmem>>, vector<128x128xf32>
    tpu.vector_store %arg7[%c256_74, %c0_75], %64 {strides = array<i32>} : memref<384x128xf32, #tpu.memory_space<vmem>>, vector<128x128xf32>,
    %c0_76 = arith.constant 0 : index
    %c0_77 = arith.constant 0 : index
    %66 = vector.load %arg0[%c0_76, %c0_77] : memref<128x384xf32, #tpu.memory_space<vmem>>, vector<128x384xf32>
    %c0_78 = arith.constant 0 : index
    %c0_79 = arith.constant 0 : index
    %67 = vector.load %arg7[%c0_78, %c0_79] : memref<384x128xf32, #tpu.memory_space<vmem>>, vector<384x128xf32>
    %cst_80 = arith.constant dense<0.000000e+00> : vector<128x128xf32>
    %68 = tpu.matmul %66, %67, %cst_80 {dimension_numbers = #tpu.dot_dimension_numbers<[1], [0], [0], [1], [0, 0, 1, 1], [], []>} : vector<128x384xf32>, vector<384x128xf32>, vector<128x128xf32> -> vector<128x128xf32>
    %c0_81 = arith.constant 0 : index
    %c0_82 = arith.constant 0 : index
    %69 = vector.load %arg6[%c0_81, %c0_82] : memref<128x128xf32, #tpu.memory_space<vmem>>, vector<128x128xf32>
    %c2_83 = arith.constant 2 : index
    %c0_84 = arith.constant 0 : index
    %c0_85 = arith.constant 0 : index
    %70 = vector.load %arg3[%c2_83, %c0_84, %c0_85] : memref<3x128x128xf32, #tpu.memory_space<vmem>>, vector<1x128x128xf32>
    %71 = vector.shape_cast %70 : vector<1x128x128xf32> to vector<128x128xf32>
    %cst_86 = arith.constant dense<0.000000e+00> : vector<128x128xf32>
    %72 = tpu.matmul %69, %71, %cst_86 {dimension_numbers = #tpu.dot_dimension_numbers<[1], [0], [0], [1], [0, 0, 1, 1], [], []>} : vector<128x128xf32>, vector<128x128xf32>, vector<128x128xf32> -> vector<128x128xf32>
    %73 = arith.addf %68, %72 : vector<128x128xf32>
    %c2_87 = arith.constant 2 : index
    %c0_88 = arith.constant 0 : index
    %c0_89 = arith.constant 0 : index
    %74 = vector.load %arg4[%c2_87, %c0_88, %c0_89] : memref<3x1x128xf32, #tpu.memory_space<vmem>>, vector<1x1x128xf32>
    %75 = vector.shape_cast %74 : vector<1x1x128xf32> to vector<1x128xf32>
    %76 = vector.broadcast %75 : vector<1x128xf32> to vector<128x128xf32>
    %77 = arith.addf %73, %76 : vector<128x128xf32>
    %c0_90 = arith.constant 0 : index
    %c0_91 = arith.constant 0 : index
    %78 = vector.load %arg8[%c0_90, %c0_91] : memref<128x128xf32, #tpu.memory_space<vmem>>, vector<128x128xf32>
    tpu.vector_store %arg8[%c0_90, %c0_91], %77 {strides = array<i32>} : memref<128x128xf32, #tpu.memory_space<vmem>>, vector<128x128xf32>,
    %c0_92 = arith.constant 0 : index
    %c0_93 = arith.constant 0 : index
    %79 = vector.load %arg8[%c0_92, %c0_93] : memref<128x128xf32, #tpu.memory_space<vmem>>, vector<128x128xf32>
    %c0_94 = arith.constant 0 : index
    %c0_95 = arith.constant 0 : index
    %80 = vector.load %arg5[%c0_94, %c0_95] : memref<128x128xf32, #tpu.memory_space<vmem>>, vector<128x128xf32>
    tpu.vector_store %arg5[%c0_94, %c0_95], %79 {strides = array<i32>} : memref<128x128xf32, #tpu.memory_space<vmem>>, vector<128x128xf32>,
    return
  }
}

</mosaic_0001>

<llo_original>
// kernel: tpu_custom_call.1
$region0: #{tpu_custom_call.1}
  #allocation0 [shape = 'u32[]', space=smem, size = 0x4, offset = 0x4, fixed_abs, tag = 'smem constant byte address 0x4 - core index']
  #allocation1 [shape = 'u32[144,128]{1,0:T(1,128)}', space=vmem, size = 0x12000, scoped, tag = 'internal scratch']
  #allocation2 [shape = 'f32[128,128]{1,0:T(8,128)}', space=vmem, size = 0x10000, scoped, tag = 'scratch operand']
  #allocation3 [shape = 'f32[384,128]{1,0:T(8,128)}', space=vmem, size = 0x30000, scoped, tag = 'scratch operand']
  #allocation4 [shape = 'f32[128,128]{1,0:T(8,128)}', space=vmem, size = 0x10000, scoped, tag = 'scratch operand']
  %s0 = inlined_call_operand.hbm [shape: f32[128,384], index: 0, kind: input, shape index: {}]
  %s1 = inlined_call_operand.hbm [shape: f32[128,128], index: 1, kind: input, shape index: {}]
  %s2 = inlined_call_operand.hbm [shape: f32[3,128,384], index: 2, kind: input, shape index: {}]
  %s3 = inlined_call_operand.hbm [shape: f32[3,128,128], index: 3, kind: input, shape index: {}]
  %s4 = inlined_call_operand.vmem [shape: f32[3,1,128], index: 4, kind: input, shape index: {}]
  %s5 = inlined_call_operand.hbm [shape: f32[128,128], index: 5, kind: output, shape index: {}]
  %s6 = sld [smem:[#allocation0]]
  $region46: #{tpu_custom_call.1} parent=0
    _
  %s8 = ssub.s32 1, %s6
  %s9 = scalar_select 0, %s8, %s6
  $region1: #{tpu_custom_call.1} parent=0
    #allocation5 [shape = 'u8[196608]{0}', space=vmem, size = 0x30000, scoped, tag = 'input window, operand 0, single buffered']
    #allocation6 [shape = 's32[1]{0}', space=sflag, size = 0x4, scoped, tag = 'scoped memory for tpu_custom_call.1']
    #allocation7 [shape = 's32[1]{0}', space=sflag, size = 0x4, scoped, tag = 'scoped memory for tpu_custom_call.1']
    #allocation8 [shape = 'u8[65536]{0}', space=vmem, size = 0x10000, scoped, tag = 'input window, operand 1, single buffered']
    #allocation9 [shape = 's32[1]{0}', space=sflag, size = 0x4, scoped, tag = 'scoped memory for tpu_custom_call.1']
    #allocation10 [shape = 'u8[589824]{0}', space=vmem, size = 0x90000, scoped, tag = 'input window, operand 2, single buffered']
    #allocation11 [shape = 'u8[196608]{0}', space=vmem, size = 0x30000, scoped, tag = 'input window, operand 3, single buffered']
    #allocation12 [shape = 's32[1]{0}', space=sflag, size = 0x4, scoped, tag = 'scoped memory for tpu_custom_call.1']
    #allocation13 [shape = 'u8[65536]{0}', space=vmem, size = 0x10000, scoped, tag = 'output window, operand 0, single buffered']
    %10 = vsyncpa [#allocation6], 0
    %11 = vsyncpa [#allocation9], 0
    %12 = vsyncpa [#allocation12], 0
    %13 = vsyncpa [#allocation7], 0
    // Predicated region
    $region2: #{tpu_custom_call.1} parent=1 // pred_check
      _
    $region3: #{tpu_custom_call.1} parent=1 // pred_check_branch
      %15 = sbr.rel (0) target = $region5
    $region4: #{tpu_custom_call.1} parent=1 // pred_region
      %s17 = ssub.s32 6144, 6144
      %18 = vsyncadd [#allocation6], %s17
      %s19 = sshll.u32 [#allocation5], 4
      %s20 = int_to_ptr.vmem [resolvable:$true] %s19
      %25 = dma.hbm_to_vmem [thread:$0]  %s0, 6144, %s20, [#allocation6], 384, 384, 24
    $region5: #{tpu_custom_call.1} parent=1 // pred_fallthru
      _
    // Predicated region
    $region6: #{tpu_custom_call.1} parent=1 // pred_check
      _
    $region7: #{tpu_custom_call.1} parent=1 // pred_check_branch
      %27 = sbr.rel (0) target = $region9
    $region8: #{tpu_custom_call.1} parent=1 // pred_region
      %s29 = ssub.s32 2048, 2048
      %30 = vsyncadd [#allocation9], %s29
      %s31 = sshll.u32 [#allocation8], 4
      %s32 = int_to_ptr.vmem [resolvable:$true] %s31
      %37 = dma.hbm_to_vmem [thread:$0]  %s1, 2048, %s32, [#allocation9], 128, 128, 8
    $region9: #{tpu_custom_call.1} parent=1 // pred_fallthru
      _
    // Predicated region
    $region10: #{tpu_custom_call.1} parent=1 // pred_check
      _
    $region11: #{tpu_custom_call.1} parent=1 // pred_check_branch
      %39 = sbr.rel (0) target = $region13
    $region12: #{tpu_custom_call.1} parent=1 // pred_region
      %s41 = ssub.s32 18432, 18432
      %42 = vsyncadd [#allocation9], %s41
      %s43 = sshll.u32 [#allocation10], 4
      %s44 = int_to_ptr.vmem [resolvable:$true] %s43
      %49 = dma.hbm_to_vmem [thread:$0]  %s2, 18432, %s44, [#allocation9], 384, 384, 24
    $region13: #{tpu_custom_call.1} parent=1 // pred_fallthru
      _
    // Predicated region
    $region14: #{tpu_custom_call.1} parent=1 // pred_check
      _
    $region15: #{tpu_custom_call.1} parent=1 // pred_check_branch
      %51 = sbr.rel (0) target = $region17
    $region16: #{tpu_custom_call.1} parent=1 // pred_region
      %s53 = ssub.s32 6144, 6144
      %54 = vsyncadd [#allocation12], %s53
      %s55 = sshll.u32 [#allocation11], 4
      %s56 = int_to_ptr.vmem [resolvable:$true] %s55
      %61 = dma.hbm_to_vmem [thread:$0]  %s3, 6144, %s56, [#allocation12], 128, 128, 8
    $region17: #{tpu_custom_call.1} parent=1 // pred_fallthru
      _
    // Predicated region
    $region18: #{tpu_custom_call.1} parent=1 // pred_check
      _
    $region19: #{tpu_custom_call.1} parent=1 // pred_check_branch
      %63 = sbr.rel (0) target = $region21
    $region20: #{tpu_custom_call.1} parent=1 // pred_region
      _
    $region21: #{tpu_custom_call.1} parent=1 // pred_fallthru
      _
    // Predicated region
    $region22: #{tpu_custom_call.1} parent=1 // pred_check
      _
    $region23: #{tpu_custom_call.1} parent=1 // pred_check_branch
      %65 = sbr.rel (0) target = $region25
    $region24: #{tpu_custom_call.1} parent=1 // pred_region
      %66 = dma.done [#allocation6], 6144
    $region25: #{tpu_custom_call.1} parent=1 // pred_fallthru
      _
    // Predicated region
    $region26: #{tpu_custom_call.1} parent=1 // pred_check
      _
    $region27: #{tpu_custom_call.1} parent=1 // pred_check_branch
      %68 = sbr.rel (0) target = $region29
    $region28: #{tpu_custom_call.1} parent=1 // pred_region
      %69 = dma.done [#allocation9], 2048
    $region29: #{tpu_custom_call.1} parent=1 // pred_fallthru
      _
    // Predicated region
    $region30: #{tpu_custom_call.1} parent=1 // pred_check
      _
    $region31: #{tpu_custom_call.1} parent=1 // pred_check_branch
      %71 = sbr.rel (0) target = $region33
    $region32: #{tpu_custom_call.1} parent=1 // pred_region
      %72 = dma.done [#allocation9], 18432
    $region33: #{tpu_custom_call.1} parent=1 // pred_fallthru
      _
    // Predicated region
    $region34: #{tpu_custom_call.1} parent=1 // pred_check
      _
    $region35: #{tpu_custom_call.1} parent=1 // pred_check_branch
      %74 = sbr.rel (0) target = $region37
    $region36: #{tpu_custom_call.1} parent=1 // pred_region
      %75 = dma.done [#allocation12], 6144
    $region37: #{tpu_custom_call.1} parent=1 // pred_fallthru
      _
    %v76 = vld [vmem:[#allocation8] sm:$0xff]
    %v77 = vld [vmem:[#allocation8 + $0x8] sm:$0xff]
    %v78 = vld [vmem:[#allocation8 + $0x10] sm:$0xff]
    %v79 = vld [vmem:[#allocation8 + $0x18] sm:$0xff]
    %v80 = vld [vmem:[#allocation8 + $0x20] sm:$0xff]
    %v81 = vld [vmem:[#allocation8 + $0x28] sm:$0xff]
    %v82 = vld [vmem:[#allocation8 + $0x30] sm:$0xff]
    %v83 = vld [vmem:[#allocation8 + $0x38] sm:$0xff]
    %v84 = vld [vmem:[#allocation8 + $0x40] sm:$0xff]
    %v85 = vld [vmem:[#allocation8 + $0x48] sm:$0xff]
    %v86 = vld [vmem:[#allocation8 + $0x50] sm:$0xff]
    %v87 = vld [vmem:[#allocation8 + $0x58] sm:$0xff]
    %v88 = vld [vmem:[#allocation8 + $0x60] sm:$0xff]
    %v89 = vld [vmem:[#allocation8 + $0x68] sm:$0xff]
    %v90 = vld [vmem:[#allocation8 + $0x70] sm:$0xff]
    %v91 = vld [vmem:[#allocation8 + $0x78] sm:$0xff]
    %92 = vst [vmem:[#allocation2] sm:$0xff] %v76
    %93 = vst [vmem:[#allocation2 + $0x8] sm:$0xff] %v77
    %94 = vst [vmem:[#allocation2 + $0x10] sm:$0xff] %v78
    %95 = vst [vmem:[#allocation2 + $0x18] sm:$0xff] %v79
    %96 = vst [vmem:[#allocation2 + $0x20] sm:$0xff] %v80
    %97 = vst [vmem:[#allocation2 + $0x28] sm:$0xff] %v81
    %98 = vst [vmem:[#allocation2 + $0x30] sm:$0xff] %v82
    %99 = vst [vmem:[#allocation2 + $0x38] sm:$0xff] %v83
    %100 = vst [vmem:[#allocation2 + $0x40] sm:$0xff] %v84
    %101 = vst [vmem:[#allocation2 + $0x48] sm:$0xff] %v85
    %102 = vst [vmem:[#allocation2 + $0x50] sm:$0xff] %v86
    %103 = vst [vmem:[#allocation2 + $0x58] sm:$0xff] %v87
    %104 = vst [vmem:[#allocation2 + $0x60] sm:$0xff] %v88
    %105 = vst [vmem:[#allocation2 + $0x68] sm:$0xff] %v89
    %106 = vst [vmem:[#allocation2 + $0x70] sm:$0xff] %v90
    %107 = vst [vmem:[#allocation2 + $0x78] sm:$0xff] %v91
    %v108 = vld [vmem:[#allocation2] sm:$0xff]
    %v109 = vld [vmem:[#allocation2 + $0x8] sm:$0xff]
    %v110 = vld [vmem:[#allocation2 + $0x10] sm:$0xff]
    %v111 = vld [vmem:[#allocation2 + $0x18] sm:$0xff]
    %v112 = vld [vmem:[#allocation2 + $0x20] sm:$0xff]
    %v113 = vld [vmem:[#allocation2 + $0x28] sm:$0xff]
    %v114 = vld [vmem:[#allocation2 + $0x30] sm:$0xff]
    %v115 = vld [vmem:[#allocation2 + $0x38] sm:$0xff]
    %v116 = vld [vmem:[#allocation2 + $0x40] sm:$0xff]
    %v117 = vld [vmem:[#allocation2 + $0x48] sm:$0xff]
    %v118 = vld [vmem:[#allocation2 + $0x50] sm:$0xff]
    %v119 = vld [vmem:[#allocation2 + $0x58] sm:$0xff]
    %v120 = vld [vmem:[#allocation2 + $0x60] sm:$0xff]
    %v121 = vld [vmem:[#allocation2 + $0x68] sm:$0xff]
    %v122 = vld [vmem:[#allocation2 + $0x70] sm:$0xff]
    %v123 = vld [vmem:[#allocation2 + $0x78] sm:$0xff]
    %v124 = vld [vmem:[#allocation10] sm:$0xff]
    %v125 = vld [vmem:[#allocation10 + $0x8] sm:$0xff]
    %v126 = vld [vmem:[#allocation10 + $0x10] sm:$0xff]
    %v127 = vld [vmem:[#allocation10 + $0x18] sm:$0xff]
    %v128 = vld [vmem:[#allocation10 + $0x20] sm:$0xff]
    %v129 = vld [vmem:[#allocation10 + $0x28] sm:$0xff]
    %v130 = vld [vmem:[#allocation10 + $0x30] sm:$0xff]
    %v131 = vld [vmem:[#allocation10 + $0x38] sm:$0xff]
    %v132 = vld [vmem:[#allocation10 + $0x40] sm:$0xff]
    %v133 = vld [vmem:[#allocation10 + $0x48] sm:$0xff]
    %v134 = vld [vmem:[#allocation10 + $0x50] sm:$0xff]
    %v135 = vld [vmem:[#allocation10 + $0x58] sm:$0xff]
    %v136 = vld [vmem:[#allocation10 + $0x60] sm:$0xff]
    %v137 = vld [vmem:[#allocation10 + $0x68] sm:$0xff]
    %v138 = vld [vmem:[#allocation10 + $0x70] sm:$0xff]
    %v139 = vld [vmem:[#allocation10 + $0x78] sm:$0xff]
    %v140 = vld [vmem:[#allocation10 + $0x80] sm:$0xff]
    %v141 = vld [vmem:[#allocation10 + $0x88] sm:$0xff]
    %v142 = vld [vmem:[#allocation10 + $0x90] sm:$0xff]
    %v143 = vld [vmem:[#allocation10 + $0x98] sm:$0xff]
    %v144 = vld [vmem:[#allocation10 + $0xa0] sm:$0xff]
    %v145 = vld [vmem:[#allocation10 + $0xa8] sm:$0xff]
    %v146 = vld [vmem:[#allocation10 + $0xb0] sm:$0xff]
    %v147 = vld [vmem:[#allocation10 + $0xb8] sm:$0xff]
    %v148 = vld [vmem:[#allocation10 + $0xc0] sm:$0xff]
    %v149 = vld [vmem:[#allocation10 + $0xc8] sm:$0xff]
    %v150 = vld [vmem:[#allocation10 + $0xd0] sm:$0xff]
    %v151 = vld [vmem:[#allocation10 + $0xd8] sm:$0xff]
    %v152 = vld [vmem:[#allocation10 + $0xe0] sm:$0xff]
    %v153 = vld [vmem:[#allocation10 + $0xe8] sm:$0xff]
    %v154 = vld [vmem:[#allocation10 + $0xf0] sm:$0xff]
    %v155 = vld [vmem:[#allocation10 + $0xf8] sm:$0xff]
    %v156 = vld [vmem:[#allocation10 + $0x100] sm:$0xff]
    %v157 = vld [vmem:[#allocation10 + $0x108] sm:$0xff]
    %v158 = vld [vmem:[#allocation10 + $0x110] sm:$0xff]
    %v159 = vld [vmem:[#allocation10 + $0x118] sm:$0xff]
    %v160 = vld [vmem:[#allocation10 + $0x120] sm:$0xff]
    %v161 = vld [vmem:[#allocation10 + $0x128] sm:$0xff]
    %v162 = vld [vmem:[#allocation10 + $0x130] sm:$0xff]
    %v163 = vld [vmem:[#allocation10 + $0x138] sm:$0xff]
    %v164 = vld [vmem:[#allocation10 + $0x140] sm:$0xff]
    %v165 = vld [vmem:[#allocation10 + $0x148] sm:$0xff]
    %v166 = vld [vmem:[#allocation10 + $0x150] sm:$0xff]
    %v167 = vld [vmem:[#allocation10 + $0x158] sm:$0xff]
    %v168 = vld [vmem:[#allocation10 + $0x160] sm:$0xff]
    %v169 = vld [vmem:[#allocation10 + $0x168] sm:$0xff]
    %v170 = vld [vmem:[#allocation10 + $0x170] sm:$0xff]
    %v171 = vld [vmem:[#allocation10 + $0x178] sm:$0xff]
    %172 = vmatprep.subr.mxu0 %v125
    %173 = vmatpush1.msra.mxu0 %v124
    %174 = vmatprep.subr.mxu0 %v128
    %175 = vmatpush1.msra.mxu0 %v127
    %176 = vmatprep.subr.mxu0 %v131
    %177 = vmatpush1.msra.mxu0 %v130
    %178 = vmatprep.subr.mxu0 %v134
    %179 = vmatpush1.msra.mxu0 %v133
    %180 = vmatprep.subr.mxu0 %v137
    %181 = vmatpush1.msra.mxu0 %v136
    %182 = vmatprep.subr.mxu0 %v140
    %183 = vmatpush1.msra.mxu0 %v139
    %184 = vmatprep.subr.mxu0 %v143
    %185 = vmatpush1.msra.mxu0 %v142
    %186 = vmatprep.subr.mxu0 %v146
    %187 = vmatpush1.msra.mxu0 %v145
    %188 = vmatprep.subr.mxu0 %v149
    %189 = vmatpush1.msra.mxu0 %v148
    %190 = vmatprep.subr.mxu0 %v152
    %191 = vmatpush1.msra.mxu0 %v151
    %192 = vmatprep.subr.mxu0 %v155
    %193 = vmatpush1.msra.mxu0 %v154
    %194 = vmatprep.subr.mxu0 %v158
    %195 = vmatpush1.msra.mxu0 %v157
    %196 = vmatprep.subr.mxu0 %v161
    %197 = vmatpush1.msra.mxu0 %v160
    %198 = vmatprep.subr.mxu0 %v164
    %199 = vmatpush1.msra.mxu0 %v163
    %200 = vmatprep.subr.mxu0 %v167
    %201 = vmatpush1.msra.mxu0 %v166
    %202 = vmatprep.subr.mxu0 %v170
    %203 = vmatpush1.msra.mxu0 %v169
    %204 = vmatprep.subr.mxu0 0.0
    %205 = vmatpush1.msra.mxu0 0.0
    %206 = vmatprep.subr.mxu0 0.0
    %207 = vmatpush1.msra.mxu0 0.0
    %208 = vmatprep.subr.mxu0 0.0
    %209 = vmatpush1.msra.mxu0 0.0
    %210 = vmatprep.subr.mxu0 0.0
    %211 = vmatpush1.msra.mxu0 0.0
    %212 = vmatprep.subr.mxu0 0.0
    %213 = vmatpush1.msra.mxu0 0.0
    %214 = vmatprep.subr.mxu0 0.0
    %215 = vmatpush1.msra.mxu0 0.0
    %216 = vmatprep.subr.mxu0 0.0
    %217 = vmatpush1.msra.mxu0 0.0
    %218 = vmatprep.subr.mxu0 0.0
    %219 = vmatpush1.msra.mxu0 0.0
    %220 = vmatprep.subr.mxu0 0.0
    %221 = vmatpush1.msra.mxu0 0.0
    %222 = vmatprep.subr.mxu0 0.0
    %223 = vmatpush1.msra.mxu0 0.0
    %224 = vmatprep.subr.mxu0 0.0
    %225 = vmatpush1.msra.mxu0 0.0
    %226 = vmatprep.subr.mxu0 0.0
    %227 = vmatpush1.msra.mxu0 0.0
    %228 = vmatprep.subr.mxu0 0.0
    %229 = vmatpush1.msra.mxu0 0.0
    %230 = vmatprep.subr.mxu0 0.0
    %231 = vmatpush1.msra.mxu0 0.0
    %232 = vmatprep.subr.mxu0 0.0
    %233 = vmatpush1.msra.mxu0 0.0
    %234 = vmatprep.subr.mxu0 0.0
    %235 = vmatpush1.msra.mxu0 0.0
    %236 = vmatprep.mubr.f32.mxu0 0.0
    %237 = vmatmul.mubr.f32.gmra.mrb[0].mxu0 %v108
    %v238 = vpop.f32.mrb[0].mxu0
    %v239 = vadd.f32 0.0, %v238
    %v240 = vpop.f32.mrb[0].mxu0
    %v241 = vadd.f32 0.0, %v240
    %242 = vmatprep.mubr.f32.mxu0 0.0
    %243 = vmatmul.mubr.f32.gmra.mrb[0].mxu0 %v109
    %v244 = vpop.f32.mrb[0].mxu0
    %v245 = vadd.f32 0.0, %v244
    %v246 = vpop.f32.mrb[0].mxu0
    %v247 = vadd.f32 0.0, %v246
    %248 = vmatprep.mubr.f32.mxu0 0.0
    %249 = vmatmul.mubr.f32.gmra.mrb[0].mxu0 %v110
    %v250 = vpop.f32.mrb[0].mxu0
    %v251 = vadd.f32 0.0, %v250
    %v252 = vpop.f32.mrb[0].mxu0
    %v253 = vadd.f32 0.0, %v252
    %254 = vmatprep.mubr.f32.mxu0 0.0
    %255 = vmatmul.mubr.f32.gmra.mrb[0].mxu0 %v111
    %v256 = vpop.f32.mrb[0].mxu0
    %v257 = vadd.f32 0.0, %v256
    %v258 = vpop.f32.mrb[0].mxu0
    %v259 = vadd.f32 0.0, %v258
    %260 = vmatprep.mubr.f32.mxu0 0.0
    %261 = vmatmul.mubr.f32.gmra.mrb[0].mxu0 %v112
    %v262 = vpop.f32.mrb[0].mxu0
    %v263 = vadd.f32 0.0, %v262
    %v264 = vpop.f32.mrb[0].mxu0
    %v265 = vadd.f32 0.0, %v264
    %266 = vmatprep.mubr.f32.mxu0 0.0
    %267 = vmatmul.mubr.f32.gmra.mrb[0].mxu0 %v113
    %v268 = vpop.f32.mrb[0].mxu0
    %v269 = vadd.f32 0.0, %v268
    %v270 = vpop.f32.mrb[0].mxu0
    %v271 = vadd.f32 0.0, %v270
    %272 = vmatprep.mubr.f32.mxu0 0.0
    %273 = vmatmul.mubr.f32.gmra.mrb[0].mxu0 %v114
    %v274 = vpop.f32.mrb[0].mxu0
    %v275 = vadd.f32 0.0, %v274
    %v276 = vpop.f32.mrb[0].mxu0
    %v277 = vadd.f32 0.0, %v276
    %278 = vmatprep.mubr.f32.mxu0 0.0
    %279 = vmatmul.mubr.f32.gmra.mrb[0].mxu0 %v115
    %v280 = vpop.f32.mrb[0].mxu0
    %v281 = vadd.f32 0.0, %v280
    %v282 = vpop.f32.mrb[0].mxu0
    %v283 = vadd.f32 0.0, %v282
    %284 = vmatprep.mubr.f32.mxu0 0.0
    %285 = vmatmul.mubr.f32.gmra.mrb[0].mxu0 %v116
    %v286 = vpop.f32.mrb[0].mxu0
    %v287 = vadd.f32 0.0, %v286
    %v288 = vpop.f32.mrb[0].mxu0
    %v289 = vadd.f32 0.0, %v288
    %290 = vmatprep.mubr.f32.mxu0 0.0
    %291 = vmatmul.mubr.f32.gmra.mrb[0].mxu0 %v117
    %v292 = vpop.f32.mrb[0].mxu0
    %v293 = vadd.f32 0.0, %v292
    %v294 = vpop.f32.mrb[0].mxu0
    %v295 = vadd.f32 0.0, %v294
    %296 = vmatprep.mubr.f32.mxu0 0.0
    %297 = vmatmul.mubr.f32.gmra.mrb[0].mxu0 %v118
    %v298 = vpop.f32.mrb[0].mxu0
    %v299 = vadd.f32 0.0, %v298
    %v300 = vpop.f32.mrb[0].mxu0
    %v301 = vadd.f32 0.0, %v300
    %302 = vmatprep.mubr.f32.mxu0 0.0
    %303 = vmatmul.mubr.f32.gmra.mrb[0].mxu0 %v119
    %v304 = vpop.f32.mrb[0].mxu0
    %v305 = vadd.f32 0.0, %v304
    %v306 = vpop.f32.mrb[0].mxu0
    %v307 = vadd.f32 0.0, %v306
    %308 = vmatprep.mubr.f32.mxu0 0.0
    %309 = vmatmul.mubr.f32.gmra.mrb[0].mxu0 %v120
    %v310 = vpop.f32.mrb[0].mxu0
    %v311 = vadd.f32 0.0, %v310
    %v312 = vpop.f32.mrb[0].mxu0
    %v313 = vadd.f32 0.0, %v312
    %314 = vmatprep.mubr.f32.mxu0 0.0
    %315 = vmatmul.mubr.f32.gmra.mrb[0].mxu0 %v121
    %v316 = vpop.f32.mrb[0].mxu0
    %v317 = vadd.f32 0.0, %v316
    %v318 = vpop.f32.mrb[0].mxu0
    %v319 = vadd.f32 0.0, %v318
    %320 = vmatprep.mubr.f32.mxu0 0.0
    %321 = vmatmul.mubr.f32.gmra.mrb[0].mxu0 %v122
    %v322 = vpop.f32.mrb[0].mxu0
    %v323 = vadd.f32 0.0, %v322
    %v324 = vpop.f32.mrb[0].mxu0
    %v325 = vadd.f32 0.0, %v324
    %326 = vmatprep.mubr.f32.mxu0 0.0
    %327 = vmatmul.mubr.f32.gmra.mrb[0].mxu0 %v123
    %v328 = vpop.f32.mrb[0].mxu0
    %v329 = vadd.f32 0.0, %v328
    %v330 = vpop.f32.mrb[0].mxu0
    %v331 = vadd.f32 0.0, %v330
    %332 = vdwg.mxu0
    %333 = vmatprep.subr.mxu0 0.0
    %334 = vmatpush1.msra.mxu0 %v126
    %335 = vmatprep.subr.mxu0 0.0
    %336 = vmatpush1.msra.mxu0 %v129
    %337 = vmatprep.subr.mxu0 0.0
    %338 = vmatpush1.msra.mxu0 %v132
    %339 = vmatprep.subr.mxu0 0.0
    %340 = vmatpush1.msra.mxu0 %v135
    %341 = vmatprep.subr.mxu0 0.0
    %342 = vmatpush1.msra.mxu0 %v138
    %343 = vmatprep.subr.mxu0 0.0
    %344 = vmatpush1.msra.mxu0 %v141
    %345 = vmatprep.subr.mxu0 0.0
    %346 = vmatpush1.msra.mxu0 %v144
    %347 = vmatprep.subr.mxu0 0.0
    %348 = vmatpush1.msra.mxu0 %v147
    %349 = vmatprep.subr.mxu0 0.0
    %350 = vmatpush1.msra.mxu0 %v150
    %351 = vmatprep.subr.mxu0 0.0
    %352 = vmatpush1.msra.mxu0 %v153
    %353 = vmatprep.subr.mxu0 0.0
    %354 = vmatpush1.msra.mxu0 %v156
    %355 = vmatprep.subr.mxu0 0.0
    %356 = vmatpush1.msra.mxu0 %v159
    %357 = vmatprep.subr.mxu0 0.0
    %358 = vmatpush1.msra.mxu0 %v162
    %359 = vmatprep.subr.mxu0 0.0
    %360 = vmatpush1.msra.mxu0 %v165
    %361 = vmatprep.subr.mxu0 0.0
    %362 = vmatpush1.msra.mxu0 %v168
    %363 = vmatprep.subr.mxu0 0.0
    %364 = vmatpush1.msra.mxu0 %v171
    %365 = vmatprep.subr.mxu0 0.0
    %366 = vmatpush1.msra.mxu0 0.0
    %367 = vmatprep.subr.mxu0 0.0
    %368 = vmatpush1.msra.mxu0 0.0
    %369 = vmatprep.subr.mxu0 0.0
    %370 = vmatpush1.msra.mxu0 0.0
    %371 = vmatprep.subr.mxu0 0.0
    %372 = vmatpush1.msra.mxu0 0.0
    %373 = vmatprep.subr.mxu0 0.0
    %374 = vmatpush1.msra.mxu0 0.0
    %375 = vmatprep.subr.mxu0 0.0
    %376 = vmatpush1.msra.mxu0 0.0
    %377 = vmatprep.subr.mxu0 0.0
    %378 = vmatpush1.msra.mxu0 0.0
    %379 = vmatprep.subr.mxu0 0.0
    %380 = vmatpush1.msra.mxu0 0.0
    %381 = vmatprep.subr.mxu0 0.0
    %382 = vmatpush1.msra.mxu0 0.0
    %383 = vmatprep.subr.mxu0 0.0
    %384 = vmatpush1.msra.mxu0 0.0
    %385 = vmatprep.subr.mxu0 0.0
    %386 = vmatpush1.msra.mxu0 0.0
    %387 = vmatprep.subr.mxu0 0.0
    %388 = vmatpush1.msra.mxu0 0.0
    %389 = vmatprep.subr.mxu0 0.0
    %390 = vmatpush1.msra.mxu0 0.0
    %391 = vmatprep.subr.mxu0 0.0
    %392 = vmatpush1.msra.mxu0 0.0
    %393 = vmatprep.subr.mxu0 0.0
    %394 = vmatpush1.msra.mxu0 0.0
    %395 = vmatprep.subr.mxu0 0.0
    %396 = vmatpush1.msra.mxu0 0.0
    %397 = vmatprep.mubr.f32.mxu0 0.0
    %398 = vmatmul.mubr.f32.gmra.mrb[0].mxu0 %v108
    %v399 = vpop.f32.mrb[0].mxu0
    %v400 = vadd.f32 0.0, %v399
    %v401 = vpop.f32.mrb[0].mxu0
    %402 = vmatprep.mubr.f32.mxu0 0.0
    %403 = vmatmul.mubr.f32.gmra.mrb[0].mxu0 %v109
    %v404 = vpop.f32.mrb[0].mxu0
    %v405 = vadd.f32 0.0, %v404
    %v406 = vpop.f32.mrb[0].mxu0
    %407 = vmatprep.mubr.f32.mxu0 0.0
    %408 = vmatmul.mubr.f32.gmra.mrb[0].mxu0 %v110
    %v409 = vpop.f32.mrb[0].mxu0
    %v410 = vadd.f32 0.0, %v409
    %v411 = vpop.f32.mrb[0].mxu0
    %412 = vmatprep.mubr.f32.mxu0 0.0
    %413 = vmatmul.mubr.f32.gmra.mrb[0].mxu0 %v111
    %v414 = vpop.f32.mrb[0].mxu0
    %v415 = vadd.f32 0.0, %v414
    %v416 = vpop.f32.mrb[0].mxu0
    %417 = vmatprep.mubr.f32.mxu0 0.0
    %418 = vmatmul.mubr.f32.gmra.mrb[0].mxu0 %v112
    %v419 = vpop.f32.mrb[0].mxu0
    %v420 = vadd.f32 0.0, %v419
    %v421 = vpop.f32.mrb[0].mxu0
    %422 = vmatprep.mubr.f32.mxu0 0.0
    %423 = vmatmul.mubr.f32.gmra.mrb[0].mxu0 %v113
    %v424 = vpop.f32.mrb[0].mxu0
    %v425 = vadd.f32 0.0, %v424
    %v426 = vpop.f32.mrb[0].mxu0
    %427 = vmatprep.mubr.f32.mxu0 0.0
    %428 = vmatmul.mubr.f32.gmra.mrb[0].mxu0 %v114
    %v429 = vpop.f32.mrb[0].mxu0
    %v430 = vadd.f32 0.0, %v429
    %v431 = vpop.f32.mrb[0].mxu0
    %432 = vmatprep.mubr.f32.mxu0 0.0
    %433 = vmatmul.mubr.f32.gmra.mrb[0].mxu0 %v115
    %v434 = vpop.f32.mrb[0].mxu0
    %v435 = vadd.f32 0.0, %v434
    %v436 = vpop.f32.mrb[0].mxu0
    %437 = vmatprep.mubr.f32.mxu0 0.0
    %438 = vmatmul.mubr.f32.gmra.mrb[0].mxu0 %v116
    %v439 = vpop.f32.mrb[0].mxu0
    %v440 = vadd.f32 0.0, %v439
    %v441 = vpop.f32.mrb[0].mxu0
    %442 = vmatprep.mubr.f32.mxu0 0.0
    %443 = vmatmul.mubr.f32.gmra.mrb[0].mxu0 %v117
    %v444 = vpop.f32.mrb[0].mxu0
    %v445 = vadd.f32 0.0, %v444
    %v446 = vpop.f32.mrb[0].mxu0
    %447 = vmatprep.mubr.f32.mxu0 0.0
    %448 = vmatmul.mubr.f32.gmra.mrb[0].mxu0 %v118
    %v449 = vpop.f32.mrb[0].mxu0
    %v450 = vadd.f32 0.0, %v449
    %v451 = vpop.f32.mrb[0].mxu0
    %452 = vmatprep.mubr.f32.mxu0 0.0
    %453 = vmatmul.mubr.f32.gmra.mrb[0].mxu0 %v119
    %v454 = vpop.f32.mrb[0].mxu0
    %v455 = vadd.f32 0.0, %v454
    %v456 = vpop.f32.mrb[0].mxu0
    %457 = vmatprep.mubr.f32.mxu0 0.0
    %458 = vmatmul.mubr.f32.gmra.mrb[0].mxu0 %v120
    %v459 = vpop.f32.mrb[0].mxu0
    %v460 = vadd.f32 0.0, %v459
    %v461 = vpop.f32.mrb[0].mxu0
    %462 = vmatprep.mubr.f32.mxu0 0.0
    %463 = vmatmul.mubr.f32.gmra.mrb[0].mxu0 %v121
    %v464 = vpop.f32.mrb[0].mxu0
    %v465 = vadd.f32 0.0, %v464
    %v466 = vpop.f32.mrb[0].mxu0
    %467 = vmatprep.mubr.f32.mxu0 0.0
    %468 = vmatmul.mubr.f32.gmra.mrb[0].mxu0 %v122
    %v469 = vpop.f32.mrb[0].mxu0
    %v470 = vadd.f32 0.0, %v469
    %v471 = vpop.f32.mrb[0].mxu0
    %472 = vmatprep.mubr.f32.mxu0 0.0
    %473 = vmatmul.mubr.f32.gmra.mrb[0].mxu0 %v123
    %v474 = vpop.f32.mrb[0].mxu0
    %v475 = vadd.f32 0.0, %v474
    %v476 = vpop.f32.mrb[0].mxu0
    %477 = vdwg.mxu0
    %478 = vst [vmem:[#allocation3] sm:$0xff] %v239
    %479 = vst [vmem:[#allocation3 + $0x8] sm:$0xff] %v245
    %480 = vst [vmem:[#allocation3 + $0x10] sm:$0xff] %v251
    %481 = vst [vmem:[#allocation3 + $0x18] sm:$0xff] %v257
    %482 = vst [vmem:[#allocation3 + $0x20] sm:$0xff] %v263
    %483 = vst [vmem:[#allocation3 + $0x28] sm:$0xff] %v269
    %484 = vst [vmem:[#allocation3 + $0x30] sm:$0xff] %v275
    %485 = vst [vmem:[#allocation3 + $0x38] sm:$0xff] %v281
    %486 = vst [vmem:[#allocation3 + $0x40] sm:$0xff] %v287
    %487 = vst [vmem:[#allocation3 + $0x48] sm:$0xff] %v293
    %488 = vst [vmem:[#allocation3 + $0x50] sm:$0xff] %v299
    %489 = vst [vmem:[#allocation3 + $0x58] sm:$0xff] %v305
    %490 = vst [vmem:[#allocation3 + $0x60] sm:$0xff] %v311
    %491 = vst [vmem:[#allocation3 + $0x68] sm:$0xff] %v317
    %492 = vst [vmem:[#allocation3 + $0x70] sm:$0xff] %v323
    %493 = vst [vmem:[#allocation3 + $0x78] sm:$0xff] %v329
    %494 = vst [vmem:[#allocation3 + $0x80] sm:$0xff] %v241
    %495 = vst [vmem:[#allocation3 + $0x88] sm:$0xff] %v247
    %496 = vst [vmem:[#allocation3 + $0x90] sm:$0xff] %v253
    %497 = vst [vmem:[#allocation3 + $0x98] sm:$0xff] %v259
    %498 = vst [vmem:[#allocation3 + $0xa0] sm:$0xff] %v265
    %499 = vst [vmem:[#allocation3 + $0xa8] sm:$0xff] %v271
    %500 = vst [vmem:[#allocation3 + $0xb0] sm:$0xff] %v277
    %501 = vst [vmem:[#allocation3 + $0xb8] sm:$0xff] %v283
    %502 = vst [vmem:[#allocation3 + $0xc0] sm:$0xff] %v289
    %503 = vst [vmem:[#allocation3 + $0xc8] sm:$0xff] %v295
    %504 = vst [vmem:[#allocation3 + $0xd0] sm:$0xff] %v301
    %505 = vst [vmem:[#allocation3 + $0xd8] sm:$0xff] %v307
    %506 = vst [vmem:[#allocation3 + $0xe0] sm:$0xff] %v313
    %507 = vst [vmem:[#allocation3 + $0xe8] sm:$0xff] %v319
    %508 = vst [vmem:[#allocation3 + $0xf0] sm:$0xff] %v325
    %509 = vst [vmem:[#allocation3 + $0xf8] sm:$0xff] %v331
    %510 = vst [vmem:[#allocation3 + $0x100] sm:$0xff] %v400
    %511 = vst [vmem:[#allocation3 + $0x108] sm:$0xff] %v405
    %512 = vst [vmem:[#allocation3 + $0x110] sm:$0xff] %v410
    %513 = vst [vmem:[#allocation3 + $0x118] sm:$0xff] %v415
    %514 = vst [vmem:[#allocation3 + $0x120] sm:$0xff] %v420
    %515 = vst [vmem:[#allocation3 + $0x128] sm:$0xff] %v425
    %516 = vst [vmem:[#allocation3 + $0x130] sm:$0xff] %v430
    %517 = vst [vmem:[#allocation3 + $0x138] sm:$0xff] %v435
    %518 = vst [vmem:[#allocation3 + $0x140] sm:$0xff] %v440
    %519 = vst [vmem:[#allocation3 + $0x148] sm:$0xff] %v445
    %520 = vst [vmem:[#allocation3 + $0x150] sm:$0xff] %v450
    %521 = vst [vmem:[#allocation3 + $0x158] sm:$0xff] %v455
    %522 = vst [vmem:[#allocation3 + $0x160] sm:$0xff] %v460
    %523 = vst [vmem:[#allocation3 + $0x168] sm:$0xff] %v465
    %524 = vst [vmem:[#allocation3 + $0x170] sm:$0xff] %v470
    %525 = vst [vmem:[#allocation3 + $0x178] sm:$0xff] %v475
    %v526 = vld [vmem:[#allocation5] sm:$0xff]
    %v527 = vld [vmem:[#allocation5 + $0x8] sm:$0xff]
    %v528 = vld [vmem:[#allocation5 + $0x10] sm:$0xff]
    %v529 = vld [vmem:[#allocation5 + $0x18] sm:$0xff]
    %v530 = vld [vmem:[#allocation5 + $0x20] sm:$0xff]
    %v531 = vld [vmem:[#allocation5 + $0x28] sm:$0xff]
    %v532 = vld [vmem:[#allocation5 + $0x30] sm:$0xff]
    %v533 = vld [vmem:[#allocation5 + $0x38] sm:$0xff]
    %v534 = vld [vmem:[#allocation5 + $0x40] sm:$0xff]
    %v535 = vld [vmem:[#allocation5 + $0x48] sm:$0xff]
    %v536 = vld [vmem:[#allocation5 + $0x50] sm:$0xff]
    %v537 = vld [vmem:[#allocation5 + $0x58] sm:$0xff]
    %v538 = vld [vmem:[#allocation5 + $0x60] sm:$0xff]
    %v539 = vld [vmem:[#allocation5 + $0x68] sm:$0xff]
    %v540 = vld [vmem:[#allocation5 + $0x70] sm:$0xff]
    %v541 = vld [vmem:[#allocation5 + $0x78] sm:$0xff]
    %v542 = vld [vmem:[#allocation5 + $0x80] sm:$0xff]
    %v543 = vld [vmem:[#allocation5 + $0x88] sm:$0xff]
    %v544 = vld [vmem:[#allocation5 + $0x90] sm:$0xff]
    %v545 = vld [vmem:[#allocation5 + $0x98] sm:$0xff]
    %v546 = vld [vmem:[#allocation5 + $0xa0] sm:$0xff]
    %v547 = vld [vmem:[#allocation5 + $0xa8] sm:$0xff]
    %v548 = vld [vmem:[#allocation5 + $0xb0] sm:$0xff]
    %v549 = vld [vmem:[#allocation5 + $0xb8] sm:$0xff]
    %v550 = vld [vmem:[#allocation5 + $0xc0] sm:$0xff]
    %v551 = vld [vmem:[#allocation5 + $0xc8] sm:$0xff]
    %v552 = vld [vmem:[#allocation5 + $0xd0] sm:$0xff]
    %v553 = vld [vmem:[#allocation5 + $0xd8] sm:$0xff]
    %v554 = vld [vmem:[#allocation5 + $0xe0] sm:$0xff]
    %v555 = vld [vmem:[#allocation5 + $0xe8] sm:$0xff]
    %v556 = vld [vmem:[#allocation5 + $0xf0] sm:$0xff]
    %v557 = vld [vmem:[#allocation5 + $0xf8] sm:$0xff]
    %v558 = vld [vmem:[#allocation5 + $0x100] sm:$0xff]
    %v559 = vld [vmem:[#allocation5 + $0x108] sm:$0xff]
    %v560 = vld [vmem:[#allocation5 + $0x110] sm:$0xff]
    %v561 = vld [vmem:[#allocation5 + $0x118] sm:$0xff]
    %v562 = vld [vmem:[#allocation5 + $0x120] sm:$0xff]
    %v563 = vld [vmem:[#allocation5 + $0x128] sm:$0xff]
    %v564 = vld [vmem:[#allocation5 + $0x130] sm:$0xff]
    %v565 = vld [vmem:[#allocation5 + $0x138] sm:$0xff]
    %v566 = vld [vmem:[#allocation5 + $0x140] sm:$0xff]
    %v567 = vld [vmem:[#allocation5 + $0x148] sm:$0xff]
    %v568 = vld [vmem:[#allocation5 + $0x150] sm:$0xff]
    %v569 = vld [vmem:[#allocation5 + $0x158] sm:$0xff]
    %v570 = vld [vmem:[#allocation5 + $0x160] sm:$0xff]
    %v571 = vld [vmem:[#allocation5 + $0x168] sm:$0xff]
    %v572 = vld [vmem:[#allocation5 + $0x170] sm:$0xff]
    %v573 = vld [vmem:[#allocation5 + $0x178] sm:$0xff]
    %v574 = vld [vmem:[#allocation3] sm:$0xff]
    %v575 = vld [vmem:[#allocation3 + $0x8] sm:$0xff]
    %v576 = vld [vmem:[#allocation3 + $0x10] sm:$0xff]
    %v577 = vld [vmem:[#allocation3 + $0x18] sm:$0xff]
    %v578 = vld [vmem:[#allocation3 + $0x20] sm:$0xff]
    %v579 = vld [vmem:[#allocation3 + $0x28] sm:$0xff]
    %v580 = vld [vmem:[#allocation3 + $0x30] sm:$0xff]
    %v581 = vld [vmem:[#allocation3 + $0x38] sm:$0xff]
    %v582 = vld [vmem:[#allocation3 + $0x40] sm:$0xff]
    %v583 = vld [vmem:[#allocation3 + $0x48] sm:$0xff]
    %v584 = vld [vmem:[#allocation3 + $0x50] sm:$0xff]
    %v585 = vld [vmem:[#allocation3 + $0x58] sm:$0xff]
    %v586 = vld [vmem:[#allocation3 + $0x60] sm:$0xff]
    %v587 = vld [vmem:[#allocation3 + $0x68] sm:$0xff]
    %v588 = vld [vmem:[#allocation3 + $0x70] sm:$0xff]
    %v589 = vld [vmem:[#allocation3 + $0x78] sm:$0xff]
    %v590 = vld [vmem:[#allocation3 + $0x80] sm:$0xff]
    %v591 = vld [vmem:[#allocation3 + $0x88] sm:$0xff]
    %v592 = vld [vmem:[#allocation3 + $0x90] sm:$0xff]
    %v593 = vld [vmem:[#allocation3 + $0x98] sm:$0xff]
    %v594 = vld [vmem:[#allocation3 + $0xa0] sm:$0xff]
    %v595 = vld [vmem:[#allocation3 + $0xa8] sm:$0xff]
    %v596 = vld [vmem:[#allocation3 + $0xb0] sm:$0xff]
    %v597 = vld [vmem:[#allocation3 + $0xb8] sm:$0xff]
    %v598 = vld [vmem:[#allocation3 + $0xc0] sm:$0xff]
    %v599 = vld [vmem:[#allocation3 + $0xc8] sm:$0xff]
    %v600 = vld [vmem:[#allocation3 + $0xd0] sm:$0xff]
    %v601 = vld [vmem:[#allocation3 + $0xd8] sm:$0xff]
    %v602 = vld [vmem:[#allocation3 + $0xe0] sm:$0xff]
    %v603 = vld [vmem:[#allocation3 + $0xe8] sm:$0xff]
    %v604 = vld [vmem:[#allocation3 + $0xf0] sm:$0xff]
    %v605 = vld [vmem:[#allocation3 + $0xf8] sm:$0xff]
    %v606 = vld [vmem:[#allocation3 + $0x100] sm:$0xff]
    %v607 = vld [vmem:[#allocation3 + $0x108] sm:$0xff]
    %v608 = vld [vmem:[#allocation3 + $0x110] sm:$0xff]
    %v609 = vld [vmem:[#allocation3 + $0x118] sm:$0xff]
    %v610 = vld [vmem:[#allocation3 + $0x120] sm:$0xff]
    %v611 = vld [vmem:[#allocation3 + $0x128] sm:$0xff]
    %v612 = vld [vmem:[#allocation3 + $0x130] sm:$0xff]
    %v613 = vld [vmem:[#allocation3 + $0x138] sm:$0xff]
    %v614 = vld [vmem:[#allocation3 + $0x140] sm:$0xff]
    %v615 = vld [vmem:[#allocation3 + $0x148] sm:$0xff]
    %v616 = vld [vmem:[#allocation3 + $0x150] sm:$0xff]
    %v617 = vld [vmem:[#allocation3 + $0x158] sm:$0xff]
    %v618 = vld [vmem:[#allocation3 + $0x160] sm:$0xff]
    %v619 = vld [vmem:[#allocation3 + $0x168] sm:$0xff]
    %v620 = vld [vmem:[#allocation3 + $0x170] sm:$0xff]
    %v621 = vld [vmem:[#allocation3 + $0x178] sm:$0xff]
    %v622 = vld [vmem:[#allocation2] sm:$0xff]
    %v623 = vld [vmem:[#allocation2 + $0x8] sm:$0xff]
    %v624 = vld [vmem:[#allocation2 + $0x10] sm:$0xff]
    %v625 = vld [vmem:[#allocation2 + $0x18] sm:$0xff]
    %v626 = vld [vmem:[#allocation2 + $0x20] sm:$0xff]
    %v627 = vld [vmem:[#allocation2 + $0x28] sm:$0xff]
    %v628 = vld [vmem:[#allocation2 + $0x30] sm:$0xff]
    %v629 = vld [vmem:[#allocation2 + $0x38] sm:$0xff]
    %v630 = vld [vmem:[#allocation2 + $0x40] sm:$0xff]
    %v631 = vld [vmem:[#allocation2 + $0x48] sm:$0xff]
    %v632 = vld [vmem:[#allocation2 + $0x50] sm:$0xff]
    %v633 = vld [vmem:[#allocation2 + $0x58] sm:$0xff]
    %v634 = vld [vmem:[#allocation2 + $0x60] sm:$0xff]
    %v635 = vld [vmem:[#allocation2 + $0x68] sm:$0xff]
    %v636 = vld [vmem:[#allocation2 + $0x70] sm:$0xff]
    %v637 = vld [vmem:[#allocation2 + $0x78] sm:$0xff]
    %v638 = vld [vmem:[#allocation11] sm:$0xff]
    %v639 = vld [vmem:[#allocation11 + $0x8] sm:$0xff]
    %v640 = vld [vmem:[#allocation11 + $0x10] sm:$0xff]
    %v641 = vld [vmem:[#allocation11 + $0x18] sm:$0xff]
    %v642 = vld [vmem:[#allocation11 + $0x20] sm:$0xff]
    %v643 = vld [vmem:[#allocation11 + $0x28] sm:$0xff]
    %v644 = vld [vmem:[#allocation11 + $0x30] sm:$0xff]
    %v645 = vld [vmem:[#allocation11 + $0x38] sm:$0xff]
    %v646 = vld [vmem:[#allocation11 + $0x40] sm:$0xff]
    %v647 = vld [vmem:[#allocation11 + $0x48] sm:$0xff]
    %v648 = vld [vmem:[#allocation11 + $0x50] sm:$0xff]
    %v649 = vld [vmem:[#allocation11 + $0x58] sm:$0xff]
    %v650 = vld [vmem:[#allocation11 + $0x60] sm:$0xff]
    %v651 = vld [vmem:[#allocation11 + $0x68] sm:$0xff]
    %v652 = vld [vmem:[#allocation11 + $0x70] sm:$0xff]
    %v653 = vld [vmem:[#allocation11 + $0x78] sm:$0xff]
    %654 = vmatprep.subr.mxu0 0.0
    %655 = vmatpush1.msra.mxu0 %v638
    %656 = vmatprep.subr.mxu0 0.0
    %657 = vmatpush1.msra.mxu0 %v639
    %658 = vmatprep.subr.mxu0 0.0
    %659 = vmatpush1.msra.mxu0 %v640
    %660 = vmatprep.subr.mxu0 0.0
    %661 = vmatpush1.msra.mxu0 %v641
    %662 = vmatprep.subr.mxu0 0.0
    %663 = vmatpush1.msra.mxu0 %v642
    %664 = vmatprep.subr.mxu0 0.0
    %665 = vmatpush1.msra.mxu0 %v643
    %666 = vmatprep.subr.mxu0 0.0
    %667 = vmatpush1.msra.mxu0 %v644
    %668 = vmatprep.subr.mxu0 0.0
    %669 = vmatpush1.msra.mxu0 %v645
    %670 = vmatprep.subr.mxu0 0.0
    %671 = vmatpush1.msra.mxu0 %v646
    %672 = vmatprep.subr.mxu0 0.0
    %673 = vmatpush1.msra.mxu0 %v647
    %674 = vmatprep.subr.mxu0 0.0
    %675 = vmatpush1.msra.mxu0 %v648
    %676 = vmatprep.subr.mxu0 0.0
    %677 = vmatpush1.msra.mxu0 %v649
    %678 = vmatprep.subr.mxu0 0.0
    %679 = vmatpush1.msra.mxu0 %v650
    %680 = vmatprep.subr.mxu0 0.0
    %681 = vmatpush1.msra.mxu0 %v651
    %682 = vmatprep.subr.mxu0 0.0
    %683 = vmatpush1.msra.mxu0 %v652
    %684 = vmatprep.subr.mxu0 0.0
    %685 = vmatpush1.msra.mxu0 %v653
    %686 = vmatprep.subr.mxu0 0.0
    %687 = vmatpush1.msra.mxu0 0.0
    %688 = vmatprep.subr.mxu0 0.0
    %689 = vmatpush1.msra.mxu0 0.0
    %690 = vmatprep.subr.mxu0 0.0
    %691 = vmatpush1.msra.mxu0 0.0
    %692 = vmatprep.subr.mxu0 0.0
    %693 = vmatpush1.msra.mxu0 0.0
    %694 = vmatprep.subr.mxu0 0.0
    %695 = vmatpush1.msra.mxu0 0.0
    %696 = vmatprep.subr.mxu0 0.0
    %697 = vmatpush1.msra.mxu0 0.0
    %698 = vmatprep.subr.mxu0 0.0
    %699 = vmatpush1.msra.mxu0 0.0
    %700 = vmatprep.subr.mxu0 0.0
    %701 = vmatpush1.msra.mxu0 0.0
    %702 = vmatprep.subr.mxu0 0.0
    %703 = vmatpush1.msra.mxu0 0.0
    %704 = vmatprep.subr.mxu0 0.0
    %705 = vmatpush1.msra.mxu0 0.0
    %706 = vmatprep.subr.mxu0 0.0
    %707 = vmatpush1.msra.mxu0 0.0
    %708 = vmatprep.subr.mxu0 0.0
    %709 = vmatpush1.msra.mxu0 0.0
    %710 = vmatprep.subr.mxu0 0.0
    %711 = vmatpush1.msra.mxu0 0.0
    %712 = vmatprep.subr.mxu0 0.0
    %713 = vmatpush1.msra.mxu0 0.0
    %714 = vmatprep.subr.mxu0 0.0
    %715 = vmatpush1.msra.mxu0 0.0
    %716 = vmatprep.subr.mxu0 0.0
    %717 = vmatpush1.msra.mxu0 0.0
    %718 = vmatprep.mubr.f32.mxu0 0.0
    %719 = vmatmul.mubr.f32.gmra.mrb[0].mxu0 %v622
    %v720 = vpop.f32.mrb[0].mxu0
    %v721 = vadd.f32 0.0, %v720
    %v722 = vpop.f32.mrb[0].mxu0
    %723 = vmatprep.mubr.f32.mxu0 0.0
    %724 = vmatmul.mubr.f32.gmra.mrb[0].mxu0 %v623
    %v725 = vpop.f32.mrb[0].mxu0
    %v726 = vadd.f32 0.0, %v725
    %v727 = vpop.f32.mrb[0].mxu0
    %728 = vmatprep.mubr.f32.mxu0 0.0
    %729 = vmatmul.mubr.f32.gmra.mrb[0].mxu0 %v624
    %v730 = vpop.f32.mrb[0].mxu0
    %v731 = vadd.f32 0.0, %v730
    %v732 = vpop.f32.mrb[0].mxu0
    %733 = vmatprep.mubr.f32.mxu0 0.0
    %734 = vmatmul.mubr.f32.gmra.mrb[0].mxu0 %v625
    %v735 = vpop.f32.mrb[0].mxu0
    %v736 = vadd.f32 0.0, %v735
    %v737 = vpop.f32.mrb[0].mxu0
    %738 = vmatprep.mubr.f32.mxu0 0.0
    %739 = vmatmul.mubr.f32.gmra.mrb[0].mxu0 %v626
    %v740 = vpop.f32.mrb[0].mxu0
    %v741 = vadd.f32 0.0, %v740
    %v742 = vpop.f32.mrb[0].mxu0
    %743 = vmatprep.mubr.f32.mxu0 0.0
    %744 = vmatmul.mubr.f32.gmra.mrb[0].mxu0 %v627
    %v745 = vpop.f32.mrb[0].mxu0
    %v746 = vadd.f32 0.0, %v745
    %v747 = vpop.f32.mrb[0].mxu0
    %748 = vmatprep.mubr.f32.mxu0 0.0
    %749 = vmatmul.mubr.f32.gmra.mrb[0].mxu0 %v628
    %v750 = vpop.f32.mrb[0].mxu0
    %v751 = vadd.f32 0.0, %v750
    %v752 = vpop.f32.mrb[0].mxu0
    %753 = vmatprep.mubr.f32.mxu0 0.0
    %754 = vmatmul.mubr.f32.gmra.mrb[0].mxu0 %v629
    %v755 = vpop.f32.mrb[0].mxu0
    %v756 = vadd.f32 0.0, %v755
    %v757 = vpop.f32.mrb[0].mxu0
    %758 = vmatprep.mubr.f32.mxu0 0.0
    %759 = vmatmul.mubr.f32.gmra.mrb[0].mxu0 %v630
    %v760 = vpop.f32.mrb[0].mxu0
    %v761 = vadd.f32 0.0, %v760
    %v762 = vpop.f32.mrb[0].mxu0
    %763 = vmatprep.mubr.f32.mxu0 0.0
    %764 = vmatmul.mubr.f32.gmra.mrb[0].mxu0 %v631
    %v765 = vpop.f32.mrb[0].mxu0
    %v766 = vadd.f32 0.0, %v765
    %v767 = vpop.f32.mrb[0].mxu0
    %768 = vmatprep.mubr.f32.mxu0 0.0
    %769 = vmatmul.mubr.f32.gmra.mrb[0].mxu0 %v632
    %v770 = vpop.f32.mrb[0].mxu0
    %v771 = vadd.f32 0.0, %v770
    %v772 = vpop.f32.mrb[0].mxu0
    %773 = vmatprep.mubr.f32.mxu0 0.0
    %774 = vmatmul.mubr.f32.gmra.mrb[0].mxu0 %v633
    %v775 = vpop.f32.mrb[0].mxu0
    %v776 = vadd.f32 0.0, %v775
    %v777 = vpop.f32.mrb[0].mxu0
    %778 = vmatprep.mubr.f32.mxu0 0.0
    %779 = vmatmul.mubr.f32.gmra.mrb[0].mxu0 %v634
    %v780 = vpop.f32.mrb[0].mxu0
    %v781 = vadd.f32 0.0, %v780
    %v782 = vpop.f32.mrb[0].mxu0
    %783 = vmatprep.mubr.f32.mxu0 0.0
    %784 = vmatmul.mubr.f32.gmra.mrb[0].mxu0 %v635
    %v785 = vpop.f32.mrb[0].mxu0
    %v786 = vadd.f32 0.0, %v785
    %v787 = vpop.f32.mrb[0].mxu0
    %788 = vmatprep.mubr.f32.mxu0 0.0
    %789 = vmatmul.mubr.f32.gmra.mrb[0].mxu0 %v636
    %v790 = vpop.f32.mrb[0].mxu0
    %v791 = vadd.f32 0.0, %v790
    %v792 = vpop.f32.mrb[0].mxu0
    %793 = vmatprep.mubr.f32.mxu0 0.0
    %794 = vmatmul.mubr.f32.gmra.mrb[0].mxu0 %v637
    %v795 = vpop.f32.mrb[0].mxu0
    %v796 = vadd.f32 0.0, %v795
    %v797 = vpop.f32.mrb[0].mxu0
    %798 = vdwg.mxu0
    %799 = vmatprep.subr.mxu0 0.0
    %800 = vmatpush1.msra.mxu0 %v574
    %801 = vmatprep.subr.mxu0 0.0
    %802 = vmatpush1.msra.mxu0 %v575
    %803 = vmatprep.subr.mxu0 0.0
    %804 = vmatpush1.msra.mxu0 %v576
    %805 = vmatprep.subr.mxu0 0.0
    %806 = vmatpush1.msra.mxu0 %v577
    %807 = vmatprep.subr.mxu0 0.0
    %808 = vmatpush1.msra.mxu0 %v578
    %809 = vmatprep.subr.mxu0 0.0
    %810 = vmatpush1.msra.mxu0 %v579
    %811 = vmatprep.subr.mxu0 0.0
    %812 = vmatpush1.msra.mxu0 %v580
    %813 = vmatprep.subr.mxu0 0.0
    %814 = vmatpush1.msra.mxu0 %v581
    %815 = vmatprep.subr.mxu0 0.0
    %816 = vmatpush1.msra.mxu0 %v582
    %817 = vmatprep.subr.mxu0 0.0
    %818 = vmatpush1.msra.mxu0 %v583
    %819 = vmatprep.subr.mxu0 0.0
    %820 = vmatpush1.msra.mxu0 %v584
    %821 = vmatprep.subr.mxu0 0.0
    %822 = vmatpush1.msra.mxu0 %v585
    %823 = vmatprep.subr.mxu0 0.0
    %824 = vmatpush1.msra.mxu0 %v586
    %825 = vmatprep.subr.mxu0 0.0
    %826 = vmatpush1.msra.mxu0 %v587
    %827 = vmatprep.subr.mxu0 0.0
    %828 = vmatpush1.msra.mxu0 %v588
    %829 = vmatprep.subr.mxu0 0.0
    %830 = vmatpush1.msra.mxu0 %v589
    %831 = vmatprep.subr.mxu0 0.0
    %832 = vmatpush1.msra.mxu0 %v590
    %833 = vmatprep.subr.mxu0 0.0
    %834 = vmatpush1.msra.mxu0 %v591
    %835 = vmatprep.subr.mxu0 0.0
    %836 = vmatpush1.msra.mxu0 %v592
    %837 = vmatprep.subr.mxu0 0.0
    %838 = vmatpush1.msra.mxu0 %v593
    %839 = vmatprep.subr.mxu0 0.0
    %840 = vmatpush1.msra.mxu0 %v594
    %841 = vmatprep.subr.mxu0 0.0
    %842 = vmatpush1.msra.mxu0 %v595
    %843 = vmatprep.subr.mxu0 0.0
    %844 = vmatpush1.msra.mxu0 %v596
    %845 = vmatprep.subr.mxu0 0.0
    %846 = vmatpush1.msra.mxu0 %v597
    %847 = vmatprep.subr.mxu0 0.0
    %848 = vmatpush1.msra.mxu0 %v598
    %849 = vmatprep.subr.mxu0 0.0
    %850 = vmatpush1.msra.mxu0 %v599
    %851 = vmatprep.subr.mxu0 0.0
    %852 = vmatpush1.msra.mxu0 %v600
    %853 = vmatprep.subr.mxu0 0.0
    %854 = vmatpush1.msra.mxu0 %v601
    %855 = vmatprep.subr.mxu0 0.0
    %856 = vmatpush1.msra.mxu0 %v602
    %857 = vmatprep.subr.mxu0 0.0
    %858 = vmatpush1.msra.mxu0 %v603
    %859 = vmatprep.subr.mxu0 0.0
    %860 = vmatpush1.msra.mxu0 %v604
    %861 = vmatprep.subr.mxu0 0.0
    %862 = vmatpush1.msra.mxu0 %v605
    %863 = vmatprep.mubr.f32.mxu0 %v527
    %864 = vmatmul.mubr.f32.gmra.mrb[0].mxu0 %v526
    %v865 = vpop.f32.mrb[0].mxu0
    %v866 = vadd.f32 %v721, %v865
    %v867 = vpop.f32.mrb[0].mxu0
    %868 = vmatprep.mubr.f32.mxu0 %v530
    %869 = vmatmul.mubr.f32.gmra.mrb[0].mxu0 %v529
    %v870 = vpop.f32.mrb[0].mxu0
    %v871 = vadd.f32 %v726, %v870
    %v872 = vpop.f32.mrb[0].mxu0
    %873 = vmatprep.mubr.f32.mxu0 %v533
    %874 = vmatmul.mubr.f32.gmra.mrb[0].mxu0 %v532
    %v875 = vpop.f32.mrb[0].mxu0
    %v876 = vadd.f32 %v731, %v875
    %v877 = vpop.f32.mrb[0].mxu0
    %878 = vmatprep.mubr.f32.mxu0 %v536
    %879 = vmatmul.mubr.f32.gmra.mrb[0].mxu0 %v535
    %v880 = vpop.f32.mrb[0].mxu0
    %v881 = vadd.f32 %v736, %v880
    %v882 = vpop.f32.mrb[0].mxu0
    %883 = vmatprep.mubr.f32.mxu0 %v539
    %884 = vmatmul.mubr.f32.gmra.mrb[0].mxu0 %v538
    %v885 = vpop.f32.mrb[0].mxu0
    %v886 = vadd.f32 %v741, %v885
    %v887 = vpop.f32.mrb[0].mxu0
    %888 = vmatprep.mubr.f32.mxu0 %v542
    %889 = vmatmul.mubr.f32.gmra.mrb[0].mxu0 %v541
    %v890 = vpop.f32.mrb[0].mxu0
    %v891 = vadd.f32 %v746, %v890
    %v892 = vpop.f32.mrb[0].mxu0
    %893 = vmatprep.mubr.f32.mxu0 %v545
    %894 = vmatmul.mubr.f32.gmra.mrb[0].mxu0 %v544
    %v895 = vpop.f32.mrb[0].mxu0
    %v896 = vadd.f32 %v751, %v895
    %v897 = vpop.f32.mrb[0].mxu0
    %898 = vmatprep.mubr.f32.mxu0 %v548
    %899 = vmatmul.mubr.f32.gmra.mrb[0].mxu0 %v547
    %v900 = vpop.f32.mrb[0].mxu0
    %v901 = vadd.f32 %v756, %v900
    %v902 = vpop.f32.mrb[0].mxu0
    %903 = vmatprep.mubr.f32.mxu0 %v551
    %904 = vmatmul.mubr.f32.gmra.mrb[0].mxu0 %v550
    %v905 = vpop.f32.mrb[0].mxu0
    %v906 = vadd.f32 %v761, %v905
    %v907 = vpop.f32.mrb[0].mxu0
    %908 = vmatprep.mubr.f32.mxu0 %v554
    %909 = vmatmul.mubr.f32.gmra.mrb[0].mxu0 %v553
    %v910 = vpop.f32.mrb[0].mxu0
    %v911 = vadd.f32 %v766, %v910
    %v912 = vpop.f32.mrb[0].mxu0
    %913 = vmatprep.mubr.f32.mxu0 %v557
    %914 = vmatmul.mubr.f32.gmra.mrb[0].mxu0 %v556
    %v915 = vpop.f32.mrb[0].mxu0
    %v916 = vadd.f32 %v771, %v915
    %v917 = vpop.f32.mrb[0].mxu0
    %918 = vmatprep.mubr.f32.mxu0 %v560
    %919 = vmatmul.mubr.f32.gmra.mrb[0].mxu0 %v559
    %v920 = vpop.f32.mrb[0].mxu0
    %v921 = vadd.f32 %v776, %v920
    %v922 = vpop.f32.mrb[0].mxu0
    %923 = vmatprep.mubr.f32.mxu0 %v563
    %924 = vmatmul.mubr.f32.gmra.mrb[0].mxu0 %v562
    %v925 = vpop.f32.mrb[0].mxu0
    %v926 = vadd.f32 %v781, %v925
    %v927 = vpop.f32.mrb[0].mxu0
    %928 = vmatprep.mubr.f32.mxu0 %v566
    %929 = vmatmul.mubr.f32.gmra.mrb[0].mxu0 %v565
    %v930 = vpop.f32.mrb[0].mxu0
    %v931 = vadd.f32 %v786, %v930
    %v932 = vpop.f32.mrb[0].mxu0
    %933 = vmatprep.mubr.f32.mxu0 %v569
    %934 = vmatmul.mubr.f32.gmra.mrb[0].mxu0 %v568
    %v935 = vpop.f32.mrb[0].mxu0
    %v936 = vadd.f32 %v791, %v935
    %v937 = vpop.f32.mrb[0].mxu0
    %938 = vmatprep.mubr.f32.mxu0 %v572
    %939 = vmatmul.mubr.f32.gmra.mrb[0].mxu0 %v571
    %v940 = vpop.f32.mrb[0].mxu0
    %v941 = vadd.f32 %v796, %v940
    %v942 = vpop.f32.mrb[0].mxu0
    %943 = vdwg.mxu0
    %944 = vmatprep.subr.mxu0 0.0
    %945 = vmatpush1.msra.mxu0 %v606
    %946 = vmatprep.subr.mxu0 0.0
    %947 = vmatpush1.msra.mxu0 %v607
    %948 = vmatprep.subr.mxu0 0.0
    %949 = vmatpush1.msra.mxu0 %v608
    %950 = vmatprep.subr.mxu0 0.0
    %951 = vmatpush1.msra.mxu0 %v609
    %952 = vmatprep.subr.mxu0 0.0
    %953 = vmatpush1.msra.mxu0 %v610
    %954 = vmatprep.subr.mxu0 0.0
    %955 = vmatpush1.msra.mxu0 %v611
    %956 = vmatprep.subr.mxu0 0.0
    %957 = vmatpush1.msra.mxu0 %v612
    %958 = vmatprep.subr.mxu0 0.0
    %959 = vmatpush1.msra.mxu0 %v613
    %960 = vmatprep.subr.mxu0 0.0
    %961 = vmatpush1.msra.mxu0 %v614
    %962 = vmatprep.subr.mxu0 0.0
    %963 = vmatpush1.msra.mxu0 %v615
    %964 = vmatprep.subr.mxu0 0.0
    %965 = vmatpush1.msra.mxu0 %v616
    %966 = vmatprep.subr.mxu0 0.0
    %967 = vmatpush1.msra.mxu0 %v617
    %968 = vmatprep.subr.mxu0 0.0
    %969 = vmatpush1.msra.mxu0 %v618
    %970 = vmatprep.subr.mxu0 0.0
    %971 = vmatpush1.msra.mxu0 %v619
    %972 = vmatprep.subr.mxu0 0.0
    %973 = vmatpush1.msra.mxu0 %v620
    %974 = vmatprep.subr.mxu0 0.0
    %975 = vmatpush1.msra.mxu0 %v621
    %976 = vmatprep.subr.mxu0 0.0
    %977 = vmatpush1.msra.mxu0 0.0
    %978 = vmatprep.subr.mxu0 0.0
    %979 = vmatpush1.msra.mxu0 0.0
    %980 = vmatprep.subr.mxu0 0.0
    %981 = vmatpush1.msra.mxu0 0.0
    %982 = vmatprep.subr.mxu0 0.0
    %983 = vmatpush1.msra.mxu0 0.0
    %984 = vmatprep.subr.mxu0 0.0
    %985 = vmatpush1.msra.mxu0 0.0
    %986 = vmatprep.subr.mxu0 0.0
    %987 = vmatpush1.msra.mxu0 0.0
    %988 = vmatprep.subr.mxu0 0.0
    %989 = vmatpush1.msra.mxu0 0.0
    %990 = vmatprep.subr.mxu0 0.0
    %991 = vmatpush1.msra.mxu0 0.0
    %992 = vmatprep.subr.mxu0 0.0
    %993 = vmatpush1.msra.mxu0 0.0
    %994 = vmatprep.subr.mxu0 0.0
    %995 = vmatpush1.msra.mxu0 0.0
    %996 = vmatprep.subr.mxu0 0.0
    %997 = vmatpush1.msra.mxu0 0.0
    %998 = vmatprep.subr.mxu0 0.0
    %999 = vmatpush1.msra.mxu0 0.0
    %1000 = vmatprep.subr.mxu0 0.0
    %1001 = vmatpush1.msra.mxu0 0.0
    %1002 = vmatprep.subr.mxu0 0.0
    %1003 = vmatpush1.msra.mxu0 0.0
    %1004 = vmatprep.subr.mxu0 0.0
    %1005 = vmatpush1.msra.mxu0 0.0
    %1006 = vmatprep.subr.mxu0 0.0
    %1007 = vmatpush1.msra.mxu0 0.0
    %1008 = vmatprep.mubr.f32.mxu0 0.0
    %1009 = vmatmul.mubr.f32.gmra.mrb[0].mxu0 %v528
    %v1010 = vpop.f32.mrb[0].mxu0
    %v1011 = vadd.f32 %v866, %v1010
    %v1012 = vpop.f32.mrb[0].mxu0
    %1013 = vmatprep.mubr.f32.mxu0 0.0
    %1014 = vmatmul.mubr.f32.gmra.mrb[0].mxu0 %v531
    %v1015 = vpop.f32.mrb[0].mxu0
    %v1016 = vadd.f32 %v871, %v1015
    %v1017 = vpop.f32.mrb[0].mxu0
    %1018 = vmatprep.mubr.f32.mxu0 0.0
    %1019 = vmatmul.mubr.f32.gmra.mrb[0].mxu0 %v534
    %v1020 = vpop.f32.mrb[0].mxu0
    %v1021 = vadd.f32 %v876, %v1020
    %v1022 = vpop.f32.mrb[0].mxu0
    %1023 = vmatprep.mubr.f32.mxu0 0.0
    %1024 = vmatmul.mubr.f32.gmra.mrb[0].mxu0 %v537
    %v1025 = vpop.f32.mrb[0].mxu0
    %v1026 = vadd.f32 %v881, %v1025
    %v1027 = vpop.f32.mrb[0].mxu0
    %1028 = vmatprep.mubr.f32.mxu0 0.0
    %1029 = vmatmul.mubr.f32.gmra.mrb[0].mxu0 %v540
    %v1030 = vpop.f32.mrb[0].mxu0
    %v1031 = vadd.f32 %v886, %v1030
    %v1032 = vpop.f32.mrb[0].mxu0
    %1033 = vmatprep.mubr.f32.mxu0 0.0
    %1034 = vmatmul.mubr.f32.gmra.mrb[0].mxu0 %v543
    %v1035 = vpop.f32.mrb[0].mxu0
    %v1036 = vadd.f32 %v891, %v1035
    %v1037 = vpop.f32.mrb[0].mxu0
    %1038 = vmatprep.mubr.f32.mxu0 0.0
    %1039 = vmatmul.mubr.f32.gmra.mrb[0].mxu0 %v546
    %v1040 = vpop.f32.mrb[0].mxu0
    %v1041 = vadd.f32 %v896, %v1040
    %v1042 = vpop.f32.mrb[0].mxu0
    %1043 = vmatprep.mubr.f32.mxu0 0.0
    %1044 = vmatmul.mubr.f32.gmra.mrb[0].mxu0 %v549
    %v1045 = vpop.f32.mrb[0].mxu0
    %v1046 = vadd.f32 %v901, %v1045
    %v1047 = vpop.f32.mrb[0].mxu0
    %1048 = vmatprep.mubr.f32.mxu0 0.0
    %1049 = vmatmul.mubr.f32.gmra.mrb[0].mxu0 %v552
    %v1050 = vpop.f32.mrb[0].mxu0
    %v1051 = vadd.f32 %v906, %v1050
    %v1052 = vpop.f32.mrb[0].mxu0
    %1053 = vmatprep.mubr.f32.mxu0 0.0
    %1054 = vmatmul.mubr.f32.gmra.mrb[0].mxu0 %v555
    %v1055 = vpop.f32.mrb[0].mxu0
    %v1056 = vadd.f32 %v911, %v1055
    %v1057 = vpop.f32.mrb[0].mxu0
    %1058 = vmatprep.mubr.f32.mxu0 0.0
    %1059 = vmatmul.mubr.f32.gmra.mrb[0].mxu0 %v558
    %v1060 = vpop.f32.mrb[0].mxu0
    %v1061 = vadd.f32 %v916, %v1060
    %v1062 = vpop.f32.mrb[0].mxu0
    %1063 = vmatprep.mubr.f32.mxu0 0.0
    %1064 = vmatmul.mubr.f32.gmra.mrb[0].mxu0 %v561
    %v1065 = vpop.f32.mrb[0].mxu0
    %v1066 = vadd.f32 %v921, %v1065
    %v1067 = vpop.f32.mrb[0].mxu0
    %1068 = vmatprep.mubr.f32.mxu0 0.0
    %1069 = vmatmul.mubr.f32.gmra.mrb[0].mxu0 %v564
    %v1070 = vpop.f32.mrb[0].mxu0
    %v1071 = vadd.f32 %v926, %v1070
    %v1072 = vpop.f32.mrb[0].mxu0
    %1073 = vmatprep.mubr.f32.mxu0 0.0
    %1074 = vmatmul.mubr.f32.gmra.mrb[0].mxu0 %v567
    %v1075 = vpop.f32.mrb[0].mxu0
    %v1076 = vadd.f32 %v931, %v1075
    %v1077 = vpop.f32.mrb[0].mxu0
    %1078 = vmatprep.mubr.f32.mxu0 0.0
    %1079 = vmatmul.mubr.f32.gmra.mrb[0].mxu0 %v570
    %v1080 = vpop.f32.mrb[0].mxu0
    %v1081 = vadd.f32 %v936, %v1080
    %v1082 = vpop.f32.mrb[0].mxu0
    %1083 = vmatprep.mubr.f32.mxu0 0.0
    %1084 = vmatmul.mubr.f32.gmra.mrb[0].mxu0 %v573
    %v1085 = vpop.f32.mrb[0].mxu0
    %v1086 = vadd.f32 %v941, %v1085
    %v1087 = vpop.f32.mrb[0].mxu0
    %1088 = vdwg.mxu0
    %v1089 = vld [vmem:[%s4] sm:$0x1]
    %v1091 = vlaneseq
    %v1092 = vshrl.u32 %v1091, 7
    %v1093 = vsub.s32 0, %v1092
    %v1094 = vrot.slane %v1089, %v1093
    %v1096 = vadd.f32 %v1011, %v1094
    %v1097 = vadd.f32 %v1016, %v1094
    %v1098 = vadd.f32 %v1021, %v1094
    %v1099 = vadd.f32 %v1026, %v1094
    %v1100 = vadd.f32 %v1031, %v1094
    %v1101 = vadd.f32 %v1036, %v1094
    %v1102 = vadd.f32 %v1041, %v1094
    %v1103 = vadd.f32 %v1046, %v1094
    %v1104 = vadd.f32 %v1051, %v1094
    %v1105 = vadd.f32 %v1056, %v1094
    %v1106 = vadd.f32 %v1061, %v1094
    %v1107 = vadd.f32 %v1066, %v1094
    %v1108 = vadd.f32 %v1071, %v1094
    %v1109 = vadd.f32 %v1076, %v1094
    %v1110 = vadd.f32 %v1081, %v1094
    %v1111 = vadd.f32 %v1086, %v1094
    %1112 = vst [vmem:[#allocation4] sm:$0xff] %v1096
    %1113 = vst [vmem:[#allocation4 + $0x8] sm:$0xff] %v1097
    %1114 = vst [vmem:[#allocation4 + $0x10] sm:$0xff] %v1098
    %1115 = vst [vmem:[#allocation4 + $0x18] sm:$0xff] %v1099
    %1116 = vst [vmem:[#allocation4 + $0x20] sm:$0xff] %v1100
    %1117 = vst [vmem:[#allocation4 + $0x28] sm:$0xff] %v1101
    %1118 = vst [vmem:[#allocation4 + $0x30] sm:$0xff] %v1102
    %1119 = vst [vmem:[#allocation4 + $0x38] sm:$0xff] %v1103
    %1120 = vst [vmem:[#allocation4 + $0x40] sm:$0xff] %v1104
    %1121 = vst [vmem:[#allocation4 + $0x48] sm:$0xff] %v1105
    %1122 = vst [vmem:[#allocation4 + $0x50] sm:$0xff] %v1106
    %1123 = vst [vmem:[#allocation4 + $0x58] sm:$0xff] %v1107
    %1124 = vst [vmem:[#allocation4 + $0x60] sm:$0xff] %v1108
    %1125 = vst [vmem:[#allocation4 + $0x68] sm:$0xff] %v1109
    %1126 = vst [vmem:[#allocation4 + $0x70] sm:$0xff] %v1110
    %1127 = vst [vmem:[#allocation4 + $0x78] sm:$0xff] %v1111
    %v1128 = vld [vmem:[#allocation4] sm:$0xff]
    %v1129 = vld [vmem:[#allocation4 + $0x8] sm:$0xff]
    %v1130 = vld [vmem:[#allocation4 + $0x10] sm:$0xff]
    %v1131 = vld [vmem:[#allocation4 + $0x18] sm:$0xff]
    %v1132 = vld [vmem:[#allocation4 + $0x20] sm:$0xff]
    %v1133 = vld [vmem:[#allocation4 + $0x28] sm:$0xff]
    %v1134 = vld [vmem:[#allocation4 + $0x30] sm:$0xff]
    %v1135 = vld [vmem:[#allocation4 + $0x38] sm:$0xff]
    %v1136 = vld [vmem:[#allocation4 + $0x40] sm:$0xff]
    %v1137 = vld [vmem:[#allocation4 + $0x48] sm:$0xff]
    %v1138 = vld [vmem:[#allocation4 + $0x50] sm:$0xff]
    %v1139 = vld [vmem:[#allocation4 + $0x58] sm:$0xff]
    %v1140 = vld [vmem:[#allocation4 + $0x60] sm:$0xff]
    %v1141 = vld [vmem:[#allocation4 + $0x68] sm:$0xff]
    %v1142 = vld [vmem:[#allocation4 + $0x70] sm:$0xff]
    %v1143 = vld [vmem:[#allocation4 + $0x78] sm:$0xff]
    %v1144 = vmax.f32 %v1128, 0.0
    %v1145 = vmax.f32 %v1129, 0.0
    %v1146 = vmax.f32 %v1130, 0.0
    %v1147 = vmax.f32 %v1131, 0.0
    %v1148 = vmax.f32 %v1132, 0.0
    %v1149 = vmax.f32 %v1133, 0.0
    %v1150 = vmax.f32 %v1134, 0.0
    %v1151 = vmax.f32 %v1135, 0.0
    %v1152 = vmax.f32 %v1136, 0.0
    %v1153 = vmax.f32 %v1137, 0.0
    %v1154 = vmax.f32 %v1138, 0.0
    %v1155 = vmax.f32 %v1139, 0.0
    %v1156 = vmax.f32 %v1140, 0.0
    %v1157 = vmax.f32 %v1141, 0.0
    %v1158 = vmax.f32 %v1142, 0.0
    %v1159 = vmax.f32 %v1143, 0.0
    %1160 = vst [vmem:[#allocation2] sm:$0xff] %v1144
    %1161 = vst [vmem:[#allocation2 + $0x8] sm:$0xff] %v1145
    %1162 = vst [vmem:[#allocation2 + $0x10] sm:$0xff] %v1146
    %1163 = vst [vmem:[#allocation2 + $0x18] sm:$0xff] %v1147
    %1164 = vst [vmem:[#allocation2 + $0x20] sm:$0xff] %v1148
    %1165 = vst [vmem:[#allocation2 + $0x28] sm:$0xff] %v1149
    %1166 = vst [vmem:[#allocation2 + $0x30] sm:$0xff] %v1150
    %1167 = vst [vmem:[#allocation2 + $0x38] sm:$0xff] %v1151
    %1168 = vst [vmem:[#allocation2 + $0x40] sm:$0xff] %v1152
    %1169 = vst [vmem:[#allocation2 + $0x48] sm:$0xff] %v1153
    %1170 = vst [vmem:[#allocation2 + $0x50] sm:$0xff] %v1154
    %1171 = vst [vmem:[#allocation2 + $0x58] sm:$0xff] %v1155
    %1172 = vst [vmem:[#allocation2 + $0x60] sm:$0xff] %v1156
    %1173 = vst [vmem:[#allocation2 + $0x68] sm:$0xff] %v1157
    %1174 = vst [vmem:[#allocation2 + $0x70] sm:$0xff] %v1158
    %1175 = vst [vmem:[#allocation2 + $0x78] sm:$0xff] %v1159
    %v1176 = vld [vmem:[#allocation2] sm:$0xff]
    %v1177 = vld [vmem:[#allocation2 + $0x8] sm:$0xff]
    %v1178 = vld [vmem:[#allocation2 + $0x10] sm:$0xff]
    %v1179 = vld [vmem:[#allocation2 + $0x18] sm:$0xff]
    %v1180 = vld [vmem:[#allocation2 + $0x20] sm:$0xff]
    %v1181 = vld [vmem:[#allocation2 + $0x28] sm:$0xff]
    %v1182 = vld [vmem:[#allocation2 + $0x30] sm:$0xff]
    %v1183 = vld [vmem:[#allocation2 + $0x38] sm:$0xff]
    %v1184 = vld [vmem:[#allocation2 + $0x40] sm:$0xff]
    %v1185 = vld [vmem:[#allocation2 + $0x48] sm:$0xff]
    %v1186 = vld [vmem:[#allocation2 + $0x50] sm:$0xff]
    %v1187 = vld [vmem:[#allocation2 + $0x58] sm:$0xff]
    %v1188 = vld [vmem:[#allocation2 + $0x60] sm:$0xff]
    %v1189 = vld [vmem:[#allocation2 + $0x68] sm:$0xff]
    %v1190 = vld [vmem:[#allocation2 + $0x70] sm:$0xff]
    %v1191 = vld [vmem:[#allocation2 + $0x78] sm:$0xff]
    %s1192 = scalar_lea.vmem [#allocation10], 384
    %v1193 = vld [vmem:[%s1192] sm:$0xff]
    %v1194 = vld [vmem:[%s1192 + $0x8] sm:$0xff]
    %v1195 = vld [vmem:[%s1192 + $0x10] sm:$0xff]
    %v1196 = vld [vmem:[%s1192 + $0x18] sm:$0xff]
    %v1197 = vld [vmem:[%s1192 + $0x20] sm:$0xff]
    %v1198 = vld [vmem:[%s1192 + $0x28] sm:$0xff]
    %v1199 = vld [vmem:[%s1192 + $0x30] sm:$0xff]
    %v1200 = vld [vmem:[%s1192 + $0x38] sm:$0xff]
    %v1201 = vld [vmem:[%s1192 + $0x40] sm:$0xff]
    %v1202 = vld [vmem:[%s1192 + $0x48] sm:$0xff]
    %v1203 = vld [vmem:[%s1192 + $0x50] sm:$0xff]
    %v1204 = vld [vmem:[%s1192 + $0x58] sm:$0xff]
    %v1205 = vld [vmem:[%s1192 + $0x60] sm:$0xff]
    %v1206 = vld [vmem:[%s1192 + $0x68] sm:$0xff]
    %v1207 = vld [vmem:[%s1192 + $0x70] sm:$0xff]
    %v1208 = vld [vmem:[%s1192 + $0x78] sm:$0xff]
    %v1209 = vld [vmem:[%s1192 + $0x80] sm:$0xff]
    %v1210 = vld [vmem:[%s1192 + $0x88] sm:$0xff]
    %v1211 = vld [vmem:[%s1192 + $0x90] sm:$0xff]
    %v1212 = vld [vmem:[%s1192 + $0x98] sm:$0xff]
    %v1213 = vld [vmem:[%s1192 + $0xa0] sm:$0xff]
    %v1214 = vld [vmem:[%s1192 + $0xa8] sm:$0xff]
    %v1215 = vld [vmem:[%s1192 + $0xb0] sm:$0xff]
    %v1216 = vld [vmem:[%s1192 + $0xb8] sm:$0xff]
    %v1217 = vld [vmem:[%s1192 + $0xc0] sm:$0xff]
    %v1218 = vld [vmem:[%s1192 + $0xc8] sm:$0xff]
    %v1219 = vld [vmem:[%s1192 + $0xd0] sm:$0xff]
    %v1220 = vld [vmem:[%s1192 + $0xd8] sm:$0xff]
    %v1221 = vld [vmem:[%s1192 + $0xe0] sm:$0xff]
    %v1222 = vld [vmem:[%s1192 + $0xe8] sm:$0xff]
    %v1223 = vld [vmem:[%s1192 + $0xf0] sm:$0xff]
    %v1224 = vld [vmem:[%s1192 + $0xf8] sm:$0xff]
    %v1225 = vld [vmem:[%s1192 + $0x100] sm:$0xff]
    %v1226 = vld [vmem:[%s1192 + $0x108] sm:$0xff]
    %v1227 = vld [vmem:[%s1192 + $0x110] sm:$0xff]
    %v1228 = vld [vmem:[%s1192 + $0x118] sm:$0xff]
    %v1229 = vld [vmem:[%s1192 + $0x120] sm:$0xff]
    %v1230 = vld [vmem:[%s1192 + $0x128] sm:$0xff]
    %v1231 = vld [vmem:[%s1192 + $0x130] sm:$0xff]
    %v1232 = vld [vmem:[%s1192 + $0x138] sm:$0xff]
    %v1233 = vld [vmem:[%s1192 + $0x140] sm:$0xff]
    %v1234 = vld [vmem:[%s1192 + $0x148] sm:$0xff]
    %v1235 = vld [vmem:[%s1192 + $0x150] sm:$0xff]
    %v1236 = vld [vmem:[%s1192 + $0x158] sm:$0xff]
    %v1237 = vld [vmem:[%s1192 + $0x160] sm:$0xff]
    %v1238 = vld [vmem:[%s1192 + $0x168] sm:$0xff]
    %v1239 = vld [vmem:[%s1192 + $0x170] sm:$0xff]
    %v1240 = vld [vmem:[%s1192 + $0x178] sm:$0xff]
    %1241 = vmatprep.subr.mxu0 %v1194
    %1242 = vmatpush1.msra.mxu0 %v1193
    %1243 = vmatprep.subr.mxu0 %v1197
    %1244 = vmatpush1.msra.mxu0 %v1196
    %1245 = vmatprep.subr.mxu0 %v1200
    %1246 = vmatpush1.msra.mxu0 %v1199
    %1247 = vmatprep.subr.mxu0 %v1203
    %1248 = vmatpush1.msra.mxu0 %v1202
    %1249 = vmatprep.subr.mxu0 %v1206
    %1250 = vmatpush1.msra.mxu0 %v1205
    %1251 = vmatprep.subr.mxu0 %v1209
    %1252 = vmatpush1.msra.mxu0 %v1208
    %1253 = vmatprep.subr.mxu0 %v1212
    %1254 = vmatpush1.msra.mxu0 %v1211
    %1255 = vmatprep.subr.mxu0 %v1215
    %1256 = vmatpush1.msra.mxu0 %v1214
    %1257 = vmatprep.subr.mxu0 %v1218
    %1258 = vmatpush1.msra.mxu0 %v1217
    %1259 = vmatprep.subr.mxu0 %v1221
    %1260 = vmatpush1.msra.mxu0 %v1220
    %1261 = vmatprep.subr.mxu0 %v1224
    %1262 = vmatpush1.msra.mxu0 %v1223
    %1263 = vmatprep.subr.mxu0 %v1227
    %1264 = vmatpush1.msra.mxu0 %v1226
    %1265 = vmatprep.subr.mxu0 %v1230
    %1266 = vmatpush1.msra.mxu0 %v1229
    %1267 = vmatprep.subr.mxu0 %v1233
    %1268 = vmatpush1.msra.mxu0 %v1232
    %1269 = vmatprep.subr.mxu0 %v1236
    %1270 = vmatpush1.msra.mxu0 %v1235
    %1271 = vmatprep.subr.mxu0 %v1239
    %1272 = vmatpush1.msra.mxu0 %v1238
    %1273 = vmatprep.subr.mxu0 0.0
    %1274 = vmatpush1.msra.mxu0 0.0
    %1275 = vmatprep.subr.mxu0 0.0
    %1276 = vmatpush1.msra.mxu0 0.0
    %1277 = vmatprep.subr.mxu0 0.0
    %1278 = vmatpush1.msra.mxu0 0.0
    %1279 = vmatprep.subr.mxu0 0.0
    %1280 = vmatpush1.msra.mxu0 0.0
    %1281 = vmatprep.subr.mxu0 0.0
    %1282 = vmatpush1.msra.mxu0 0.0
    %1283 = vmatprep.subr.mxu0 0.0
    %1284 = vmatpush1.msra.mxu0 0.0
    %1285 = vmatprep.subr.mxu0 0.0
    %1286 = vmatpush1.msra.mxu0 0.0
    %1287 = vmatprep.subr.mxu0 0.0
    %1288 = vmatpush1.msra.mxu0 0.0
    %1289 = vmatprep.subr.mxu0 0.0
    %1290 = vmatpush1.msra.mxu0 0.0
    %1291 = vmatprep.subr.mxu0 0.0
    %1292 = vmatpush1.msra.mxu0 0.0
    %1293 = vmatprep.subr.mxu0 0.0
    %1294 = vmatpush1.msra.mxu0 0.0
    %1295 = vmatprep.subr.mxu0 0.0
    %1296 = vmatpush1.msra.mxu0 0.0
    %1297 = vmatprep.subr.mxu0 0.0
    %1298 = vmatpush1.msra.mxu0 0.0
    %1299 = vmatprep.subr.mxu0 0.0
    %1300 = vmatpush1.msra.mxu0 0.0
    %1301 = vmatprep.subr.mxu0 0.0
    %1302 = vmatpush1.msra.mxu0 0.0
    %1303 = vmatprep.subr.mxu0 0.0
    %1304 = vmatpush1.msra.mxu0 0.0
    %1305 = vmatprep.mubr.f32.mxu0 0.0
    %1306 = vmatmul.mubr.f32.gmra.mrb[0].mxu0 %v1176
    %v1307 = vpop.f32.mrb[0].mxu0
    %v1308 = vadd.f32 0.0, %v1307
    %v1309 = vpop.f32.mrb[0].mxu0
    %v1310 = vadd.f32 0.0, %v1309
    %1311 = vmatprep.mubr.f32.mxu0 0.0
    %1312 = vmatmul.mubr.f32.gmra.mrb[0].mxu0 %v1177
    %v1313 = vpop.f32.mrb[0].mxu0
    %v1314 = vadd.f32 0.0, %v1313
    %v1315 = vpop.f32.mrb[0].mxu0
    %v1316 = vadd.f32 0.0, %v1315
    %1317 = vmatprep.mubr.f32.mxu0 0.0
    %1318 = vmatmul.mubr.f32.gmra.mrb[0].mxu0 %v1178
    %v1319 = vpop.f32.mrb[0].mxu0
    %v1320 = vadd.f32 0.0, %v1319
    %v1321 = vpop.f32.mrb[0].mxu0
    %v1322 = vadd.f32 0.0, %v1321
    %1323 = vmatprep.mubr.f32.mxu0 0.0
    %1324 = vmatmul.mubr.f32.gmra.mrb[0].mxu0 %v1179
    %v1325 = vpop.f32.mrb[0].mxu0
    %v1326 = vadd.f32 0.0, %v1325
    %v1327 = vpop.f32.mrb[0].mxu0
    %v1328 = vadd.f32 0.0, %v1327
    %1329 = vmatprep.mubr.f32.mxu0 0.0
    %1330 = vmatmul.mubr.f32.gmra.mrb[0].mxu0 %v1180
    %v1331 = vpop.f32.mrb[0].mxu0
    %v1332 = vadd.f32 0.0, %v1331
    %v1333 = vpop.f32.mrb[0].mxu0
    %v1334 = vadd.f32 0.0, %v1333
    %1335 = vmatprep.mubr.f32.mxu0 0.0
    %1336 = vmatmul.mubr.f32.gmra.mrb[0].mxu0 %v1181
    %v1337 = vpop.f32.mrb[0].mxu0
    %v1338 = vadd.f32 0.0, %v1337
    %v1339 = vpop.f32.mrb[0].mxu0
    %v1340 = vadd.f32 0.0, %v1339
    %1341 = vmatprep.mubr.f32.mxu0 0.0
    %1342 = vmatmul.mubr.f32.gmra.mrb[0].mxu0 %v1182
    %v1343 = vpop.f32.mrb[0].mxu0
    %v1344 = vadd.f32 0.0, %v1343
    %v1345 = vpop.f32.mrb[0].mxu0
    %v1346 = vadd.f32 0.0, %v1345
    %1347 = vmatprep.mubr.f32.mxu0 0.0
    %1348 = vmatmul.mubr.f32.gmra.mrb[0].mxu0 %v1183
    %v1349 = vpop.f32.mrb[0].mxu0
    %v1350 = vadd.f32 0.0, %v1349
    %v1351 = vpop.f32.mrb[0].mxu0
    %v1352 = vadd.f32 0.0, %v1351
    %1353 = vmatprep.mubr.f32.mxu0 0.0
    %1354 = vmatmul.mubr.f32.gmra.mrb[0].mxu0 %v1184
    %v1355 = vpop.f32.mrb[0].mxu0
    %v1356 = vadd.f32 0.0, %v1355
    %v1357 = vpop.f32.mrb[0].mxu0
    %v1358 = vadd.f32 0.0, %v1357
    %1359 = vmatprep.mubr.f32.mxu0 0.0
    %1360 = vmatmul.mubr.f32.gmra.mrb[0].mxu0 %v1185
    %v1361 = vpop.f32.mrb[0].mxu0
    %v1362 = vadd.f32 0.0, %v1361
    %v1363 = vpop.f32.mrb[0].mxu0
    %v1364 = vadd.f32 0.0, %v1363
    %1365 = vmatprep.mubr.f32.mxu0 0.0
    %1366 = vmatmul.mubr.f32.gmra.mrb[0].mxu0 %v1186
    %v1367 = vpop.f32.mrb[0].mxu0
    %v1368 = vadd.f32 0.0, %v1367
    %v1369 = vpop.f32.mrb[0].mxu0
    %v1370 = vadd.f32 0.0, %v1369
    %1371 = vmatprep.mubr.f32.mxu0 0.0
    %1372 = vmatmul.mubr.f32.gmra.mrb[0].mxu0 %v1187
    %v1373 = vpop.f32.mrb[0].mxu0
    %v1374 = vadd.f32 0.0, %v1373
    %v1375 = vpop.f32.mrb[0].mxu0
    %v1376 = vadd.f32 0.0, %v1375
    %1377 = vmatprep.mubr.f32.mxu0 0.0
    %1378 = vmatmul.mubr.f32.gmra.mrb[0].mxu0 %v1188
    %v1379 = vpop.f32.mrb[0].mxu0
    %v1380 = vadd.f32 0.0, %v1379
    %v1381 = vpop.f32.mrb[0].mxu0
    %v1382 = vadd.f32 0.0, %v1381
    %1383 = vmatprep.mubr.f32.mxu0 0.0
    %1384 = vmatmul.mubr.f32.gmra.mrb[0].mxu0 %v1189
    %v1385 = vpop.f32.mrb[0].mxu0
    %v1386 = vadd.f32 0.0, %v1385
    %v1387 = vpop.f32.mrb[0].mxu0
    %v1388 = vadd.f32 0.0, %v1387
    %1389 = vmatprep.mubr.f32.mxu0 0.0
    %1390 = vmatmul.mubr.f32.gmra.mrb[0].mxu0 %v1190
    %v1391 = vpop.f32.mrb[0].mxu0
    %v1392 = vadd.f32 0.0, %v1391
    %v1393 = vpop.f32.mrb[0].mxu0
    %v1394 = vadd.f32 0.0, %v1393
    %1395 = vmatprep.mubr.f32.mxu0 0.0
    %1396 = vmatmul.mubr.f32.gmra.mrb[0].mxu0 %v1191
    %v1397 = vpop.f32.mrb[0].mxu0
    %v1398 = vadd.f32 0.0, %v1397
    %v1399 = vpop.f32.mrb[0].mxu0
    %v1400 = vadd.f32 0.0, %v1399
    %1401 = vdwg.mxu0
    %1402 = vmatprep.subr.mxu0 0.0
    %1403 = vmatpush1.msra.mxu0 %v1195
    %1404 = vmatprep.subr.mxu0 0.0
    %1405 = vmatpush1.msra.mxu0 %v1198
    %1406 = vmatprep.subr.mxu0 0.0
    %1407 = vmatpush1.msra.mxu0 %v1201
    %1408 = vmatprep.subr.mxu0 0.0
    %1409 = vmatpush1.msra.mxu0 %v1204
    %1410 = vmatprep.subr.mxu0 0.0
    %1411 = vmatpush1.msra.mxu0 %v1207
    %1412 = vmatprep.subr.mxu0 0.0
    %1413 = vmatpush1.msra.mxu0 %v1210
    %1414 = vmatprep.subr.mxu0 0.0
    %1415 = vmatpush1.msra.mxu0 %v1213
    %1416 = vmatprep.subr.mxu0 0.0
    %1417 = vmatpush1.msra.mxu0 %v1216
    %1418 = vmatprep.subr.mxu0 0.0
    %1419 = vmatpush1.msra.mxu0 %v1219
    %1420 = vmatprep.subr.mxu0 0.0
    %1421 = vmatpush1.msra.mxu0 %v1222
    %1422 = vmatprep.subr.mxu0 0.0
    %1423 = vmatpush1.msra.mxu0 %v1225
    %1424 = vmatprep.subr.mxu0 0.0
    %1425 = vmatpush1.msra.mxu0 %v1228
    %1426 = vmatprep.subr.mxu0 0.0
    %1427 = vmatpush1.msra.mxu0 %v1231
    %1428 = vmatprep.subr.mxu0 0.0
    %1429 = vmatpush1.msra.mxu0 %v1234
    %1430 = vmatprep.subr.mxu0 0.0
    %1431 = vmatpush1.msra.mxu0 %v1237
    %1432 = vmatprep.subr.mxu0 0.0
    %1433 = vmatpush1.msra.mxu0 %v1240
    %1434 = vmatprep.subr.mxu0 0.0
    %1435 = vmatpush1.msra.mxu0 0.0
    %1436 = vmatprep.subr.mxu0 0.0
    %1437 = vmatpush1.msra.mxu0 0.0
    %1438 = vmatprep.subr.mxu0 0.0
    %1439 = vmatpush1.msra.mxu0 0.0
    %1440 = vmatprep.subr.mxu0 0.0
    %1441 = vmatpush1.msra.mxu0 0.0
    %1442 = vmatprep.subr.mxu0 0.0
    %1443 = vmatpush1.msra.mxu0 0.0
    %1444 = vmatprep.subr.mxu0 0.0
    %1445 = vmatpush1.msra.mxu0 0.0
    %1446 = vmatprep.subr.mxu0 0.0
    %1447 = vmatpush1.msra.mxu0 0.0
    %1448 = vmatprep.subr.mxu0 0.0
    %1449 = vmatpush1.msra.mxu0 0.0
    %1450 = vmatprep.subr.mxu0 0.0
    %1451 = vmatpush1.msra.mxu0 0.0
    %1452 = vmatprep.subr.mxu0 0.0
    %1453 = vmatpush1.msra.mxu0 0.0
    %1454 = vmatprep.subr.mxu0 0.0
    %1455 = vmatpush1.msra.mxu0 0.0
    %1456 = vmatprep.subr.mxu0 0.0
    %1457 = vmatpush1.msra.mxu0 0.0
    %1458 = vmatprep.subr.mxu0 0.0
    %1459 = vmatpush1.msra.mxu0 0.0
    %1460 = vmatprep.subr.mxu0 0.0
    %1461 = vmatpush1.msra.mxu0 0.0
    %1462 = vmatprep.subr.mxu0 0.0
    %1463 = vmatpush1.msra.mxu0 0.0
    %1464 = vmatprep.subr.mxu0 0.0
    %1465 = vmatpush1.msra.mxu0 0.0
    %1466 = vmatprep.mubr.f32.mxu0 0.0
    %1467 = vmatmul.mubr.f32.gmra.mrb[0].mxu0 %v1176
    %v1468 = vpop.f32.mrb[0].mxu0
    %v1469 = vadd.f32 0.0, %v1468
    %v1470 = vpop.f32.mrb[0].mxu0
    %1471 = vmatprep.mubr.f32.mxu0 0.0
    %1472 = vmatmul.mubr.f32.gmra.mrb[0].mxu0 %v1177
    %v1473 = vpop.f32.mrb[0].mxu0
    %v1474 = vadd.f32 0.0, %v1473
    %v1475 = vpop.f32.mrb[0].mxu0
    %1476 = vmatprep.mubr.f32.mxu0 0.0
    %1477 = vmatmul.mubr.f32.gmra.mrb[0].mxu0 %v1178
    %v1478 = vpop.f32.mrb[0].mxu0
    %v1479 = vadd.f32 0.0, %v1478
    %v1480 = vpop.f32.mrb[0].mxu0
    %1481 = vmatprep.mubr.f32.mxu0 0.0
    %1482 = vmatmul.mubr.f32.gmra.mrb[0].mxu0 %v1179
    %v1483 = vpop.f32.mrb[0].mxu0
    %v1484 = vadd.f32 0.0, %v1483
    %v1485 = vpop.f32.mrb[0].mxu0
    %1486 = vmatprep.mubr.f32.mxu0 0.0
    %1487 = vmatmul.mubr.f32.gmra.mrb[0].mxu0 %v1180
    %v1488 = vpop.f32.mrb[0].mxu0
    %v1489 = vadd.f32 0.0, %v1488
    %v1490 = vpop.f32.mrb[0].mxu0
    %1491 = vmatprep.mubr.f32.mxu0 0.0
    %1492 = vmatmul.mubr.f32.gmra.mrb[0].mxu0 %v1181
    %v1493 = vpop.f32.mrb[0].mxu0
    %v1494 = vadd.f32 0.0, %v1493
    %v1495 = vpop.f32.mrb[0].mxu0
    %1496 = vmatprep.mubr.f32.mxu0 0.0
    %1497 = vmatmul.mubr.f32.gmra.mrb[0].mxu0 %v1182
    %v1498 = vpop.f32.mrb[0].mxu0
    %v1499 = vadd.f32 0.0, %v1498
    %v1500 = vpop.f32.mrb[0].mxu0
    %1501 = vmatprep.mubr.f32.mxu0 0.0
    %1502 = vmatmul.mubr.f32.gmra.mrb[0].mxu0 %v1183
    %v1503 = vpop.f32.mrb[0].mxu0
    %v1504 = vadd.f32 0.0, %v1503
    %v1505 = vpop.f32.mrb[0].mxu0
    %1506 = vmatprep.mubr.f32.mxu0 0.0
    %1507 = vmatmul.mubr.f32.gmra.mrb[0].mxu0 %v1184
    %v1508 = vpop.f32.mrb[0].mxu0
    %v1509 = vadd.f32 0.0, %v1508
    %v1510 = vpop.f32.mrb[0].mxu0
    %1511 = vmatprep.mubr.f32.mxu0 0.0
    %1512 = vmatmul.mubr.f32.gmra.mrb[0].mxu0 %v1185
    %v1513 = vpop.f32.mrb[0].mxu0
    %v1514 = vadd.f32 0.0, %v1513
    %v1515 = vpop.f32.mrb[0].mxu0
    %1516 = vmatprep.mubr.f32.mxu0 0.0
    %1517 = vmatmul.mubr.f32.gmra.mrb[0].mxu0 %v1186
    %v1518 = vpop.f32.mrb[0].mxu0
    %v1519 = vadd.f32 0.0, %v1518
    %v1520 = vpop.f32.mrb[0].mxu0
    %1521 = vmatprep.mubr.f32.mxu0 0.0
    %1522 = vmatmul.mubr.f32.gmra.mrb[0].mxu0 %v1187
    %v1523 = vpop.f32.mrb[0].mxu0
    %v1524 = vadd.f32 0.0, %v1523
    %v1525 = vpop.f32.mrb[0].mxu0
    %1526 = vmatprep.mubr.f32.mxu0 0.0
    %1527 = vmatmul.mubr.f32.gmra.mrb[0].mxu0 %v1188
    %v1528 = vpop.f32.mrb[0].mxu0
    %v1529 = vadd.f32 0.0, %v1528
    %v1530 = vpop.f32.mrb[0].mxu0
    %1531 = vmatprep.mubr.f32.mxu0 0.0
    %1532 = vmatmul.mubr.f32.gmra.mrb[0].mxu0 %v1189
    %v1533 = vpop.f32.mrb[0].mxu0
    %v1534 = vadd.f32 0.0, %v1533
    %v1535 = vpop.f32.mrb[0].mxu0
    %1536 = vmatprep.mubr.f32.mxu0 0.0
    %1537 = vmatmul.mubr.f32.gmra.mrb[0].mxu0 %v1190
    %v1538 = vpop.f32.mrb[0].mxu0
    %v1539 = vadd.f32 0.0, %v1538
    %v1540 = vpop.f32.mrb[0].mxu0
    %1541 = vmatprep.mubr.f32.mxu0 0.0
    %1542 = vmatmul.mubr.f32.gmra.mrb[0].mxu0 %v1191
    %v1543 = vpop.f32.mrb[0].mxu0
    %v1544 = vadd.f32 0.0, %v1543
    %v1545 = vpop.f32.mrb[0].mxu0
    %1546 = vdwg.mxu0
    %1547 = vst [vmem:[#allocation3] sm:$0xff] %v1308
    %1548 = vst [vmem:[#allocation3 + $0x8] sm:$0xff] %v1314
    %1549 = vst [vmem:[#allocation3 + $0x10] sm:$0xff] %v1320
    %1550 = vst [vmem:[#allocation3 + $0x18] sm:$0xff] %v1326
    %1551 = vst [vmem:[#allocation3 + $0x20] sm:$0xff] %v1332
    %1552 = vst [vmem:[#allocation3 + $0x28] sm:$0xff] %v1338
    %1553 = vst [vmem:[#allocation3 + $0x30] sm:$0xff] %v1344
    %1554 = vst [vmem:[#allocation3 + $0x38] sm:$0xff] %v1350
    %1555 = vst [vmem:[#allocation3 + $0x40] sm:$0xff] %v1356
    %1556 = vst [vmem:[#allocation3 + $0x48] sm:$0xff] %v1362
    %1557 = vst [vmem:[#allocation3 + $0x50] sm:$0xff] %v1368
    %1558 = vst [vmem:[#allocation3 + $0x58] sm:$0xff] %v1374
    %1559 = vst [vmem:[#allocation3 + $0x60] sm:$0xff] %v1380
    %1560 = vst [vmem:[#allocation3 + $0x68] sm:$0xff] %v1386
    %1561 = vst [vmem:[#allocation3 + $0x70] sm:$0xff] %v1392
    %1562 = vst [vmem:[#allocation3 + $0x78] sm:$0xff] %v1398
    %1563 = vst [vmem:[#allocation3 + $0x80] sm:$0xff] %v1310
    %1564 = vst [vmem:[#allocation3 + $0x88] sm:$0xff] %v1316
    %1565 = vst [vmem:[#allocation3 + $0x90] sm:$0xff] %v1322
    %1566 = vst [vmem:[#allocation3 + $0x98] sm:$0xff] %v1328
    %1567 = vst [vmem:[#allocation3 + $0xa0] sm:$0xff] %v1334
    %1568 = vst [vmem:[#allocation3 + $0xa8] sm:$0xff] %v1340
    %1569 = vst [vmem:[#allocation3 + $0xb0] sm:$0xff] %v1346
    %1570 = vst [vmem:[#allocation3 + $0xb8] sm:$0xff] %v1352
    %1571 = vst [vmem:[#allocation3 + $0xc0] sm:$0xff] %v1358
    %1572 = vst [vmem:[#allocation3 + $0xc8] sm:$0xff] %v1364
    %1573 = vst [vmem:[#allocation3 + $0xd0] sm:$0xff] %v1370
    %1574 = vst [vmem:[#allocation3 + $0xd8] sm:$0xff] %v1376
    %1575 = vst [vmem:[#allocation3 + $0xe0] sm:$0xff] %v1382
    %1576 = vst [vmem:[#allocation3 + $0xe8] sm:$0xff] %v1388
    %1577 = vst [vmem:[#allocation3 + $0xf0] sm:$0xff] %v1394
    %1578 = vst [vmem:[#allocation3 + $0xf8] sm:$0xff] %v1400
    %1579 = vst [vmem:[#allocation3 + $0x100] sm:$0xff] %v1469
    %1580 = vst [vmem:[#allocation3 + $0x108] sm:$0xff] %v1474
    %1581 = vst [vmem:[#allocation3 + $0x110] sm:$0xff] %v1479
    %1582 = vst [vmem:[#allocation3 + $0x118] sm:$0xff] %v1484
    %1583 = vst [vmem:[#allocation3 + $0x120] sm:$0xff] %v1489
    %1584 = vst [vmem:[#allocation3 + $0x128] sm:$0xff] %v1494
    %1585 = vst [vmem:[#allocation3 + $0x130] sm:$0xff] %v1499
    %1586 = vst [vmem:[#allocation3 + $0x138] sm:$0xff] %v1504
    %1587 = vst [vmem:[#allocation3 + $0x140] sm:$0xff] %v1509
    %1588 = vst [vmem:[#allocation3 + $0x148] sm:$0xff] %v1514
    %1589 = vst [vmem:[#allocation3 + $0x150] sm:$0xff] %v1519
    %1590 = vst [vmem:[#allocation3 + $0x158] sm:$0xff] %v1524
    %1591 = vst [vmem:[#allocation3 + $0x160] sm:$0xff] %v1529
    %1592 = vst [vmem:[#allocation3 + $0x168] sm:$0xff] %v1534
    %1593 = vst [vmem:[#allocation3 + $0x170] sm:$0xff] %v1539
    %1594 = vst [vmem:[#allocation3 + $0x178] sm:$0xff] %v1544
    %v1595 = vld [vmem:[#allocation5] sm:$0xff]
    %v1596 = vld [vmem:[#allocation5 + $0x8] sm:$0xff]
    %v1597 = vld [vmem:[#allocation5 + $0x10] sm:$0xff]
    %v1598 = vld [vmem:[#allocation5 + $0x18] sm:$0xff]
    %v1599 = vld [vmem:[#allocation5 + $0x20] sm:$0xff]
    %v1600 = vld [vmem:[#allocation5 + $0x28] sm:$0xff]
    %v1601 = vld [vmem:[#allocation5 + $0x30] sm:$0xff]
    %v1602 = vld [vmem:[#allocation5 + $0x38] sm:$0xff]
    %v1603 = vld [vmem:[#allocation5 + $0x40] sm:$0xff]
    %v1604 = vld [vmem:[#allocation5 + $0x48] sm:$0xff]
    %v1605 = vld [vmem:[#allocation5 + $0x50] sm:$0xff]
    %v1606 = vld [vmem:[#allocation5 + $0x58] sm:$0xff]
    %v1607 = vld [vmem:[#allocation5 + $0x60] sm:$0xff]
    %v1608 = vld [vmem:[#allocation5 + $0x68] sm:$0xff]
    %v1609 = vld [vmem:[#allocation5 + $0x70] sm:$0xff]
    %v1610 = vld [vmem:[#allocation5 + $0x78] sm:$0xff]
    %v1611 = vld [vmem:[#allocation5 + $0x80] sm:$0xff]
    %v1612 = vld [vmem:[#allocation5 + $0x88] sm:$0xff]
    %v1613 = vld [vmem:[#allocation5 + $0x90] sm:$0xff]
    %v1614 = vld [vmem:[#allocation5 + $0x98] sm:$0xff]
    %v1615 = vld [vmem:[#allocation5 + $0xa0] sm:$0xff]
    %v1616 = vld [vmem:[#allocation5 + $0xa8] sm:$0xff]
    %v1617 = vld [vmem:[#allocation5 + $0xb0] sm:$0xff]
    %v1618 = vld [vmem:[#allocation5 + $0xb8] sm:$0xff]
    %v1619 = vld [vmem:[#allocation5 + $0xc0] sm:$0xff]
    %v1620 = vld [vmem:[#allocation5 + $0xc8] sm:$0xff]
    %v1621 = vld [vmem:[#allocation5 + $0xd0] sm:$0xff]
    %v1622 = vld [vmem:[#allocation5 + $0xd8] sm:$0xff]
    %v1623 = vld [vmem:[#allocation5 + $0xe0] sm:$0xff]
    %v1624 = vld [vmem:[#allocation5 + $0xe8] sm:$0xff]
    %v1625 = vld [vmem:[#allocation5 + $0xf0] sm:$0xff]
    %v1626 = vld [vmem:[#allocation5 + $0xf8] sm:$0xff]
    %v1627 = vld [vmem:[#allocation5 + $0x100] sm:$0xff]
    %v1628 = vld [vmem:[#allocation5 + $0x108] sm:$0xff]
    %v1629 = vld [vmem:[#allocation5 + $0x110] sm:$0xff]
    %v1630 = vld [vmem:[#allocation5 + $0x118] sm:$0xff]
    %v1631 = vld [vmem:[#allocation5 + $0x120] sm:$0xff]
    %v1632 = vld [vmem:[#allocation5 + $0x128] sm:$0xff]
    %v1633 = vld [vmem:[#allocation5 + $0x130] sm:$0xff]
    %v1634 = vld [vmem:[#allocation5 + $0x138] sm:$0xff]
    %v1635 = vld [vmem:[#allocation5 + $0x140] sm:$0xff]
    %v1636 = vld [vmem:[#allocation5 + $0x148] sm:$0xff]
    %v1637 = vld [vmem:[#allocation5 + $0x150] sm:$0xff]
    %v1638 = vld [vmem:[#allocation5 + $0x158] sm:$0xff]
    %v1639 = vld [vmem:[#allocation5 + $0x160] sm:$0xff]
    %v1640 = vld [vmem:[#allocation5 + $0x168] sm:$0xff]
    %v1641 = vld [vmem:[#allocation5 + $0x170] sm:$0xff]
    %v1642 = vld [vmem:[#allocation5 + $0x178] sm:$0xff]
    %v1643 = vld [vmem:[#allocation3] sm:$0xff]
    %v1644 = vld [vmem:[#allocation3 + $0x8] sm:$0xff]
    %v1645 = vld [vmem:[#allocation3 + $0x10] sm:$0xff]
    %v1646 = vld [vmem:[#allocation3 + $0x18] sm:$0xff]
    %v1647 = vld [vmem:[#allocation3 + $0x20] sm:$0xff]
    %v1648 = vld [vmem:[#allocation3 + $0x28] sm:$0xff]
    %v1649 = vld [vmem:[#allocation3 + $0x30] sm:$0xff]
    %v1650 = vld [vmem:[#allocation3 + $0x38] sm:$0xff]
    %v1651 = vld [vmem:[#allocation3 + $0x40] sm:$0xff]
    %v1652 = vld [vmem:[#allocation3 + $0x48] sm:$0xff]
    %v1653 = vld [vmem:[#allocation3 + $0x50] sm:$0xff]
    %v1654 = vld [vmem:[#allocation3 + $0x58] sm:$0xff]
    %v1655 = vld [vmem:[#allocation3 + $0x60] sm:$0xff]
    %v1656 = vld [vmem:[#allocation3 + $0x68] sm:$0xff]
    %v1657 = vld [vmem:[#allocation3 + $0x70] sm:$0xff]
    %v1658 = vld [vmem:[#allocation3 + $0x78] sm:$0xff]
    %v1659 = vld [vmem:[#allocation3 + $0x80] sm:$0xff]
    %v1660 = vld [vmem:[#allocation3 + $0x88] sm:$0xff]
    %v1661 = vld [vmem:[#allocation3 + $0x90] sm:$0xff]
    %v1662 = vld [vmem:[#allocation3 + $0x98] sm:$0xff]
    %v1663 = vld [vmem:[#allocation3 + $0xa0] sm:$0xff]
    %v1664 = vld [vmem:[#allocation3 + $0xa8] sm:$0xff]
    %v1665 = vld [vmem:[#allocation3 + $0xb0] sm:$0xff]
    %v1666 = vld [vmem:[#allocation3 + $0xb8] sm:$0xff]
    %v1667 = vld [vmem:[#allocation3 + $0xc0] sm:$0xff]
    %v1668 = vld [vmem:[#allocation3 + $0xc8] sm:$0xff]
    %v1669 = vld [vmem:[#allocation3 + $0xd0] sm:$0xff]
    %v1670 = vld [vmem:[#allocation3 + $0xd8] sm:$0xff]
    %v1671 = vld [vmem:[#allocation3 + $0xe0] sm:$0xff]
    %v1672 = vld [vmem:[#allocation3 + $0xe8] sm:$0xff]
    %v1673 = vld [vmem:[#allocation3 + $0xf0] sm:$0xff]
    %v1674 = vld [vmem:[#allocation3 + $0xf8] sm:$0xff]
    %v1675 = vld [vmem:[#allocation3 + $0x100] sm:$0xff]
    %v1676 = vld [vmem:[#allocation3 + $0x108] sm:$0xff]
    %v1677 = vld [vmem:[#allocation3 + $0x110] sm:$0xff]
    %v1678 = vld [vmem:[#allocation3 + $0x118] sm:$0xff]
    %v1679 = vld [vmem:[#allocation3 + $0x120] sm:$0xff]
    %v1680 = vld [vmem:[#allocation3 + $0x128] sm:$0xff]
    %v1681 = vld [vmem:[#allocation3 + $0x130] sm:$0xff]
    %v1682 = vld [vmem:[#allocation3 + $0x138] sm:$0xff]
    %v1683 = vld [vmem:[#allocation3 + $0x140] sm:$0xff]
    %v1684 = vld [vmem:[#allocation3 + $0x148] sm:$0xff]
    %v1685 = vld [vmem:[#allocation3 + $0x150] sm:$0xff]
    %v1686 = vld [vmem:[#allocation3 + $0x158] sm:$0xff]
    %v1687 = vld [vmem:[#allocation3 + $0x160] sm:$0xff]
    %v1688 = vld [vmem:[#allocation3 + $0x168] sm:$0xff]
    %v1689 = vld [vmem:[#allocation3 + $0x170] sm:$0xff]
    %v1690 = vld [vmem:[#allocation3 + $0x178] sm:$0xff]
    %v1691 = vld [vmem:[#allocation2] sm:$0xff]
    %v1692 = vld [vmem:[#allocation2 + $0x8] sm:$0xff]
    %v1693 = vld [vmem:[#allocation2 + $0x10] sm:$0xff]
    %v1694 = vld [vmem:[#allocation2 + $0x18] sm:$0xff]
    %v1695 = vld [vmem:[#allocation2 + $0x20] sm:$0xff]
    %v1696 = vld [vmem:[#allocation2 + $0x28] sm:$0xff]
    %v1697 = vld [vmem:[#allocation2 + $0x30] sm:$0xff]
    %v1698 = vld [vmem:[#allocation2 + $0x38] sm:$0xff]
    %v1699 = vld [vmem:[#allocation2 + $0x40] sm:$0xff]
    %v1700 = vld [vmem:[#allocation2 + $0x48] sm:$0xff]
    %v1701 = vld [vmem:[#allocation2 + $0x50] sm:$0xff]
    %v1702 = vld [vmem:[#allocation2 + $0x58] sm:$0xff]
    %v1703 = vld [vmem:[#allocation2 + $0x60] sm:$0xff]
    %v1704 = vld [vmem:[#allocation2 + $0x68] sm:$0xff]
    %v1705 = vld [vmem:[#allocation2 + $0x70] sm:$0xff]
    %v1706 = vld [vmem:[#allocation2 + $0x78] sm:$0xff]
    %s1707 = scalar_lea.vmem [#allocation11], 128
    %v1708 = vld [vmem:[%s1707] sm:$0xff]
    %v1709 = vld [vmem:[%s1707 + $0x8] sm:$0xff]
    %v1710 = vld [vmem:[%s1707 + $0x10] sm:$0xff]
    %v1711 = vld [vmem:[%s1707 + $0x18] sm:$0xff]
    %v1712 = vld [vmem:[%s1707 + $0x20] sm:$0xff]
    %v1713 = vld [vmem:[%s1707 + $0x28] sm:$0xff]
    %v1714 = vld [vmem:[%s1707 + $0x30] sm:$0xff]
    %v1715 = vld [vmem:[%s1707 + $0x38] sm:$0xff]
    %v1716 = vld [vmem:[%s1707 + $0x40] sm:$0xff]
    %v1717 = vld [vmem:[%s1707 + $0x48] sm:$0xff]
    %v1718 = vld [vmem:[%s1707 + $0x50] sm:$0xff]
    %v1719 = vld [vmem:[%s1707 + $0x58] sm:$0xff]
    %v1720 = vld [vmem:[%s1707 + $0x60] sm:$0xff]
    %v1721 = vld [vmem:[%s1707 + $0x68] sm:$0xff]
    %v1722 = vld [vmem:[%s1707 + $0x70] sm:$0xff]
    %v1723 = vld [vmem:[%s1707 + $0x78] sm:$0xff]
    %1724 = vmatprep.subr.mxu0 0.0
    %1725 = vmatpush1.msra.mxu0 %v1708
    %1726 = vmatprep.subr.mxu0 0.0
    %1727 = vmatpush1.msra.mxu0 %v1709
    %1728 = vmatprep.subr.mxu0 0.0
    %1729 = vmatpush1.msra.mxu0 %v1710
    %1730 = vmatprep.subr.mxu0 0.0
    %1731 = vmatpush1.msra.mxu0 %v1711
    %1732 = vmatprep.subr.mxu0 0.0
    %1733 = vmatpush1.msra.mxu0 %v1712
    %1734 = vmatprep.subr.mxu0 0.0
    %1735 = vmatpush1.msra.mxu0 %v1713
    %1736 = vmatprep.subr.mxu0 0.0
    %1737 = vmatpush1.msra.mxu0 %v1714
    %1738 = vmatprep.subr.mxu0 0.0
    %1739 = vmatpush1.msra.mxu0 %v1715
    %1740 = vmatprep.subr.mxu0 0.0
    %1741 = vmatpush1.msra.mxu0 %v1716
    %1742 = vmatprep.subr.mxu0 0.0
    %1743 = vmatpush1.msra.mxu0 %v1717
    %1744 = vmatprep.subr.mxu0 0.0
    %1745 = vmatpush1.msra.mxu0 %v1718
    %1746 = vmatprep.subr.mxu0 0.0
    %1747 = vmatpush1.msra.mxu0 %v1719
    %1748 = vmatprep.subr.mxu0 0.0
    %1749 = vmatpush1.msra.mxu0 %v1720
    %1750 = vmatprep.subr.mxu0 0.0
    %1751 = vmatpush1.msra.mxu0 %v1721
    %1752 = vmatprep.subr.mxu0 0.0
    %1753 = vmatpush1.msra.mxu0 %v1722
    %1754 = vmatprep.subr.mxu0 0.0
    %1755 = vmatpush1.msra.mxu0 %v1723
    %1756 = vmatprep.subr.mxu0 0.0
    %1757 = vmatpush1.msra.mxu0 0.0
    %1758 = vmatprep.subr.mxu0 0.0
    %1759 = vmatpush1.msra.mxu0 0.0
    %1760 = vmatprep.subr.mxu0 0.0
    %1761 = vmatpush1.msra.mxu0 0.0
    %1762 = vmatprep.subr.mxu0 0.0
    %1763 = vmatpush1.msra.mxu0 0.0
    %1764 = vmatprep.subr.mxu0 0.0
    %1765 = vmatpush1.msra.mxu0 0.0
    %1766 = vmatprep.subr.mxu0 0.0
    %1767 = vmatpush1.msra.mxu0 0.0
    %1768 = vmatprep.subr.mxu0 0.0
    %1769 = vmatpush1.msra.mxu0 0.0
    %1770 = vmatprep.subr.mxu0 0.0
    %1771 = vmatpush1.msra.mxu0 0.0
    %1772 = vmatprep.subr.mxu0 0.0
    %1773 = vmatpush1.msra.mxu0 0.0
    %1774 = vmatprep.subr.mxu0 0.0
    %1775 = vmatpush1.msra.mxu0 0.0
    %1776 = vmatprep.subr.mxu0 0.0
    %1777 = vmatpush1.msra.mxu0 0.0
    %1778 = vmatprep.subr.mxu0 0.0
    %1779 = vmatpush1.msra.mxu0 0.0
    %1780 = vmatprep.subr.mxu0 0.0
    %1781 = vmatpush1.msra.mxu0 0.0
    %1782 = vmatprep.subr.mxu0 0.0
    %1783 = vmatpush1.msra.mxu0 0.0
    %1784 = vmatprep.subr.mxu0 0.0
    %1785 = vmatpush1.msra.mxu0 0.0
    %1786 = vmatprep.subr.mxu0 0.0
    %1787 = vmatpush1.msra.mxu0 0.0
    %1788 = vmatprep.mubr.f32.mxu0 0.0
    %1789 = vmatmul.mubr.f32.gmra.mrb[0].mxu0 %v1691
    %v1790 = vpop.f32.mrb[0].mxu0
    %v1791 = vadd.f32 0.0, %v1790
    %v1792 = vpop.f32.mrb[0].mxu0
    %1793 = vmatprep.mubr.f32.mxu0 0.0
    %1794 = vmatmul.mubr.f32.gmra.mrb[0].mxu0 %v1692
    %v1795 = vpop.f32.mrb[0].mxu0
    %v1796 = vadd.f32 0.0, %v1795
    %v1797 = vpop.f32.mrb[0].mxu0
    %1798 = vmatprep.mubr.f32.mxu0 0.0
    %1799 = vmatmul.mubr.f32.gmra.mrb[0].mxu0 %v1693
    %v1800 = vpop.f32.mrb[0].mxu0
    %v1801 = vadd.f32 0.0, %v1800
    %v1802 = vpop.f32.mrb[0].mxu0
    %1803 = vmatprep.mubr.f32.mxu0 0.0
    %1804 = vmatmul.mubr.f32.gmra.mrb[0].mxu0 %v1694
    %v1805 = vpop.f32.mrb[0].mxu0
    %v1806 = vadd.f32 0.0, %v1805
    %v1807 = vpop.f32.mrb[0].mxu0
    %1808 = vmatprep.mubr.f32.mxu0 0.0
    %1809 = vmatmul.mubr.f32.gmra.mrb[0].mxu0 %v1695
    %v1810 = vpop.f32.mrb[0].mxu0
    %v1811 = vadd.f32 0.0, %v1810
    %v1812 = vpop.f32.mrb[0].mxu0
    %1813 = vmatprep.mubr.f32.mxu0 0.0
    %1814 = vmatmul.mubr.f32.gmra.mrb[0].mxu0 %v1696
    %v1815 = vpop.f32.mrb[0].mxu0
    %v1816 = vadd.f32 0.0, %v1815
    %v1817 = vpop.f32.mrb[0].mxu0
    %1818 = vmatprep.mubr.f32.mxu0 0.0
    %1819 = vmatmul.mubr.f32.gmra.mrb[0].mxu0 %v1697
    %v1820 = vpop.f32.mrb[0].mxu0
    %v1821 = vadd.f32 0.0, %v1820
    %v1822 = vpop.f32.mrb[0].mxu0
    %1823 = vmatprep.mubr.f32.mxu0 0.0
    %1824 = vmatmul.mubr.f32.gmra.mrb[0].mxu0 %v1698
    %v1825 = vpop.f32.mrb[0].mxu0
    %v1826 = vadd.f32 0.0, %v1825
    %v1827 = vpop.f32.mrb[0].mxu0
    %1828 = vmatprep.mubr.f32.mxu0 0.0
    %1829 = vmatmul.mubr.f32.gmra.mrb[0].mxu0 %v1699
    %v1830 = vpop.f32.mrb[0].mxu0
    %v1831 = vadd.f32 0.0, %v1830
    %v1832 = vpop.f32.mrb[0].mxu0
    %1833 = vmatprep.mubr.f32.mxu0 0.0
    %1834 = vmatmul.mubr.f32.gmra.mrb[0].mxu0 %v1700
    %v1835 = vpop.f32.mrb[0].mxu0
    %v1836 = vadd.f32 0.0, %v1835
    %v1837 = vpop.f32.mrb[0].mxu0
    %1838 = vmatprep.mubr.f32.mxu0 0.0
    %1839 = vmatmul.mubr.f32.gmra.mrb[0].mxu0 %v1701
    %v1840 = vpop.f32.mrb[0].mxu0
    %v1841 = vadd.f32 0.0, %v1840
    %v1842 = vpop.f32.mrb[0].mxu0
    %1843 = vmatprep.mubr.f32.mxu0 0.0
    %1844 = vmatmul.mubr.f32.gmra.mrb[0].mxu0 %v1702
    %v1845 = vpop.f32.mrb[0].mxu0
    %v1846 = vadd.f32 0.0, %v1845
    %v1847 = vpop.f32.mrb[0].mxu0
    %1848 = vmatprep.mubr.f32.mxu0 0.0
    %1849 = vmatmul.mubr.f32.gmra.mrb[0].mxu0 %v1703
    %v1850 = vpop.f32.mrb[0].mxu0
    %v1851 = vadd.f32 0.0, %v1850
    %v1852 = vpop.f32.mrb[0].mxu0
    %1853 = vmatprep.mubr.f32.mxu0 0.0
    %1854 = vmatmul.mubr.f32.gmra.mrb[0].mxu0 %v1704
    %v1855 = vpop.f32.mrb[0].mxu0
    %v1856 = vadd.f32 0.0, %v1855
    %v1857 = vpop.f32.mrb[0].mxu0
    %1858 = vmatprep.mubr.f32.mxu0 0.0
    %1859 = vmatmul.mubr.f32.gmra.mrb[0].mxu0 %v1705
    %v1860 = vpop.f32.mrb[0].mxu0
    %v1861 = vadd.f32 0.0, %v1860
    %v1862 = vpop.f32.mrb[0].mxu0
    %1863 = vmatprep.mubr.f32.mxu0 0.0
    %1864 = vmatmul.mubr.f32.gmra.mrb[0].mxu0 %v1706
    %v1865 = vpop.f32.mrb[0].mxu0
    %v1866 = vadd.f32 0.0, %v1865
    %v1867 = vpop.f32.mrb[0].mxu0
    %1868 = vdwg.mxu0
    %1869 = vmatprep.subr.mxu0 0.0
    %1870 = vmatpush1.msra.mxu0 %v1643
    %1871 = vmatprep.subr.mxu0 0.0
    %1872 = vmatpush1.msra.mxu0 %v1644
    %1873 = vmatprep.subr.mxu0 0.0
    %1874 = vmatpush1.msra.mxu0 %v1645
    %1875 = vmatprep.subr.mxu0 0.0
    %1876 = vmatpush1.msra.mxu0 %v1646
    %1877 = vmatprep.subr.mxu0 0.0
    %1878 = vmatpush1.msra.mxu0 %v1647
    %1879 = vmatprep.subr.mxu0 0.0
    %1880 = vmatpush1.msra.mxu0 %v1648
    %1881 = vmatprep.subr.mxu0 0.0
    %1882 = vmatpush1.msra.mxu0 %v1649
    %1883 = vmatprep.subr.mxu0 0.0
    %1884 = vmatpush1.msra.mxu0 %v1650
    %1885 = vmatprep.subr.mxu0 0.0
    %1886 = vmatpush1.msra.mxu0 %v1651
    %1887 = vmatprep.subr.mxu0 0.0
    %1888 = vmatpush1.msra.mxu0 %v1652
    %1889 = vmatprep.subr.mxu0 0.0
    %1890 = vmatpush1.msra.mxu0 %v1653
    %1891 = vmatprep.subr.mxu0 0.0
    %1892 = vmatpush1.msra.mxu0 %v1654
    %1893 = vmatprep.subr.mxu0 0.0
    %1894 = vmatpush1.msra.mxu0 %v1655
    %1895 = vmatprep.subr.mxu0 0.0
    %1896 = vmatpush1.msra.mxu0 %v1656
    %1897 = vmatprep.subr.mxu0 0.0
    %1898 = vmatpush1.msra.mxu0 %v1657
    %1899 = vmatprep.subr.mxu0 0.0
    %1900 = vmatpush1.msra.mxu0 %v1658
    %1901 = vmatprep.subr.mxu0 0.0
    %1902 = vmatpush1.msra.mxu0 %v1659
    %1903 = vmatprep.subr.mxu0 0.0
    %1904 = vmatpush1.msra.mxu0 %v1660
    %1905 = vmatprep.subr.mxu0 0.0
    %1906 = vmatpush1.msra.mxu0 %v1661
    %1907 = vmatprep.subr.mxu0 0.0
    %1908 = vmatpush1.msra.mxu0 %v1662
    %1909 = vmatprep.subr.mxu0 0.0
    %1910 = vmatpush1.msra.mxu0 %v1663
    %1911 = vmatprep.subr.mxu0 0.0
    %1912 = vmatpush1.msra.mxu0 %v1664
    %1913 = vmatprep.subr.mxu0 0.0
    %1914 = vmatpush1.msra.mxu0 %v1665
    %1915 = vmatprep.subr.mxu0 0.0
    %1916 = vmatpush1.msra.mxu0 %v1666
    %1917 = vmatprep.subr.mxu0 0.0
    %1918 = vmatpush1.msra.mxu0 %v1667
    %1919 = vmatprep.subr.mxu0 0.0
    %1920 = vmatpush1.msra.mxu0 %v1668
    %1921 = vmatprep.subr.mxu0 0.0
    %1922 = vmatpush1.msra.mxu0 %v1669
    %1923 = vmatprep.subr.mxu0 0.0
    %1924 = vmatpush1.msra.mxu0 %v1670
    %1925 = vmatprep.subr.mxu0 0.0
    %1926 = vmatpush1.msra.mxu0 %v1671
    %1927 = vmatprep.subr.mxu0 0.0
    %1928 = vmatpush1.msra.mxu0 %v1672
    %1929 = vmatprep.subr.mxu0 0.0
    %1930 = vmatpush1.msra.mxu0 %v1673
    %1931 = vmatprep.subr.mxu0 0.0
    %1932 = vmatpush1.msra.mxu0 %v1674
    %1933 = vmatprep.mubr.f32.mxu0 %v1596
    %1934 = vmatmul.mubr.f32.gmra.mrb[0].mxu0 %v1595
    %v1935 = vpop.f32.mrb[0].mxu0
    %v1936 = vadd.f32 %v1791, %v1935
    %v1937 = vpop.f32.mrb[0].mxu0
    %1938 = vmatprep.mubr.f32.mxu0 %v1599
    %1939 = vmatmul.mubr.f32.gmra.mrb[0].mxu0 %v1598
    %v1940 = vpop.f32.mrb[0].mxu0
    %v1941 = vadd.f32 %v1796, %v1940
    %v1942 = vpop.f32.mrb[0].mxu0
    %1943 = vmatprep.mubr.f32.mxu0 %v1602
    %1944 = vmatmul.mubr.f32.gmra.mrb[0].mxu0 %v1601
    %v1945 = vpop.f32.mrb[0].mxu0
    %v1946 = vadd.f32 %v1801, %v1945
    %v1947 = vpop.f32.mrb[0].mxu0
    %1948 = vmatprep.mubr.f32.mxu0 %v1605
    %1949 = vmatmul.mubr.f32.gmra.mrb[0].mxu0 %v1604
    %v1950 = vpop.f32.mrb[0].mxu0
    %v1951 = vadd.f32 %v1806, %v1950
    %v1952 = vpop.f32.mrb[0].mxu0
    %1953 = vmatprep.mubr.f32.mxu0 %v1608
    %1954 = vmatmul.mubr.f32.gmra.mrb[0].mxu0 %v1607
    %v1955 = vpop.f32.mrb[0].mxu0
    %v1956 = vadd.f32 %v1811, %v1955
    %v1957 = vpop.f32.mrb[0].mxu0
    %1958 = vmatprep.mubr.f32.mxu0 %v1611
    %1959 = vmatmul.mubr.f32.gmra.mrb[0].mxu0 %v1610
    %v1960 = vpop.f32.mrb[0].mxu0
    %v1961 = vadd.f32 %v1816, %v1960
    %v1962 = vpop.f32.mrb[0].mxu0
    %1963 = vmatprep.mubr.f32.mxu0 %v1614
    %1964 = vmatmul.mubr.f32.gmra.mrb[0].mxu0 %v1613
    %v1965 = vpop.f32.mrb[0].mxu0
    %v1966 = vadd.f32 %v1821, %v1965
    %v1967 = vpop.f32.mrb[0].mxu0
    %1968 = vmatprep.mubr.f32.mxu0 %v1617
    %1969 = vmatmul.mubr.f32.gmra.mrb[0].mxu0 %v1616
    %v1970 = vpop.f32.mrb[0].mxu0
    %v1971 = vadd.f32 %v1826, %v1970
    %v1972 = vpop.f32.mrb[0].mxu0
    %1973 = vmatprep.mubr.f32.mxu0 %v1620
    %1974 = vmatmul.mubr.f32.gmra.mrb[0].mxu0 %v1619
    %v1975 = vpop.f32.mrb[0].mxu0
    %v1976 = vadd.f32 %v1831, %v1975
    %v1977 = vpop.f32.mrb[0].mxu0
    %1978 = vmatprep.mubr.f32.mxu0 %v1623
    %1979 = vmatmul.mubr.f32.gmra.mrb[0].mxu0 %v1622
    %v1980 = vpop.f32.mrb[0].mxu0
    %v1981 = vadd.f32 %v1836, %v1980
    %v1982 = vpop.f32.mrb[0].mxu0
    %1983 = vmatprep.mubr.f32.mxu0 %v1626
    %1984 = vmatmul.mubr.f32.gmra.mrb[0].mxu0 %v1625
    %v1985 = vpop.f32.mrb[0].mxu0
    %v1986 = vadd.f32 %v1841, %v1985
    %v1987 = vpop.f32.mrb[0].mxu0
    %1988 = vmatprep.mubr.f32.mxu0 %v1629
    %1989 = vmatmul.mubr.f32.gmra.mrb[0].mxu0 %v1628
    %v1990 = vpop.f32.mrb[0].mxu0
    %v1991 = vadd.f32 %v1846, %v1990
    %v1992 = vpop.f32.mrb[0].mxu0
    %1993 = vmatprep.mubr.f32.mxu0 %v1632
    %1994 = vmatmul.mubr.f32.gmra.mrb[0].mxu0 %v1631
    %v1995 = vpop.f32.mrb[0].mxu0
    %v1996 = vadd.f32 %v1851, %v1995
    %v1997 = vpop.f32.mrb[0].mxu0
    %1998 = vmatprep.mubr.f32.mxu0 %v1635
    %1999 = vmatmul.mubr.f32.gmra.mrb[0].mxu0 %v1634
    %v2000 = vpop.f32.mrb[0].mxu0
    %v2001 = vadd.f32 %v1856, %v2000
    %v2002 = vpop.f32.mrb[0].mxu0
    %2003 = vmatprep.mubr.f32.mxu0 %v1638
    %2004 = vmatmul.mubr.f32.gmra.mrb[0].mxu0 %v1637
    %v2005 = vpop.f32.mrb[0].mxu0
    %v2006 = vadd.f32 %v1861, %v2005
    %v2007 = vpop.f32.mrb[0].mxu0
    %2008 = vmatprep.mubr.f32.mxu0 %v1641
    %2009 = vmatmul.mubr.f32.gmra.mrb[0].mxu0 %v1640
    %v2010 = vpop.f32.mrb[0].mxu0
    %v2011 = vadd.f32 %v1866, %v2010
    %v2012 = vpop.f32.mrb[0].mxu0
    %2013 = vdwg.mxu0
    %2014 = vmatprep.subr.mxu0 0.0
    %2015 = vmatpush1.msra.mxu0 %v1675
    %2016 = vmatprep.subr.mxu0 0.0
    %2017 = vmatpush1.msra.mxu0 %v1676
    %2018 = vmatprep.subr.mxu0 0.0
    %2019 = vmatpush1.msra.mxu0 %v1677
    %2020 = vmatprep.subr.mxu0 0.0
    %2021 = vmatpush1.msra.mxu0 %v1678
    %2022 = vmatprep.subr.mxu0 0.0
    %2023 = vmatpush1.msra.mxu0 %v1679
    %2024 = vmatprep.subr.mxu0 0.0
    %2025 = vmatpush1.msra.mxu0 %v1680
    %2026 = vmatprep.subr.mxu0 0.0
    %2027 = vmatpush1.msra.mxu0 %v1681
    %2028 = vmatprep.subr.mxu0 0.0
    %2029 = vmatpush1.msra.mxu0 %v1682
    %2030 = vmatprep.subr.mxu0 0.0
    %2031 = vmatpush1.msra.mxu0 %v1683
    %2032 = vmatprep.subr.mxu0 0.0
    %2033 = vmatpush1.msra.mxu0 %v1684
    %2034 = vmatprep.subr.mxu0 0.0
    %2035 = vmatpush1.msra.mxu0 %v1685
    %2036 = vmatprep.subr.mxu0 0.0
    %2037 = vmatpush1.msra.mxu0 %v1686
    %2038 = vmatprep.subr.mxu0 0.0
    %2039 = vmatpush1.msra.mxu0 %v1687
    %2040 = vmatprep.subr.mxu0 0.0
    %2041 = vmatpush1.msra.mxu0 %v1688
    %2042 = vmatprep.subr.mxu0 0.0
    %2043 = vmatpush1.msra.mxu0 %v1689
    %2044 = vmatprep.subr.mxu0 0.0
    %2045 = vmatpush1.msra.mxu0 %v1690
    %2046 = vmatprep.subr.mxu0 0.0
    %2047 = vmatpush1.msra.mxu0 0.0
    %2048 = vmatprep.subr.mxu0 0.0
    %2049 = vmatpush1.msra.mxu0 0.0
    %2050 = vmatprep.subr.mxu0 0.0
    %2051 = vmatpush1.msra.mxu0 0.0
    %2052 = vmatprep.subr.mxu0 0.0
    %2053 = vmatpush1.msra.mxu0 0.0
    %2054 = vmatprep.subr.mxu0 0.0
    %2055 = vmatpush1.msra.mxu0 0.0
    %2056 = vmatprep.subr.mxu0 0.0
    %2057 = vmatpush1.msra.mxu0 0.0
    %2058 = vmatprep.subr.mxu0 0.0
    %2059 = vmatpush1.msra.mxu0 0.0
    %2060 = vmatprep.subr.mxu0 0.0
    %2061 = vmatpush1.msra.mxu0 0.0
    %2062 = vmatprep.subr.mxu0 0.0
    %2063 = vmatpush1.msra.mxu0 0.0
    %2064 = vmatprep.subr.mxu0 0.0
    %2065 = vmatpush1.msra.mxu0 0.0
    %2066 = vmatprep.subr.mxu0 0.0
    %2067 = vmatpush1.msra.mxu0 0.0
    %2068 = vmatprep.subr.mxu0 0.0
    %2069 = vmatpush1.msra.mxu0 0.0
    %2070 = vmatprep.subr.mxu0 0.0
    %2071 = vmatpush1.msra.mxu0 0.0
    %2072 = vmatprep.subr.mxu0 0.0
    %2073 = vmatpush1.msra.mxu0 0.0
    %2074 = vmatprep.subr.mxu0 0.0
    %2075 = vmatpush1.msra.mxu0 0.0
    %2076 = vmatprep.subr.mxu0 0.0
    %2077 = vmatpush1.msra.mxu0 0.0
    %2078 = vmatprep.mubr.f32.mxu0 0.0
    %2079 = vmatmul.mubr.f32.gmra.mrb[0].mxu0 %v1597
    %v2080 = vpop.f32.mrb[0].mxu0
    %v2081 = vadd.f32 %v1936, %v2080
    %v2082 = vpop.f32.mrb[0].mxu0
    %2083 = vmatprep.mubr.f32.mxu0 0.0
    %2084 = vmatmul.mubr.f32.gmra.mrb[0].mxu0 %v1600
    %v2085 = vpop.f32.mrb[0].mxu0
    %v2086 = vadd.f32 %v1941, %v2085
    %v2087 = vpop.f32.mrb[0].mxu0
    %2088 = vmatprep.mubr.f32.mxu0 0.0
    %2089 = vmatmul.mubr.f32.gmra.mrb[0].mxu0 %v1603
    %v2090 = vpop.f32.mrb[0].mxu0
    %v2091 = vadd.f32 %v1946, %v2090
    %v2092 = vpop.f32.mrb[0].mxu0
    %2093 = vmatprep.mubr.f32.mxu0 0.0
    %2094 = vmatmul.mubr.f32.gmra.mrb[0].mxu0 %v1606
    %v2095 = vpop.f32.mrb[0].mxu0
    %v2096 = vadd.f32 %v1951, %v2095
    %v2097 = vpop.f32.mrb[0].mxu0
    %2098 = vmatprep.mubr.f32.mxu0 0.0
    %2099 = vmatmul.mubr.f32.gmra.mrb[0].mxu0 %v1609
    %v2100 = vpop.f32.mrb[0].mxu0
    %v2101 = vadd.f32 %v1956, %v2100
    %v2102 = vpop.f32.mrb[0].mxu0
    %2103 = vmatprep.mubr.f32.mxu0 0.0
    %2104 = vmatmul.mubr.f32.gmra.mrb[0].mxu0 %v1612
    %v2105 = vpop.f32.mrb[0].mxu0
    %v2106 = vadd.f32 %v1961, %v2105
    %v2107 = vpop.f32.mrb[0].mxu0
    %2108 = vmatprep.mubr.f32.mxu0 0.0
    %2109 = vmatmul.mubr.f32.gmra.mrb[0].mxu0 %v1615
    %v2110 = vpop.f32.mrb[0].mxu0
    %v2111 = vadd.f32 %v1966, %v2110
    %v2112 = vpop.f32.mrb[0].mxu0
    %2113 = vmatprep.mubr.f32.mxu0 0.0
    %2114 = vmatmul.mubr.f32.gmra.mrb[0].mxu0 %v1618
    %v2115 = vpop.f32.mrb[0].mxu0
    %v2116 = vadd.f32 %v1971, %v2115
    %v2117 = vpop.f32.mrb[0].mxu0
    %2118 = vmatprep.mubr.f32.mxu0 0.0
    %2119 = vmatmul.mubr.f32.gmra.mrb[0].mxu0 %v1621
    %v2120 = vpop.f32.mrb[0].mxu0
    %v2121 = vadd.f32 %v1976, %v2120
    %v2122 = vpop.f32.mrb[0].mxu0
    %2123 = vmatprep.mubr.f32.mxu0 0.0
    %2124 = vmatmul.mubr.f32.gmra.mrb[0].mxu0 %v1624
    %v2125 = vpop.f32.mrb[0].mxu0
    %v2126 = vadd.f32 %v1981, %v2125
    %v2127 = vpop.f32.mrb[0].mxu0
    %2128 = vmatprep.mubr.f32.mxu0 0.0
    %2129 = vmatmul.mubr.f32.gmra.mrb[0].mxu0 %v1627
    %v2130 = vpop.f32.mrb[0].mxu0
    %v2131 = vadd.f32 %v1986, %v2130
    %v2132 = vpop.f32.mrb[0].mxu0
    %2133 = vmatprep.mubr.f32.mxu0 0.0
    %2134 = vmatmul.mubr.f32.gmra.mrb[0].mxu0 %v1630
    %v2135 = vpop.f32.mrb[0].mxu0
    %v2136 = vadd.f32 %v1991, %v2135
    %v2137 = vpop.f32.mrb[0].mxu0
    %2138 = vmatprep.mubr.f32.mxu0 0.0
    %2139 = vmatmul.mubr.f32.gmra.mrb[0].mxu0 %v1633
    %v2140 = vpop.f32.mrb[0].mxu0
    %v2141 = vadd.f32 %v1996, %v2140
    %v2142 = vpop.f32.mrb[0].mxu0
    %2143 = vmatprep.mubr.f32.mxu0 0.0
    %2144 = vmatmul.mubr.f32.gmra.mrb[0].mxu0 %v1636
    %v2145 = vpop.f32.mrb[0].mxu0
    %v2146 = vadd.f32 %v2001, %v2145
    %v2147 = vpop.f32.mrb[0].mxu0
    %2148 = vmatprep.mubr.f32.mxu0 0.0
    %2149 = vmatmul.mubr.f32.gmra.mrb[0].mxu0 %v1639
    %v2150 = vpop.f32.mrb[0].mxu0
    %v2151 = vadd.f32 %v2006, %v2150
    %v2152 = vpop.f32.mrb[0].mxu0
    %2153 = vmatprep.mubr.f32.mxu0 0.0
    %2154 = vmatmul.mubr.f32.gmra.mrb[0].mxu0 %v1642
    %v2155 = vpop.f32.mrb[0].mxu0
    %v2156 = vadd.f32 %v2011, %v2155
    %v2157 = vpop.f32.mrb[0].mxu0
    %2158 = vdwg.mxu0
    %s2159 = scalar_lea.vmem %s4, 1
    %v2160 = vld [vmem:[%s2159] sm:$0x1]
    %v2162 = vlaneseq
    %v2163 = vshrl.u32 %v2162, 7
    %v2164 = vsub.s32 0, %v2163
    %v2165 = vrot.slane %v2160, %v2164
    %v2167 = vadd.f32 %v2081, %v2165
    %v2168 = vadd.f32 %v2086, %v2165
    %v2169 = vadd.f32 %v2091, %v2165
    %v2170 = vadd.f32 %v2096, %v2165
    %v2171 = vadd.f32 %v2101, %v2165
    %v2172 = vadd.f32 %v2106, %v2165
    %v2173 = vadd.f32 %v2111, %v2165
    %v2174 = vadd.f32 %v2116, %v2165
    %v2175 = vadd.f32 %v2121, %v2165
    %v2176 = vadd.f32 %v2126, %v2165
    %v2177 = vadd.f32 %v2131, %v2165
    %v2178 = vadd.f32 %v2136, %v2165
    %v2179 = vadd.f32 %v2141, %v2165
    %v2180 = vadd.f32 %v2146, %v2165
    %v2181 = vadd.f32 %v2151, %v2165
    %v2182 = vadd.f32 %v2156, %v2165
    %2183 = vst [vmem:[#allocation4] sm:$0xff] %v2167
    %2184 = vst [vmem:[#allocation4 + $0x8] sm:$0xff] %v2168
    %2185 = vst [vmem:[#allocation4 + $0x10] sm:$0xff] %v2169
    %2186 = vst [vmem:[#allocation4 + $0x18] sm:$0xff] %v2170
    %2187 = vst [vmem:[#allocation4 + $0x20] sm:$0xff] %v2171
    %2188 = vst [vmem:[#allocation4 + $0x28] sm:$0xff] %v2172
    %2189 = vst [vmem:[#allocation4 + $0x30] sm:$0xff] %v2173
    %2190 = vst [vmem:[#allocation4 + $0x38] sm:$0xff] %v2174
    %2191 = vst [vmem:[#allocation4 + $0x40] sm:$0xff] %v2175
    %2192 = vst [vmem:[#allocation4 + $0x48] sm:$0xff] %v2176
    %2193 = vst [vmem:[#allocation4 + $0x50] sm:$0xff] %v2177
    %2194 = vst [vmem:[#allocation4 + $0x58] sm:$0xff] %v2178
    %2195 = vst [vmem:[#allocation4 + $0x60] sm:$0xff] %v2179
    %2196 = vst [vmem:[#allocation4 + $0x68] sm:$0xff] %v2180
    %2197 = vst [vmem:[#allocation4 + $0x70] sm:$0xff] %v2181
    %2198 = vst [vmem:[#allocation4 + $0x78] sm:$0xff] %v2182
    %v2199 = vld [vmem:[#allocation4] sm:$0xff]
    %v2200 = vld [vmem:[#allocation4 + $0x8] sm:$0xff]
    %v2201 = vld [vmem:[#allocation4 + $0x10] sm:$0xff]
    %v2202 = vld [vmem:[#allocation4 + $0x18] sm:$0xff]
    %v2203 = vld [vmem:[#allocation4 + $0x20] sm:$0xff]
    %v2204 = vld [vmem:[#allocation4 + $0x28] sm:$0xff]
    %v2205 = vld [vmem:[#allocation4 + $0x30] sm:$0xff]
    %v2206 = vld [vmem:[#allocation4 + $0x38] sm:$0xff]
    %v2207 = vld [vmem:[#allocation4 + $0x40] sm:$0xff]
    %v2208 = vld [vmem:[#allocation4 + $0x48] sm:$0xff]
    %v2209 = vld [vmem:[#allocation4 + $0x50] sm:$0xff]
    %v2210 = vld [vmem:[#allocation4 + $0x58] sm:$0xff]
    %v2211 = vld [vmem:[#allocation4 + $0x60] sm:$0xff]
    %v2212 = vld [vmem:[#allocation4 + $0x68] sm:$0xff]
    %v2213 = vld [vmem:[#allocation4 + $0x70] sm:$0xff]
    %v2214 = vld [vmem:[#allocation4 + $0x78] sm:$0xff]
    %v2215 = vmax.f32 %v2199, 0.0
    %v2216 = vmax.f32 %v2200, 0.0
    %v2217 = vmax.f32 %v2201, 0.0
    %v2218 = vmax.f32 %v2202, 0.0
    %v2219 = vmax.f32 %v2203, 0.0
    %v2220 = vmax.f32 %v2204, 0.0
    %v2221 = vmax.f32 %v2205, 0.0
    %v2222 = vmax.f32 %v2206, 0.0
    %v2223 = vmax.f32 %v2207, 0.0
    %v2224 = vmax.f32 %v2208, 0.0
    %v2225 = vmax.f32 %v2209, 0.0
    %v2226 = vmax.f32 %v2210, 0.0
    %v2227 = vmax.f32 %v2211, 0.0
    %v2228 = vmax.f32 %v2212, 0.0
    %v2229 = vmax.f32 %v2213, 0.0
    %v2230 = vmax.f32 %v2214, 0.0
    %2231 = vst [vmem:[#allocation2] sm:$0xff] %v2215
    %2232 = vst [vmem:[#allocation2 + $0x8] sm:$0xff] %v2216
    %2233 = vst [vmem:[#allocation2 + $0x10] sm:$0xff] %v2217
    %2234 = vst [vmem:[#allocation2 + $0x18] sm:$0xff] %v2218
    %2235 = vst [vmem:[#allocation2 + $0x20] sm:$0xff] %v2219
    %2236 = vst [vmem:[#allocation2 + $0x28] sm:$0xff] %v2220
    %2237 = vst [vmem:[#allocation2 + $0x30] sm:$0xff] %v2221
    %2238 = vst [vmem:[#allocation2 + $0x38] sm:$0xff] %v2222
    %2239 = vst [vmem:[#allocation2 + $0x40] sm:$0xff] %v2223
    %2240 = vst [vmem:[#allocation2 + $0x48] sm:$0xff] %v2224
    %2241 = vst [vmem:[#allocation2 + $0x50] sm:$0xff] %v2225
    %2242 = vst [vmem:[#allocation2 + $0x58] sm:$0xff] %v2226
    %2243 = vst [vmem:[#allocation2 + $0x60] sm:$0xff] %v2227
    %2244 = vst [vmem:[#allocation2 + $0x68] sm:$0xff] %v2228
    %2245 = vst [vmem:[#allocation2 + $0x70] sm:$0xff] %v2229
    %2246 = vst [vmem:[#allocation2 + $0x78] sm:$0xff] %v2230
    %v2247 = vld [vmem:[#allocation2] sm:$0xff]
    %v2248 = vld [vmem:[#allocation2 + $0x8] sm:$0xff]
    %v2249 = vld [vmem:[#allocation2 + $0x10] sm:$0xff]
    %v2250 = vld [vmem:[#allocation2 + $0x18] sm:$0xff]
    %v2251 = vld [vmem:[#allocation2 + $0x20] sm:$0xff]
    %v2252 = vld [vmem:[#allocation2 + $0x28] sm:$0xff]
    %v2253 = vld [vmem:[#allocation2 + $0x30] sm:$0xff]
    %v2254 = vld [vmem:[#allocation2 + $0x38] sm:$0xff]
    %v2255 = vld [vmem:[#allocation2 + $0x40] sm:$0xff]
    %v2256 = vld [vmem:[#allocation2 + $0x48] sm:$0xff]
    %v2257 = vld [vmem:[#allocation2 + $0x50] sm:$0xff]
    %v2258 = vld [vmem:[#allocation2 + $0x58] sm:$0xff]
    %v2259 = vld [vmem:[#allocation2 + $0x60] sm:$0xff]
    %v2260 = vld [vmem:[#allocation2 + $0x68] sm:$0xff]
    %v2261 = vld [vmem:[#allocation2 + $0x70] sm:$0xff]
    %v2262 = vld [vmem:[#allocation2 + $0x78] sm:$0xff]
    %s2263 = scalar_lea.vmem [#allocation10], 768
    %v2264 = vld [vmem:[%s2263] sm:$0xff]
    %v2265 = vld [vmem:[%s2263 + $0x8] sm:$0xff]
    %v2266 = vld [vmem:[%s2263 + $0x10] sm:$0xff]
    %v2267 = vld [vmem:[%s2263 + $0x18] sm:$0xff]
    %v2268 = vld [vmem:[%s2263 + $0x20] sm:$0xff]
    %v2269 = vld [vmem:[%s2263 + $0x28] sm:$0xff]
    %v2270 = vld [vmem:[%s2263 + $0x30] sm:$0xff]
    %v2271 = vld [vmem:[%s2263 + $0x38] sm:$0xff]
    %v2272 = vld [vmem:[%s2263 + $0x40] sm:$0xff]
    %v2273 = vld [vmem:[%s2263 + $0x48] sm:$0xff]
    %v2274 = vld [vmem:[%s2263 + $0x50] sm:$0xff]
    %v2275 = vld [vmem:[%s2263 + $0x58] sm:$0xff]
    %v2276 = vld [vmem:[%s2263 + $0x60] sm:$0xff]
    %v2277 = vld [vmem:[%s2263 + $0x68] sm:$0xff]
    %v2278 = vld [vmem:[%s2263 + $0x70] sm:$0xff]
    %v2279 = vld [vmem:[%s2263 + $0x78] sm:$0xff]
    %v2280 = vld [vmem:[%s2263 + $0x80] sm:$0xff]
    %v2281 = vld [vmem:[%s2263 + $0x88] sm:$0xff]
    %v2282 = vld [vmem:[%s2263 + $0x90] sm:$0xff]
    %v2283 = vld [vmem:[%s2263 + $0x98] sm:$0xff]
    %v2284 = vld [vmem:[%s2263 + $0xa0] sm:$0xff]
    %v2285 = vld [vmem:[%s2263 + $0xa8] sm:$0xff]
    %v2286 = vld [vmem:[%s2263 + $0xb0] sm:$0xff]
    %v2287 = vld [vmem:[%s2263 + $0xb8] sm:$0xff]
    %v2288 = vld [vmem:[%s2263 + $0xc0] sm:$0xff]
    %v2289 = vld [vmem:[%s2263 + $0xc8] sm:$0xff]
    %v2290 = vld [vmem:[%s2263 + $0xd0] sm:$0xff]
    %v2291 = vld [vmem:[%s2263 + $0xd8] sm:$0xff]
    %v2292 = vld [vmem:[%s2263 + $0xe0] sm:$0xff]
    %v2293 = vld [vmem:[%s2263 + $0xe8] sm:$0xff]
    %v2294 = vld [vmem:[%s2263 + $0xf0] sm:$0xff]
    %v2295 = vld [vmem:[%s2263 + $0xf8] sm:$0xff]
    %v2296 = vld [vmem:[%s2263 + $0x100] sm:$0xff]
    %v2297 = vld [vmem:[%s2263 + $0x108] sm:$0xff]
    %v2298 = vld [vmem:[%s2263 + $0x110] sm:$0xff]
    %v2299 = vld [vmem:[%s2263 + $0x118] sm:$0xff]
    %v2300 = vld [vmem:[%s2263 + $0x120] sm:$0xff]
    %v2301 = vld [vmem:[%s2263 + $0x128] sm:$0xff]
    %v2302 = vld [vmem:[%s2263 + $0x130] sm:$0xff]
    %v2303 = vld [vmem:[%s2263 + $0x138] sm:$0xff]
    %v2304 = vld [vmem:[%s2263 + $0x140] sm:$0xff]
    %v2305 = vld [vmem:[%s2263 + $0x148] sm:$0xff]
    %v2306 = vld [vmem:[%s2263 + $0x150] sm:$0xff]
    %v2307 = vld [vmem:[%s2263 + $0x158] sm:$0xff]
    %v2308 = vld [vmem:[%s2263 + $0x160] sm:$0xff]
    %v2309 = vld [vmem:[%s2263 + $0x168] sm:$0xff]
    %v2310 = vld [vmem:[%s2263 + $0x170] sm:$0xff]
    %v2311 = vld [vmem:[%s2263 + $0x178] sm:$0xff]
    %2312 = vmatprep.subr.mxu0 %v2265
    %2313 = vmatpush1.msra.mxu0 %v2264
    %2314 = vmatprep.subr.mxu0 %v2268
    %2315 = vmatpush1.msra.mxu0 %v2267
    %2316 = vmatprep.subr.mxu0 %v2271
    %2317 = vmatpush1.msra.mxu0 %v2270
    %2318 = vmatprep.subr.mxu0 %v2274
    %2319 = vmatpush1.msra.mxu0 %v2273
    %2320 = vmatprep.subr.mxu0 %v2277
    %2321 = vmatpush1.msra.mxu0 %v2276
    %2322 = vmatprep.subr.mxu0 %v2280
    %2323 = vmatpush1.msra.mxu0 %v2279
    %2324 = vmatprep.subr.mxu0 %v2283
    %2325 = vmatpush1.msra.mxu0 %v2282
    %2326 = vmatprep.subr.mxu0 %v2286
    %2327 = vmatpush1.msra.mxu0 %v2285
    %2328 = vmatprep.subr.mxu0 %v2289
    %2329 = vmatpush1.msra.mxu0 %v2288
    %2330 = vmatprep.subr.mxu0 %v2292
    %2331 = vmatpush1.msra.mxu0 %v2291
    %2332 = vmatprep.subr.mxu0 %v2295
    %2333 = vmatpush1.msra.mxu0 %v2294
    %2334 = vmatprep.subr.mxu0 %v2298
    %2335 = vmatpush1.msra.mxu0 %v2297
    %2336 = vmatprep.subr.mxu0 %v2301
    %2337 = vmatpush1.msra.mxu0 %v2300
    %2338 = vmatprep.subr.mxu0 %v2304
    %2339 = vmatpush1.msra.mxu0 %v2303
    %2340 = vmatprep.subr.mxu0 %v2307
    %2341 = vmatpush1.msra.mxu0 %v2306
    %2342 = vmatprep.subr.mxu0 %v2310
    %2343 = vmatpush1.msra.mxu0 %v2309
    %2344 = vmatprep.subr.mxu0 0.0
    %2345 = vmatpush1.msra.mxu0 0.0
    %2346 = vmatprep.subr.mxu0 0.0
    %2347 = vmatpush1.msra.mxu0 0.0
    %2348 = vmatprep.subr.mxu0 0.0
    %2349 = vmatpush1.msra.mxu0 0.0
    %2350 = vmatprep.subr.mxu0 0.0
    %2351 = vmatpush1.msra.mxu0 0.0
    %2352 = vmatprep.subr.mxu0 0.0
    %2353 = vmatpush1.msra.mxu0 0.0
    %2354 = vmatprep.subr.mxu0 0.0
    %2355 = vmatpush1.msra.mxu0 0.0
    %2356 = vmatprep.subr.mxu0 0.0
    %2357 = vmatpush1.msra.mxu0 0.0
    %2358 = vmatprep.subr.mxu0 0.0
    %2359 = vmatpush1.msra.mxu0 0.0
    %2360 = vmatprep.subr.mxu0 0.0
    %2361 = vmatpush1.msra.mxu0 0.0
    %2362 = vmatprep.subr.mxu0 0.0
    %2363 = vmatpush1.msra.mxu0 0.0
    %2364 = vmatprep.subr.mxu0 0.0
    %2365 = vmatpush1.msra.mxu0 0.0
    %2366 = vmatprep.subr.mxu0 0.0
    %2367 = vmatpush1.msra.mxu0 0.0
    %2368 = vmatprep.subr.mxu0 0.0
    %2369 = vmatpush1.msra.mxu0 0.0
    %2370 = vmatprep.subr.mxu0 0.0
    %2371 = vmatpush1.msra.mxu0 0.0
    %2372 = vmatprep.subr.mxu0 0.0
    %2373 = vmatpush1.msra.mxu0 0.0
    %2374 = vmatprep.subr.mxu0 0.0
    %2375 = vmatpush1.msra.mxu0 0.0
    %2376 = vmatprep.mubr.f32.mxu0 0.0
    %2377 = vmatmul.mubr.f32.gmra.mrb[0].mxu0 %v2247
    %v2378 = vpop.f32.mrb[0].mxu0
    %v2379 = vadd.f32 0.0, %v2378
    %v2380 = vpop.f32.mrb[0].mxu0
    %v2381 = vadd.f32 0.0, %v2380
    %2382 = vmatprep.mubr.f32.mxu0 0.0
    %2383 = vmatmul.mubr.f32.gmra.mrb[0].mxu0 %v2248
    %v2384 = vpop.f32.mrb[0].mxu0
    %v2385 = vadd.f32 0.0, %v2384
    %v2386 = vpop.f32.mrb[0].mxu0
    %v2387 = vadd.f32 0.0, %v2386
    %2388 = vmatprep.mubr.f32.mxu0 0.0
    %2389 = vmatmul.mubr.f32.gmra.mrb[0].mxu0 %v2249
    %v2390 = vpop.f32.mrb[0].mxu0
    %v2391 = vadd.f32 0.0, %v2390
    %v2392 = vpop.f32.mrb[0].mxu0
    %v2393 = vadd.f32 0.0, %v2392
    %2394 = vmatprep.mubr.f32.mxu0 0.0
    %2395 = vmatmul.mubr.f32.gmra.mrb[0].mxu0 %v2250
    %v2396 = vpop.f32.mrb[0].mxu0
    %v2397 = vadd.f32 0.0, %v2396
    %v2398 = vpop.f32.mrb[0].mxu0
    %v2399 = vadd.f32 0.0, %v2398
    %2400 = vmatprep.mubr.f32.mxu0 0.0
    %2401 = vmatmul.mubr.f32.gmra.mrb[0].mxu0 %v2251
    %v2402 = vpop.f32.mrb[0].mxu0
    %v2403 = vadd.f32 0.0, %v2402
    %v2404 = vpop.f32.mrb[0].mxu0
    %v2405 = vadd.f32 0.0, %v2404
    %2406 = vmatprep.mubr.f32.mxu0 0.0
    %2407 = vmatmul.mubr.f32.gmra.mrb[0].mxu0 %v2252
    %v2408 = vpop.f32.mrb[0].mxu0
    %v2409 = vadd.f32 0.0, %v2408
    %v2410 = vpop.f32.mrb[0].mxu0
    %v2411 = vadd.f32 0.0, %v2410
    %2412 = vmatprep.mubr.f32.mxu0 0.0
    %2413 = vmatmul.mubr.f32.gmra.mrb[0].mxu0 %v2253
    %v2414 = vpop.f32.mrb[0].mxu0
    %v2415 = vadd.f32 0.0, %v2414
    %v2416 = vpop.f32.mrb[0].mxu0
    %v2417 = vadd.f32 0.0, %v2416
    %2418 = vmatprep.mubr.f32.mxu0 0.0
    %2419 = vmatmul.mubr.f32.gmra.mrb[0].mxu0 %v2254
    %v2420 = vpop.f32.mrb[0].mxu0
    %v2421 = vadd.f32 0.0, %v2420
    %v2422 = vpop.f32.mrb[0].mxu0
    %v2423 = vadd.f32 0.0, %v2422
    %2424 = vmatprep.mubr.f32.mxu0 0.0
    %2425 = vmatmul.mubr.f32.gmra.mrb[0].mxu0 %v2255
    %v2426 = vpop.f32.mrb[0].mxu0
    %v2427 = vadd.f32 0.0, %v2426
    %v2428 = vpop.f32.mrb[0].mxu0
    %v2429 = vadd.f32 0.0, %v2428
    %2430 = vmatprep.mubr.f32.mxu0 0.0
    %2431 = vmatmul.mubr.f32.gmra.mrb[0].mxu0 %v2256
    %v2432 = vpop.f32.mrb[0].mxu0
    %v2433 = vadd.f32 0.0, %v2432
    %v2434 = vpop.f32.mrb[0].mxu0
    %v2435 = vadd.f32 0.0, %v2434
    %2436 = vmatprep.mubr.f32.mxu0 0.0
    %2437 = vmatmul.mubr.f32.gmra.mrb[0].mxu0 %v2257
    %v2438 = vpop.f32.mrb[0].mxu0
    %v2439 = vadd.f32 0.0, %v2438
    %v2440 = vpop.f32.mrb[0].mxu0
    %v2441 = vadd.f32 0.0, %v2440
    %2442 = vmatprep.mubr.f32.mxu0 0.0
    %2443 = vmatmul.mubr.f32.gmra.mrb[0].mxu0 %v2258
    %v2444 = vpop.f32.mrb[0].mxu0
    %v2445 = vadd.f32 0.0, %v2444
    %v2446 = vpop.f32.mrb[0].mxu0
    %v2447 = vadd.f32 0.0, %v2446
    %2448 = vmatprep.mubr.f32.mxu0 0.0
    %2449 = vmatmul.mubr.f32.gmra.mrb[0].mxu0 %v2259
    %v2450 = vpop.f32.mrb[0].mxu0
    %v2451 = vadd.f32 0.0, %v2450
    %v2452 = vpop.f32.mrb[0].mxu0
    %v2453 = vadd.f32 0.0, %v2452
    %2454 = vmatprep.mubr.f32.mxu0 0.0
    %2455 = vmatmul.mubr.f32.gmra.mrb[0].mxu0 %v2260
    %v2456 = vpop.f32.mrb[0].mxu0
    %v2457 = vadd.f32 0.0, %v2456
    %v2458 = vpop.f32.mrb[0].mxu0
    %v2459 = vadd.f32 0.0, %v2458
    %2460 = vmatprep.mubr.f32.mxu0 0.0
    %2461 = vmatmul.mubr.f32.gmra.mrb[0].mxu0 %v2261
    %v2462 = vpop.f32.mrb[0].mxu0
    %v2463 = vadd.f32 0.0, %v2462
    %v2464 = vpop.f32.mrb[0].mxu0
    %v2465 = vadd.f32 0.0, %v2464
    %2466 = vmatprep.mubr.f32.mxu0 0.0
    %2467 = vmatmul.mubr.f32.gmra.mrb[0].mxu0 %v2262
    %v2468 = vpop.f32.mrb[0].mxu0
    %v2469 = vadd.f32 0.0, %v2468
    %v2470 = vpop.f32.mrb[0].mxu0
    %v2471 = vadd.f32 0.0, %v2470
    %2472 = vdwg.mxu0
    %2473 = vmatprep.subr.mxu0 0.0
    %2474 = vmatpush1.msra.mxu0 %v2266
    %2475 = vmatprep.subr.mxu0 0.0
    %2476 = vmatpush1.msra.mxu0 %v2269
    %2477 = vmatprep.subr.mxu0 0.0
    %2478 = vmatpush1.msra.mxu0 %v2272
    %2479 = vmatprep.subr.mxu0 0.0
    %2480 = vmatpush1.msra.mxu0 %v2275
    %2481 = vmatprep.subr.mxu0 0.0
    %2482 = vmatpush1.msra.mxu0 %v2278
    %2483 = vmatprep.subr.mxu0 0.0
    %2484 = vmatpush1.msra.mxu0 %v2281
    %2485 = vmatprep.subr.mxu0 0.0
    %2486 = vmatpush1.msra.mxu0 %v2284
    %2487 = vmatprep.subr.mxu0 0.0
    %2488 = vmatpush1.msra.mxu0 %v2287
    %2489 = vmatprep.subr.mxu0 0.0
    %2490 = vmatpush1.msra.mxu0 %v2290
    %2491 = vmatprep.subr.mxu0 0.0
    %2492 = vmatpush1.msra.mxu0 %v2293
    %2493 = vmatprep.subr.mxu0 0.0
    %2494 = vmatpush1.msra.mxu0 %v2296
    %2495 = vmatprep.subr.mxu0 0.0
    %2496 = vmatpush1.msra.mxu0 %v2299
    %2497 = vmatprep.subr.mxu0 0.0
    %2498 = vmatpush1.msra.mxu0 %v2302
    %2499 = vmatprep.subr.mxu0 0.0
    %2500 = vmatpush1.msra.mxu0 %v2305
    %2501 = vmatprep.subr.mxu0 0.0
    %2502 = vmatpush1.msra.mxu0 %v2308
    %2503 = vmatprep.subr.mxu0 0.0
    %2504 = vmatpush1.msra.mxu0 %v2311
    %2505 = vmatprep.subr.mxu0 0.0
    %2506 = vmatpush1.msra.mxu0 0.0
    %2507 = vmatprep.subr.mxu0 0.0
    %2508 = vmatpush1.msra.mxu0 0.0
    %2509 = vmatprep.subr.mxu0 0.0
    %2510 = vmatpush1.msra.mxu0 0.0
    %2511 = vmatprep.subr.mxu0 0.0
    %2512 = vmatpush1.msra.mxu0 0.0
    %2513 = vmatprep.subr.mxu0 0.0
    %2514 = vmatpush1.msra.mxu0 0.0
    %2515 = vmatprep.subr.mxu0 0.0
    %2516 = vmatpush1.msra.mxu0 0.0
    %2517 = vmatprep.subr.mxu0 0.0
    %2518 = vmatpush1.msra.mxu0 0.0
    %2519 = vmatprep.subr.mxu0 0.0
    %2520 = vmatpush1.msra.mxu0 0.0
    %2521 = vmatprep.subr.mxu0 0.0
    %2522 = vmatpush1.msra.mxu0 0.0
    %2523 = vmatprep.subr.mxu0 0.0
    %2524 = vmatpush1.msra.mxu0 0.0
    %2525 = vmatprep.subr.mxu0 0.0
    %2526 = vmatpush1.msra.mxu0 0.0
    %2527 = vmatprep.subr.mxu0 0.0
    %2528 = vmatpush1.msra.mxu0 0.0
    %2529 = vmatprep.subr.mxu0 0.0
    %2530 = vmatpush1.msra.mxu0 0.0
    %2531 = vmatprep.subr.mxu0 0.0
    %2532 = vmatpush1.msra.mxu0 0.0
    %2533 = vmatprep.subr.mxu0 0.0
    %2534 = vmatpush1.msra.mxu0 0.0
    %2535 = vmatprep.subr.mxu0 0.0
    %2536 = vmatpush1.msra.mxu0 0.0
    %2537 = vmatprep.mubr.f32.mxu0 0.0
    %2538 = vmatmul.mubr.f32.gmra.mrb[0].mxu0 %v2247
    %v2539 = vpop.f32.mrb[0].mxu0
    %v2540 = vadd.f32 0.0, %v2539
    %v2541 = vpop.f32.mrb[0].mxu0
    %2542 = vmatprep.mubr.f32.mxu0 0.0
    %2543 = vmatmul.mubr.f32.gmra.mrb[0].mxu0 %v2248
    %v2544 = vpop.f32.mrb[0].mxu0
    %v2545 = vadd.f32 0.0, %v2544
    %v2546 = vpop.f32.mrb[0].mxu0
    %2547 = vmatprep.mubr.f32.mxu0 0.0
    %2548 = vmatmul.mubr.f32.gmra.mrb[0].mxu0 %v2249
    %v2549 = vpop.f32.mrb[0].mxu0
    %v2550 = vadd.f32 0.0, %v2549
    %v2551 = vpop.f32.mrb[0].mxu0
    %2552 = vmatprep.mubr.f32.mxu0 0.0
    %2553 = vmatmul.mubr.f32.gmra.mrb[0].mxu0 %v2250
    %v2554 = vpop.f32.mrb[0].mxu0
    %v2555 = vadd.f32 0.0, %v2554
    %v2556 = vpop.f32.mrb[0].mxu0
    %2557 = vmatprep.mubr.f32.mxu0 0.0
    %2558 = vmatmul.mubr.f32.gmra.mrb[0].mxu0 %v2251
    %v2559 = vpop.f32.mrb[0].mxu0
    %v2560 = vadd.f32 0.0, %v2559
    %v2561 = vpop.f32.mrb[0].mxu0
    %2562 = vmatprep.mubr.f32.mxu0 0.0
    %2563 = vmatmul.mubr.f32.gmra.mrb[0].mxu0 %v2252
    %v2564 = vpop.f32.mrb[0].mxu0
    %v2565 = vadd.f32 0.0, %v2564
    %v2566 = vpop.f32.mrb[0].mxu0
    %2567 = vmatprep.mubr.f32.mxu0 0.0
    %2568 = vmatmul.mubr.f32.gmra.mrb[0].mxu0 %v2253
    %v2569 = vpop.f32.mrb[0].mxu0
    %v2570 = vadd.f32 0.0, %v2569
    %v2571 = vpop.f32.mrb[0].mxu0
    %2572 = vmatprep.mubr.f32.mxu0 0.0
    %2573 = vmatmul.mubr.f32.gmra.mrb[0].mxu0 %v2254
    %v2574 = vpop.f32.mrb[0].mxu0
    %v2575 = vadd.f32 0.0, %v2574
    %v2576 = vpop.f32.mrb[0].mxu0
    %2577 = vmatprep.mubr.f32.mxu0 0.0
    %2578 = vmatmul.mubr.f32.gmra.mrb[0].mxu0 %v2255
    %v2579 = vpop.f32.mrb[0].mxu0
    %v2580 = vadd.f32 0.0, %v2579
    %v2581 = vpop.f32.mrb[0].mxu0
    %2582 = vmatprep.mubr.f32.mxu0 0.0
    %2583 = vmatmul.mubr.f32.gmra.mrb[0].mxu0 %v2256
    %v2584 = vpop.f32.mrb[0].mxu0
    %v2585 = vadd.f32 0.0, %v2584
    %v2586 = vpop.f32.mrb[0].mxu0
    %2587 = vmatprep.mubr.f32.mxu0 0.0
    %2588 = vmatmul.mubr.f32.gmra.mrb[0].mxu0 %v2257
    %v2589 = vpop.f32.mrb[0].mxu0
    %v2590 = vadd.f32 0.0, %v2589
    %v2591 = vpop.f32.mrb[0].mxu0
    %2592 = vmatprep.mubr.f32.mxu0 0.0
    %2593 = vmatmul.mubr.f32.gmra.mrb[0].mxu0 %v2258
    %v2594 = vpop.f32.mrb[0].mxu0
    %v2595 = vadd.f32 0.0, %v2594
    %v2596 = vpop.f32.mrb[0].mxu0
    %2597 = vmatprep.mubr.f32.mxu0 0.0
    %2598 = vmatmul.mubr.f32.gmra.mrb[0].mxu0 %v2259
    %v2599 = vpop.f32.mrb[0].mxu0
    %v2600 = vadd.f32 0.0, %v2599
    %v2601 = vpop.f32.mrb[0].mxu0
    %2602 = vmatprep.mubr.f32.mxu0 0.0
    %2603 = vmatmul.mubr.f32.gmra.mrb[0].mxu0 %v2260
    %v2604 = vpop.f32.mrb[0].mxu0
    %v2605 = vadd.f32 0.0, %v2604
    %v2606 = vpop.f32.mrb[0].mxu0
    %2607 = vmatprep.mubr.f32.mxu0 0.0
    %2608 = vmatmul.mubr.f32.gmra.mrb[0].mxu0 %v2261
    %v2609 = vpop.f32.mrb[0].mxu0
    %v2610 = vadd.f32 0.0, %v2609
    %v2611 = vpop.f32.mrb[0].mxu0
    %2612 = vmatprep.mubr.f32.mxu0 0.0
    %2613 = vmatmul.mubr.f32.gmra.mrb[0].mxu0 %v2262
    %v2614 = vpop.f32.mrb[0].mxu0
    %v2615 = vadd.f32 0.0, %v2614
    %v2616 = vpop.f32.mrb[0].mxu0
    %2617 = vdwg.mxu0
    %2618 = vst [vmem:[#allocation3] sm:$0xff] %v2379
    %2619 = vst [vmem:[#allocation3 + $0x8] sm:$0xff] %v2385
    %2620 = vst [vmem:[#allocation3 + $0x10] sm:$0xff] %v2391
    %2621 = vst [vmem:[#allocation3 + $0x18] sm:$0xff] %v2397
    %2622 = vst [vmem:[#allocation3 + $0x20] sm:$0xff] %v2403
    %2623 = vst [vmem:[#allocation3 + $0x28] sm:$0xff] %v2409
    %2624 = vst [vmem:[#allocation3 + $0x30] sm:$0xff] %v2415
    %2625 = vst [vmem:[#allocation3 + $0x38] sm:$0xff] %v2421
    %2626 = vst [vmem:[#allocation3 + $0x40] sm:$0xff] %v2427
    %2627 = vst [vmem:[#allocation3 + $0x48] sm:$0xff] %v2433
    %2628 = vst [vmem:[#allocation3 + $0x50] sm:$0xff] %v2439
    %2629 = vst [vmem:[#allocation3 + $0x58] sm:$0xff] %v2445
    %2630 = vst [vmem:[#allocation3 + $0x60] sm:$0xff] %v2451
    %2631 = vst [vmem:[#allocation3 + $0x68] sm:$0xff] %v2457
    %2632 = vst [vmem:[#allocation3 + $0x70] sm:$0xff] %v2463
    %2633 = vst [vmem:[#allocation3 + $0x78] sm:$0xff] %v2469
    %2634 = vst [vmem:[#allocation3 + $0x80] sm:$0xff] %v2381
    %2635 = vst [vmem:[#allocation3 + $0x88] sm:$0xff] %v2387
    %2636 = vst [vmem:[#allocation3 + $0x90] sm:$0xff] %v2393
    %2637 = vst [vmem:[#allocation3 + $0x98] sm:$0xff] %v2399
    %2638 = vst [vmem:[#allocation3 + $0xa0] sm:$0xff] %v2405
    %2639 = vst [vmem:[#allocation3 + $0xa8] sm:$0xff] %v2411
    %2640 = vst [vmem:[#allocation3 + $0xb0] sm:$0xff] %v2417
    %2641 = vst [vmem:[#allocation3 + $0xb8] sm:$0xff] %v2423
    %2642 = vst [vmem:[#allocation3 + $0xc0] sm:$0xff] %v2429
    %2643 = vst [vmem:[#allocation3 + $0xc8] sm:$0xff] %v2435
    %2644 = vst [vmem:[#allocation3 + $0xd0] sm:$0xff] %v2441
    %2645 = vst [vmem:[#allocation3 + $0xd8] sm:$0xff] %v2447
    %2646 = vst [vmem:[#allocation3 + $0xe0] sm:$0xff] %v2453
    %2647 = vst [vmem:[#allocation3 + $0xe8] sm:$0xff] %v2459
    %2648 = vst [vmem:[#allocation3 + $0xf0] sm:$0xff] %v2465
    %2649 = vst [vmem:[#allocation3 + $0xf8] sm:$0xff] %v2471
    %2650 = vst [vmem:[#allocation3 + $0x100] sm:$0xff] %v2540
    %2651 = vst [vmem:[#allocation3 + $0x108] sm:$0xff] %v2545
    %2652 = vst [vmem:[#allocation3 + $0x110] sm:$0xff] %v2550
    %2653 = vst [vmem:[#allocation3 + $0x118] sm:$0xff] %v2555
    %2654 = vst [vmem:[#allocation3 + $0x120] sm:$0xff] %v2560
    %2655 = vst [vmem:[#allocation3 + $0x128] sm:$0xff] %v2565
    %2656 = vst [vmem:[#allocation3 + $0x130] sm:$0xff] %v2570
    %2657 = vst [vmem:[#allocation3 + $0x138] sm:$0xff] %v2575
    %2658 = vst [vmem:[#allocation3 + $0x140] sm:$0xff] %v2580
    %2659 = vst [vmem:[#allocation3 + $0x148] sm:$0xff] %v2585
    %2660 = vst [vmem:[#allocation3 + $0x150] sm:$0xff] %v2590
    %2661 = vst [vmem:[#allocation3 + $0x158] sm:$0xff] %v2595
    %2662 = vst [vmem:[#allocation3 + $0x160] sm:$0xff] %v2600
    %2663 = vst [vmem:[#allocation3 + $0x168] sm:$0xff] %v2605
    %2664 = vst [vmem:[#allocation3 + $0x170] sm:$0xff] %v2610
    %2665 = vst [vmem:[#allocation3 + $0x178] sm:$0xff] %v2615
    %v2666 = vld [vmem:[#allocation5] sm:$0xff]
    %v2667 = vld [vmem:[#allocation5 + $0x8] sm:$0xff]
    %v2668 = vld [vmem:[#allocation5 + $0x10] sm:$0xff]
    %v2669 = vld [vmem:[#allocation5 + $0x18] sm:$0xff]
    %v2670 = vld [vmem:[#allocation5 + $0x20] sm:$0xff]
    %v2671 = vld [vmem:[#allocation5 + $0x28] sm:$0xff]
    %v2672 = vld [vmem:[#allocation5 + $0x30] sm:$0xff]
    %v2673 = vld [vmem:[#allocation5 + $0x38] sm:$0xff]
    %v2674 = vld [vmem:[#allocation5 + $0x40] sm:$0xff]
    %v2675 = vld [vmem:[#allocation5 + $0x48] sm:$0xff]
    %v2676 = vld [vmem:[#allocation5 + $0x50] sm:$0xff]
    %v2677 = vld [vmem:[#allocation5 + $0x58] sm:$0xff]
    %v2678 = vld [vmem:[#allocation5 + $0x60] sm:$0xff]
    %v2679 = vld [vmem:[#allocation5 + $0x68] sm:$0xff]
    %v2680 = vld [vmem:[#allocation5 + $0x70] sm:$0xff]
    %v2681 = vld [vmem:[#allocation5 + $0x78] sm:$0xff]
    %v2682 = vld [vmem:[#allocation5 + $0x80] sm:$0xff]
    %v2683 = vld [vmem:[#allocation5 + $0x88] sm:$0xff]
    %v2684 = vld [vmem:[#allocation5 + $0x90] sm:$0xff]
    %v2685 = vld [vmem:[#allocation5 + $0x98] sm:$0xff]
    %v2686 = vld [vmem:[#allocation5 + $0xa0] sm:$0xff]
    %v2687 = vld [vmem:[#allocation5 + $0xa8] sm:$0xff]
    %v2688 = vld [vmem:[#allocation5 + $0xb0] sm:$0xff]
    %v2689 = vld [vmem:[#allocation5 + $0xb8] sm:$0xff]
    %v2690 = vld [vmem:[#allocation5 + $0xc0] sm:$0xff]
    %v2691 = vld [vmem:[#allocation5 + $0xc8] sm:$0xff]
    %v2692 = vld [vmem:[#allocation5 + $0xd0] sm:$0xff]
    %v2693 = vld [vmem:[#allocation5 + $0xd8] sm:$0xff]
    %v2694 = vld [vmem:[#allocation5 + $0xe0] sm:$0xff]
    %v2695 = vld [vmem:[#allocation5 + $0xe8] sm:$0xff]
    %v2696 = vld [vmem:[#allocation5 + $0xf0] sm:$0xff]
    %v2697 = vld [vmem:[#allocation5 + $0xf8] sm:$0xff]
    %v2698 = vld [vmem:[#allocation5 + $0x100] sm:$0xff]
    %v2699 = vld [vmem:[#allocation5 + $0x108] sm:$0xff]
    %v2700 = vld [vmem:[#allocation5 + $0x110] sm:$0xff]
    %v2701 = vld [vmem:[#allocation5 + $0x118] sm:$0xff]
    %v2702 = vld [vmem:[#allocation5 + $0x120] sm:$0xff]
    %v2703 = vld [vmem:[#allocation5 + $0x128] sm:$0xff]
    %v2704 = vld [vmem:[#allocation5 + $0x130] sm:$0xff]
    %v2705 = vld [vmem:[#allocation5 + $0x138] sm:$0xff]
    %v2706 = vld [vmem:[#allocation5 + $0x140] sm:$0xff]
    %v2707 = vld [vmem:[#allocation5 + $0x148] sm:$0xff]
    %v2708 = vld [vmem:[#allocation5 + $0x150] sm:$0xff]
    %v2709 = vld [vmem:[#allocation5 + $0x158] sm:$0xff]
    %v2710 = vld [vmem:[#allocation5 + $0x160] sm:$0xff]
    %v2711 = vld [vmem:[#allocation5 + $0x168] sm:$0xff]
    %v2712 = vld [vmem:[#allocation5 + $0x170] sm:$0xff]
    %v2713 = vld [vmem:[#allocation5 + $0x178] sm:$0xff]
    %v2714 = vld [vmem:[#allocation3] sm:$0xff]
    %v2715 = vld [vmem:[#allocation3 + $0x8] sm:$0xff]
    %v2716 = vld [vmem:[#allocation3 + $0x10] sm:$0xff]
    %v2717 = vld [vmem:[#allocation3 + $0x18] sm:$0xff]
    %v2718 = vld [vmem:[#allocation3 + $0x20] sm:$0xff]
    %v2719 = vld [vmem:[#allocation3 + $0x28] sm:$0xff]
    %v2720 = vld [vmem:[#allocation3 + $0x30] sm:$0xff]
    %v2721 = vld [vmem:[#allocation3 + $0x38] sm:$0xff]
    %v2722 = vld [vmem:[#allocation3 + $0x40] sm:$0xff]
    %v2723 = vld [vmem:[#allocation3 + $0x48] sm:$0xff]
    %v2724 = vld [vmem:[#allocation3 + $0x50] sm:$0xff]
    %v2725 = vld [vmem:[#allocation3 + $0x58] sm:$0xff]
    %v2726 = vld [vmem:[#allocation3 + $0x60] sm:$0xff]
    %v2727 = vld [vmem:[#allocation3 + $0x68] sm:$0xff]
    %v2728 = vld [vmem:[#allocation3 + $0x70] sm:$0xff]
    %v2729 = vld [vmem:[#allocation3 + $0x78] sm:$0xff]
    %v2730 = vld [vmem:[#allocation3 + $0x80] sm:$0xff]
    %v2731 = vld [vmem:[#allocation3 + $0x88] sm:$0xff]
    %v2732 = vld [vmem:[#allocation3 + $0x90] sm:$0xff]
    %v2733 = vld [vmem:[#allocation3 + $0x98] sm:$0xff]
    %v2734 = vld [vmem:[#allocation3 + $0xa0] sm:$0xff]
    %v2735 = vld [vmem:[#allocation3 + $0xa8] sm:$0xff]
    %v2736 = vld [vmem:[#allocation3 + $0xb0] sm:$0xff]
    %v2737 = vld [vmem:[#allocation3 + $0xb8] sm:$0xff]
    %v2738 = vld [vmem:[#allocation3 + $0xc0] sm:$0xff]
    %v2739 = vld [vmem:[#allocation3 + $0xc8] sm:$0xff]
    %v2740 = vld [vmem:[#allocation3 + $0xd0] sm:$0xff]
    %v2741 = vld [vmem:[#allocation3 + $0xd8] sm:$0xff]
    %v2742 = vld [vmem:[#allocation3 + $0xe0] sm:$0xff]
    %v2743 = vld [vmem:[#allocation3 + $0xe8] sm:$0xff]
    %v2744 = vld [vmem:[#allocation3 + $0xf0] sm:$0xff]
    %v2745 = vld [vmem:[#allocation3 + $0xf8] sm:$0xff]
    %v2746 = vld [vmem:[#allocation3 + $0x100] sm:$0xff]
    %v2747 = vld [vmem:[#allocation3 + $0x108] sm:$0xff]
    %v2748 = vld [vmem:[#allocation3 + $0x110] sm:$0xff]
    %v2749 = vld [vmem:[#allocation3 + $0x118] sm:$0xff]
    %v2750 = vld [vmem:[#allocation3 + $0x120] sm:$0xff]
    %v2751 = vld [vmem:[#allocation3 + $0x128] sm:$0xff]
    %v2752 = vld [vmem:[#allocation3 + $0x130] sm:$0xff]
    %v2753 = vld [vmem:[#allocation3 + $0x138] sm:$0xff]
    %v2754 = vld [vmem:[#allocation3 + $0x140] sm:$0xff]
    %v2755 = vld [vmem:[#allocation3 + $0x148] sm:$0xff]
    %v2756 = vld [vmem:[#allocation3 + $0x150] sm:$0xff]
    %v2757 = vld [vmem:[#allocation3 + $0x158] sm:$0xff]
    %v2758 = vld [vmem:[#allocation3 + $0x160] sm:$0xff]
    %v2759 = vld [vmem:[#allocation3 + $0x168] sm:$0xff]
    %v2760 = vld [vmem:[#allocation3 + $0x170] sm:$0xff]
    %v2761 = vld [vmem:[#allocation3 + $0x178] sm:$0xff]
    %v2762 = vld [vmem:[#allocation2] sm:$0xff]
    %v2763 = vld [vmem:[#allocation2 + $0x8] sm:$0xff]
    %v2764 = vld [vmem:[#allocation2 + $0x10] sm:$0xff]
    %v2765 = vld [vmem:[#allocation2 + $0x18] sm:$0xff]
    %v2766 = vld [vmem:[#allocation2 + $0x20] sm:$0xff]
    %v2767 = vld [vmem:[#allocation2 + $0x28] sm:$0xff]
    %v2768 = vld [vmem:[#allocation2 + $0x30] sm:$0xff]
    %v2769 = vld [vmem:[#allocation2 + $0x38] sm:$0xff]
    %v2770 = vld [vmem:[#allocation2 + $0x40] sm:$0xff]
    %v2771 = vld [vmem:[#allocation2 + $0x48] sm:$0xff]
    %v2772 = vld [vmem:[#allocation2 + $0x50] sm:$0xff]
    %v2773 = vld [vmem:[#allocation2 + $0x58] sm:$0xff]
    %v2774 = vld [vmem:[#allocation2 + $0x60] sm:$0xff]
    %v2775 = vld [vmem:[#allocation2 + $0x68] sm:$0xff]
    %v2776 = vld [vmem:[#allocation2 + $0x70] sm:$0xff]
    %v2777 = vld [vmem:[#allocation2 + $0x78] sm:$0xff]
    %s2778 = scalar_lea.vmem [#allocation11], 256
    %v2779 = vld [vmem:[%s2778] sm:$0xff]
    %v2780 = vld [vmem:[%s2778 + $0x8] sm:$0xff]
    %v2781 = vld [vmem:[%s2778 + $0x10] sm:$0xff]
    %v2782 = vld [vmem:[%s2778 + $0x18] sm:$0xff]
    %v2783 = vld [vmem:[%s2778 + $0x20] sm:$0xff]
    %v2784 = vld [vmem:[%s2778 + $0x28] sm:$0xff]
    %v2785 = vld [vmem:[%s2778 + $0x30] sm:$0xff]
    %v2786 = vld [vmem:[%s2778 + $0x38] sm:$0xff]
    %v2787 = vld [vmem:[%s2778 + $0x40] sm:$0xff]
    %v2788 = vld [vmem:[%s2778 + $0x48] sm:$0xff]
    %v2789 = vld [vmem:[%s2778 + $0x50] sm:$0xff]
    %v2790 = vld [vmem:[%s2778 + $0x58] sm:$0xff]
    %v2791 = vld [vmem:[%s2778 + $0x60] sm:$0xff]
    %v2792 = vld [vmem:[%s2778 + $0x68] sm:$0xff]
    %v2793 = vld [vmem:[%s2778 + $0x70] sm:$0xff]
    %v2794 = vld [vmem:[%s2778 + $0x78] sm:$0xff]
    %2795 = vmatprep.subr.mxu0 0.0
    %2796 = vmatpush1.msra.mxu0 %v2779
    %2797 = vmatprep.subr.mxu0 0.0
    %2798 = vmatpush1.msra.mxu0 %v2780
    %2799 = vmatprep.subr.mxu0 0.0
    %2800 = vmatpush1.msra.mxu0 %v2781
    %2801 = vmatprep.subr.mxu0 0.0
    %2802 = vmatpush1.msra.mxu0 %v2782
    %2803 = vmatprep.subr.mxu0 0.0
    %2804 = vmatpush1.msra.mxu0 %v2783
    %2805 = vmatprep.subr.mxu0 0.0
    %2806 = vmatpush1.msra.mxu0 %v2784
    %2807 = vmatprep.subr.mxu0 0.0
    %2808 = vmatpush1.msra.mxu0 %v2785
    %2809 = vmatprep.subr.mxu0 0.0
    %2810 = vmatpush1.msra.mxu0 %v2786
    %2811 = vmatprep.subr.mxu0 0.0
    %2812 = vmatpush1.msra.mxu0 %v2787
    %2813 = vmatprep.subr.mxu0 0.0
    %2814 = vmatpush1.msra.mxu0 %v2788
    %2815 = vmatprep.subr.mxu0 0.0
    %2816 = vmatpush1.msra.mxu0 %v2789
    %2817 = vmatprep.subr.mxu0 0.0
    %2818 = vmatpush1.msra.mxu0 %v2790
    %2819 = vmatprep.subr.mxu0 0.0
    %2820 = vmatpush1.msra.mxu0 %v2791
    %2821 = vmatprep.subr.mxu0 0.0
    %2822 = vmatpush1.msra.mxu0 %v2792
    %2823 = vmatprep.subr.mxu0 0.0
    %2824 = vmatpush1.msra.mxu0 %v2793
    %2825 = vmatprep.subr.mxu0 0.0
    %2826 = vmatpush1.msra.mxu0 %v2794
    %2827 = vmatprep.subr.mxu0 0.0
    %2828 = vmatpush1.msra.mxu0 0.0
    %2829 = vmatprep.subr.mxu0 0.0
    %2830 = vmatpush1.msra.mxu0 0.0
    %2831 = vmatprep.subr.mxu0 0.0
    %2832 = vmatpush1.msra.mxu0 0.0
    %2833 = vmatprep.subr.mxu0 0.0
    %2834 = vmatpush1.msra.mxu0 0.0
    %2835 = vmatprep.subr.mxu0 0.0
    %2836 = vmatpush1.msra.mxu0 0.0
    %2837 = vmatprep.subr.mxu0 0.0
    %2838 = vmatpush1.msra.mxu0 0.0
    %2839 = vmatprep.subr.mxu0 0.0
    %2840 = vmatpush1.msra.mxu0 0.0
    %2841 = vmatprep.subr.mxu0 0.0
    %2842 = vmatpush1.msra.mxu0 0.0
    %2843 = vmatprep.subr.mxu0 0.0
    %2844 = vmatpush1.msra.mxu0 0.0
    %2845 = vmatprep.subr.mxu0 0.0
    %2846 = vmatpush1.msra.mxu0 0.0
    %2847 = vmatprep.subr.mxu0 0.0
    %2848 = vmatpush1.msra.mxu0 0.0
    %2849 = vmatprep.subr.mxu0 0.0
    %2850 = vmatpush1.msra.mxu0 0.0
    %2851 = vmatprep.subr.mxu0 0.0
    %2852 = vmatpush1.msra.mxu0 0.0
    %2853 = vmatprep.subr.mxu0 0.0
    %2854 = vmatpush1.msra.mxu0 0.0
    %2855 = vmatprep.subr.mxu0 0.0
    %2856 = vmatpush1.msra.mxu0 0.0
    %2857 = vmatprep.subr.mxu0 0.0
    %2858 = vmatpush1.msra.mxu0 0.0
    %2859 = vmatprep.mubr.f32.mxu0 0.0
    %2860 = vmatmul.mubr.f32.gmra.mrb[0].mxu0 %v2762
    %v2861 = vpop.f32.mrb[0].mxu0
    %v2862 = vadd.f32 0.0, %v2861
    %v2863 = vpop.f32.mrb[0].mxu0
    %2864 = vmatprep.mubr.f32.mxu0 0.0
    %2865 = vmatmul.mubr.f32.gmra.mrb[0].mxu0 %v2763
    %v2866 = vpop.f32.mrb[0].mxu0
    %v2867 = vadd.f32 0.0, %v2866
    %v2868 = vpop.f32.mrb[0].mxu0
    %2869 = vmatprep.mubr.f32.mxu0 0.0
    %2870 = vmatmul.mubr.f32.gmra.mrb[0].mxu0 %v2764
    %v2871 = vpop.f32.mrb[0].mxu0
    %v2872 = vadd.f32 0.0, %v2871
    %v2873 = vpop.f32.mrb[0].mxu0
    %2874 = vmatprep.mubr.f32.mxu0 0.0
    %2875 = vmatmul.mubr.f32.gmra.mrb[0].mxu0 %v2765
    %v2876 = vpop.f32.mrb[0].mxu0
    %v2877 = vadd.f32 0.0, %v2876
    %v2878 = vpop.f32.mrb[0].mxu0
    %2879 = vmatprep.mubr.f32.mxu0 0.0
    %2880 = vmatmul.mubr.f32.gmra.mrb[0].mxu0 %v2766
    %v2881 = vpop.f32.mrb[0].mxu0
    %v2882 = vadd.f32 0.0, %v2881
    %v2883 = vpop.f32.mrb[0].mxu0
    %2884 = vmatprep.mubr.f32.mxu0 0.0
    %2885 = vmatmul.mubr.f32.gmra.mrb[0].mxu0 %v2767
    %v2886 = vpop.f32.mrb[0].mxu0
    %v2887 = vadd.f32 0.0, %v2886
    %v2888 = vpop.f32.mrb[0].mxu0
    %2889 = vmatprep.mubr.f32.mxu0 0.0
    %2890 = vmatmul.mubr.f32.gmra.mrb[0].mxu0 %v2768
    %v2891 = vpop.f32.mrb[0].mxu0
    %v2892 = vadd.f32 0.0, %v2891
    %v2893 = vpop.f32.mrb[0].mxu0
    %2894 = vmatprep.mubr.f32.mxu0 0.0
    %2895 = vmatmul.mubr.f32.gmra.mrb[0].mxu0 %v2769
    %v2896 = vpop.f32.mrb[0].mxu0
    %v2897 = vadd.f32 0.0, %v2896
    %v2898 = vpop.f32.mrb[0].mxu0
    %2899 = vmatprep.mubr.f32.mxu0 0.0
    %2900 = vmatmul.mubr.f32.gmra.mrb[0].mxu0 %v2770
    %v2901 = vpop.f32.mrb[0].mxu0
    %v2902 = vadd.f32 0.0, %v2901
    %v2903 = vpop.f32.mrb[0].mxu0
    %2904 = vmatprep.mubr.f32.mxu0 0.0
    %2905 = vmatmul.mubr.f32.gmra.mrb[0].mxu0 %v2771
    %v2906 = vpop.f32.mrb[0].mxu0
    %v2907 = vadd.f32 0.0, %v2906
    %v2908 = vpop.f32.mrb[0].mxu0
    %2909 = vmatprep.mubr.f32.mxu0 0.0
    %2910 = vmatmul.mubr.f32.gmra.mrb[0].mxu0 %v2772
    %v2911 = vpop.f32.mrb[0].mxu0
    %v2912 = vadd.f32 0.0, %v2911
    %v2913 = vpop.f32.mrb[0].mxu0
    %2914 = vmatprep.mubr.f32.mxu0 0.0
    %2915 = vmatmul.mubr.f32.gmra.mrb[0].mxu0 %v2773
    %v2916 = vpop.f32.mrb[0].mxu0
    %v2917 = vadd.f32 0.0, %v2916
    %v2918 = vpop.f32.mrb[0].mxu0
    %2919 = vmatprep.mubr.f32.mxu0 0.0
    %2920 = vmatmul.mubr.f32.gmra.mrb[0].mxu0 %v2774
    %v2921 = vpop.f32.mrb[0].mxu0
    %v2922 = vadd.f32 0.0, %v2921
    %v2923 = vpop.f32.mrb[0].mxu0
    %2924 = vmatprep.mubr.f32.mxu0 0.0
    %2925 = vmatmul.mubr.f32.gmra.mrb[0].mxu0 %v2775
    %v2926 = vpop.f32.mrb[0].mxu0
    %v2927 = vadd.f32 0.0, %v2926
    %v2928 = vpop.f32.mrb[0].mxu0
    %2929 = vmatprep.mubr.f32.mxu0 0.0
    %2930 = vmatmul.mubr.f32.gmra.mrb[0].mxu0 %v2776
    %v2931 = vpop.f32.mrb[0].mxu0
    %v2932 = vadd.f32 0.0, %v2931
    %v2933 = vpop.f32.mrb[0].mxu0
    %2934 = vmatprep.mubr.f32.mxu0 0.0
    %2935 = vmatmul.mubr.f32.gmra.mrb[0].mxu0 %v2777
    %v2936 = vpop.f32.mrb[0].mxu0
    %v2937 = vadd.f32 0.0, %v2936
    %v2938 = vpop.f32.mrb[0].mxu0
    %2939 = vdwg.mxu0
    %2940 = vmatprep.subr.mxu0 0.0
    %2941 = vmatpush1.msra.mxu0 %v2714
    %2942 = vmatprep.subr.mxu0 0.0
    %2943 = vmatpush1.msra.mxu0 %v2715
    %2944 = vmatprep.subr.mxu0 0.0
    %2945 = vmatpush1.msra.mxu0 %v2716
    %2946 = vmatprep.subr.mxu0 0.0
    %2947 = vmatpush1.msra.mxu0 %v2717
    %2948 = vmatprep.subr.mxu0 0.0
    %2949 = vmatpush1.msra.mxu0 %v2718
    %2950 = vmatprep.subr.mxu0 0.0
    %2951 = vmatpush1.msra.mxu0 %v2719
    %2952 = vmatprep.subr.mxu0 0.0
    %2953 = vmatpush1.msra.mxu0 %v2720
    %2954 = vmatprep.subr.mxu0 0.0
    %2955 = vmatpush1.msra.mxu0 %v2721
    %2956 = vmatprep.subr.mxu0 0.0
    %2957 = vmatpush1.msra.mxu0 %v2722
    %2958 = vmatprep.subr.mxu0 0.0
    %2959 = vmatpush1.msra.mxu0 %v2723
    %2960 = vmatprep.subr.mxu0 0.0
    %2961 = vmatpush1.msra.mxu0 %v2724
    %2962 = vmatprep.subr.mxu0 0.0
    %2963 = vmatpush1.msra.mxu0 %v2725
    %2964 = vmatprep.subr.mxu0 0.0
    %2965 = vmatpush1.msra.mxu0 %v2726
    %2966 = vmatprep.subr.mxu0 0.0
    %2967 = vmatpush1.msra.mxu0 %v2727
    %2968 = vmatprep.subr.mxu0 0.0
    %2969 = vmatpush1.msra.mxu0 %v2728
    %2970 = vmatprep.subr.mxu0 0.0
    %2971 = vmatpush1.msra.mxu0 %v2729
    %2972 = vmatprep.subr.mxu0 0.0
    %2973 = vmatpush1.msra.mxu0 %v2730
    %2974 = vmatprep.subr.mxu0 0.0
    %2975 = vmatpush1.msra.mxu0 %v2731
    %2976 = vmatprep.subr.mxu0 0.0
    %2977 = vmatpush1.msra.mxu0 %v2732
    %2978 = vmatprep.subr.mxu0 0.0
    %2979 = vmatpush1.msra.mxu0 %v2733
    %2980 = vmatprep.subr.mxu0 0.0
    %2981 = vmatpush1.msra.mxu0 %v2734
    %2982 = vmatprep.subr.mxu0 0.0
    %2983 = vmatpush1.msra.mxu0 %v2735
    %2984 = vmatprep.subr.mxu0 0.0
    %2985 = vmatpush1.msra.mxu0 %v2736
    %2986 = vmatprep.subr.mxu0 0.0
    %2987 = vmatpush1.msra.mxu0 %v2737
    %2988 = vmatprep.subr.mxu0 0.0
    %2989 = vmatpush1.msra.mxu0 %v2738
    %2990 = vmatprep.subr.mxu0 0.0
    %2991 = vmatpush1.msra.mxu0 %v2739
    %2992 = vmatprep.subr.mxu0 0.0
    %2993 = vmatpush1.msra.mxu0 %v2740
    %2994 = vmatprep.subr.mxu0 0.0
    %2995 = vmatpush1.msra.mxu0 %v2741
    %2996 = vmatprep.subr.mxu0 0.0
    %2997 = vmatpush1.msra.mxu0 %v2742
    %2998 = vmatprep.subr.mxu0 0.0
    %2999 = vmatpush1.msra.mxu0 %v2743
    %3000 = vmatprep.subr.mxu0 0.0
    %3001 = vmatpush1.msra.mxu0 %v2744
    %3002 = vmatprep.subr.mxu0 0.0
    %3003 = vmatpush1.msra.mxu0 %v2745
    %3004 = vmatprep.mubr.f32.mxu0 %v2667
    %3005 = vmatmul.mubr.f32.gmra.mrb[0].mxu0 %v2666
    %v3006 = vpop.f32.mrb[0].mxu0
    %v3007 = vadd.f32 %v2862, %v3006
    %v3008 = vpop.f32.mrb[0].mxu0
    %3009 = vmatprep.mubr.f32.mxu0 %v2670
    %3010 = vmatmul.mubr.f32.gmra.mrb[0].mxu0 %v2669
    %v3011 = vpop.f32.mrb[0].mxu0
    %v3012 = vadd.f32 %v2867, %v3011
    %v3013 = vpop.f32.mrb[0].mxu0
    %3014 = vmatprep.mubr.f32.mxu0 %v2673
    %3015 = vmatmul.mubr.f32.gmra.mrb[0].mxu0 %v2672
    %v3016 = vpop.f32.mrb[0].mxu0
    %v3017 = vadd.f32 %v2872, %v3016
    %v3018 = vpop.f32.mrb[0].mxu0
    %3019 = vmatprep.mubr.f32.mxu0 %v2676
    %3020 = vmatmul.mubr.f32.gmra.mrb[0].mxu0 %v2675
    %v3021 = vpop.f32.mrb[0].mxu0
    %v3022 = vadd.f32 %v2877, %v3021
    %v3023 = vpop.f32.mrb[0].mxu0
    %3024 = vmatprep.mubr.f32.mxu0 %v2679
    %3025 = vmatmul.mubr.f32.gmra.mrb[0].mxu0 %v2678
    %v3026 = vpop.f32.mrb[0].mxu0
    %v3027 = vadd.f32 %v2882, %v3026
    %v3028 = vpop.f32.mrb[0].mxu0
    %3029 = vmatprep.mubr.f32.mxu0 %v2682
    %3030 = vmatmul.mubr.f32.gmra.mrb[0].mxu0 %v2681
    %v3031 = vpop.f32.mrb[0].mxu0
    %v3032 = vadd.f32 %v2887, %v3031
    %v3033 = vpop.f32.mrb[0].mxu0
    %3034 = vmatprep.mubr.f32.mxu0 %v2685
    %3035 = vmatmul.mubr.f32.gmra.mrb[0].mxu0 %v2684
    %v3036 = vpop.f32.mrb[0].mxu0
    %v3037 = vadd.f32 %v2892, %v3036
    %v3038 = vpop.f32.mrb[0].mxu0
    %3039 = vmatprep.mubr.f32.mxu0 %v2688
    %3040 = vmatmul.mubr.f32.gmra.mrb[0].mxu0 %v2687
    %v3041 = vpop.f32.mrb[0].mxu0
    %v3042 = vadd.f32 %v2897, %v3041
    %v3043 = vpop.f32.mrb[0].mxu0
    %3044 = vmatprep.mubr.f32.mxu0 %v2691
    %3045 = vmatmul.mubr.f32.gmra.mrb[0].mxu0 %v2690
    %v3046 = vpop.f32.mrb[0].mxu0
    %v3047 = vadd.f32 %v2902, %v3046
    %v3048 = vpop.f32.mrb[0].mxu0
    %3049 = vmatprep.mubr.f32.mxu0 %v2694
    %3050 = vmatmul.mubr.f32.gmra.mrb[0].mxu0 %v2693
    %v3051 = vpop.f32.mrb[0].mxu0
    %v3052 = vadd.f32 %v2907, %v3051
    %v3053 = vpop.f32.mrb[0].mxu0
    %3054 = vmatprep.mubr.f32.mxu0 %v2697
    %3055 = vmatmul.mubr.f32.gmra.mrb[0].mxu0 %v2696
    %v3056 = vpop.f32.mrb[0].mxu0
    %v3057 = vadd.f32 %v2912, %v3056
    %v3058 = vpop.f32.mrb[0].mxu0
    %3059 = vmatprep.mubr.f32.mxu0 %v2700
    %3060 = vmatmul.mubr.f32.gmra.mrb[0].mxu0 %v2699
    %v3061 = vpop.f32.mrb[0].mxu0
    %v3062 = vadd.f32 %v2917, %v3061
    %v3063 = vpop.f32.mrb[0].mxu0
    %3064 = vmatprep.mubr.f32.mxu0 %v2703
    %3065 = vmatmul.mubr.f32.gmra.mrb[0].mxu0 %v2702
    %v3066 = vpop.f32.mrb[0].mxu0
    %v3067 = vadd.f32 %v2922, %v3066
    %v3068 = vpop.f32.mrb[0].mxu0
    %3069 = vmatprep.mubr.f32.mxu0 %v2706
    %3070 = vmatmul.mubr.f32.gmra.mrb[0].mxu0 %v2705
    %v3071 = vpop.f32.mrb[0].mxu0
    %v3072 = vadd.f32 %v2927, %v3071
    %v3073 = vpop.f32.mrb[0].mxu0
    %3074 = vmatprep.mubr.f32.mxu0 %v2709
    %3075 = vmatmul.mubr.f32.gmra.mrb[0].mxu0 %v2708
    %v3076 = vpop.f32.mrb[0].mxu0
    %v3077 = vadd.f32 %v2932, %v3076
    %v3078 = vpop.f32.mrb[0].mxu0
    %3079 = vmatprep.mubr.f32.mxu0 %v2712
    %3080 = vmatmul.mubr.f32.gmra.mrb[0].mxu0 %v2711
    %v3081 = vpop.f32.mrb[0].mxu0
    %v3082 = vadd.f32 %v2937, %v3081
    %v3083 = vpop.f32.mrb[0].mxu0
    %3084 = vdwg.mxu0
    %3085 = vmatprep.subr.mxu0 0.0
    %3086 = vmatpush1.msra.mxu0 %v2746
    %3087 = vmatprep.subr.mxu0 0.0
    %3088 = vmatpush1.msra.mxu0 %v2747
    %3089 = vmatprep.subr.mxu0 0.0
    %3090 = vmatpush1.msra.mxu0 %v2748
    %3091 = vmatprep.subr.mxu0 0.0
    %3092 = vmatpush1.msra.mxu0 %v2749
    %3093 = vmatprep.subr.mxu0 0.0
    %3094 = vmatpush1.msra.mxu0 %v2750
    %3095 = vmatprep.subr.mxu0 0.0
    %3096 = vmatpush1.msra.mxu0 %v2751
    %3097 = vmatprep.subr.mxu0 0.0
    %3098 = vmatpush1.msra.mxu0 %v2752
    %3099 = vmatprep.subr.mxu0 0.0
    %3100 = vmatpush1.msra.mxu0 %v2753
    %3101 = vmatprep.subr.mxu0 0.0
    %3102 = vmatpush1.msra.mxu0 %v2754
    %3103 = vmatprep.subr.mxu0 0.0
    %3104 = vmatpush1.msra.mxu0 %v2755
    %3105 = vmatprep.subr.mxu0 0.0
    %3106 = vmatpush1.msra.mxu0 %v2756
    %3107 = vmatprep.subr.mxu0 0.0
    %3108 = vmatpush1.msra.mxu0 %v2757
    %3109 = vmatprep.subr.mxu0 0.0
    %3110 = vmatpush1.msra.mxu0 %v2758
    %3111 = vmatprep.subr.mxu0 0.0
    %3112 = vmatpush1.msra.mxu0 %v2759
    %3113 = vmatprep.subr.mxu0 0.0
    %3114 = vmatpush1.msra.mxu0 %v2760
    %3115 = vmatprep.subr.mxu0 0.0
    %3116 = vmatpush1.msra.mxu0 %v2761
    %3117 = vmatprep.subr.mxu0 0.0
    %3118 = vmatpush1.msra.mxu0 0.0
    %3119 = vmatprep.subr.mxu0 0.0
    %3120 = vmatpush1.msra.mxu0 0.0
    %3121 = vmatprep.subr.mxu0 0.0
    %3122 = vmatpush1.msra.mxu0 0.0
    %3123 = vmatprep.subr.mxu0 0.0
    %3124 = vmatpush1.msra.mxu0 0.0
    %3125 = vmatprep.subr.mxu0 0.0
    %3126 = vmatpush1.msra.mxu0 0.0
    %3127 = vmatprep.subr.mxu0 0.0
    %3128 = vmatpush1.msra.mxu0 0.0
    %3129 = vmatprep.subr.mxu0 0.0
    %3130 = vmatpush1.msra.mxu0 0.0
    %3131 = vmatprep.subr.mxu0 0.0
    %3132 = vmatpush1.msra.mxu0 0.0
    %3133 = vmatprep.subr.mxu0 0.0
    %3134 = vmatpush1.msra.mxu0 0.0
    %3135 = vmatprep.subr.mxu0 0.0
    %3136 = vmatpush1.msra.mxu0 0.0
    %3137 = vmatprep.subr.mxu0 0.0
    %3138 = vmatpush1.msra.mxu0 0.0
    %3139 = vmatprep.subr.mxu0 0.0
    %3140 = vmatpush1.msra.mxu0 0.0
    %3141 = vmatprep.subr.mxu0 0.0
    %3142 = vmatpush1.msra.mxu0 0.0
    %3143 = vmatprep.subr.mxu0 0.0
    %3144 = vmatpush1.msra.mxu0 0.0
    %3145 = vmatprep.subr.mxu0 0.0
    %3146 = vmatpush1.msra.mxu0 0.0
    %3147 = vmatprep.subr.mxu0 0.0
    %3148 = vmatpush1.msra.mxu0 0.0
    %3149 = vmatprep.mubr.f32.mxu0 0.0
    %3150 = vmatmul.mubr.f32.gmra.mrb[0].mxu0 %v2668
    %v3151 = vpop.f32.mrb[0].mxu0
    %v3152 = vadd.f32 %v3007, %v3151
    %v3153 = vpop.f32.mrb[0].mxu0
    %3154 = vmatprep.mubr.f32.mxu0 0.0
    %3155 = vmatmul.mubr.f32.gmra.mrb[0].mxu0 %v2671
    %v3156 = vpop.f32.mrb[0].mxu0
    %v3157 = vadd.f32 %v3012, %v3156
    %v3158 = vpop.f32.mrb[0].mxu0
    %3159 = vmatprep.mubr.f32.mxu0 0.0
    %3160 = vmatmul.mubr.f32.gmra.mrb[0].mxu0 %v2674
    %v3161 = vpop.f32.mrb[0].mxu0
    %v3162 = vadd.f32 %v3017, %v3161
    %v3163 = vpop.f32.mrb[0].mxu0
    %3164 = vmatprep.mubr.f32.mxu0 0.0
    %3165 = vmatmul.mubr.f32.gmra.mrb[0].mxu0 %v2677
    %v3166 = vpop.f32.mrb[0].mxu0
    %v3167 = vadd.f32 %v3022, %v3166
    %v3168 = vpop.f32.mrb[0].mxu0
    %3169 = vmatprep.mubr.f32.mxu0 0.0
    %3170 = vmatmul.mubr.f32.gmra.mrb[0].mxu0 %v2680
    %v3171 = vpop.f32.mrb[0].mxu0
    %v3172 = vadd.f32 %v3027, %v3171
    %v3173 = vpop.f32.mrb[0].mxu0
    %3174 = vmatprep.mubr.f32.mxu0 0.0
    %3175 = vmatmul.mubr.f32.gmra.mrb[0].mxu0 %v2683
    %v3176 = vpop.f32.mrb[0].mxu0
    %v3177 = vadd.f32 %v3032, %v3176
    %v3178 = vpop.f32.mrb[0].mxu0
    %3179 = vmatprep.mubr.f32.mxu0 0.0
    %3180 = vmatmul.mubr.f32.gmra.mrb[0].mxu0 %v2686
    %v3181 = vpop.f32.mrb[0].mxu0
    %v3182 = vadd.f32 %v3037, %v3181
    %v3183 = vpop.f32.mrb[0].mxu0
    %3184 = vmatprep.mubr.f32.mxu0 0.0
    %3185 = vmatmul.mubr.f32.gmra.mrb[0].mxu0 %v2689
    %v3186 = vpop.f32.mrb[0].mxu0
    %v3187 = vadd.f32 %v3042, %v3186
    %v3188 = vpop.f32.mrb[0].mxu0
    %3189 = vmatprep.mubr.f32.mxu0 0.0
    %3190 = vmatmul.mubr.f32.gmra.mrb[0].mxu0 %v2692
    %v3191 = vpop.f32.mrb[0].mxu0
    %v3192 = vadd.f32 %v3047, %v3191
    %v3193 = vpop.f32.mrb[0].mxu0
    %3194 = vmatprep.mubr.f32.mxu0 0.0
    %3195 = vmatmul.mubr.f32.gmra.mrb[0].mxu0 %v2695
    %v3196 = vpop.f32.mrb[0].mxu0
    %v3197 = vadd.f32 %v3052, %v3196
    %v3198 = vpop.f32.mrb[0].mxu0
    %3199 = vmatprep.mubr.f32.mxu0 0.0
    %3200 = vmatmul.mubr.f32.gmra.mrb[0].mxu0 %v2698
    %v3201 = vpop.f32.mrb[0].mxu0
    %v3202 = vadd.f32 %v3057, %v3201
    %v3203 = vpop.f32.mrb[0].mxu0
    %3204 = vmatprep.mubr.f32.mxu0 0.0
    %3205 = vmatmul.mubr.f32.gmra.mrb[0].mxu0 %v2701
    %v3206 = vpop.f32.mrb[0].mxu0
    %v3207 = vadd.f32 %v3062, %v3206
    %v3208 = vpop.f32.mrb[0].mxu0
    %3209 = vmatprep.mubr.f32.mxu0 0.0
    %3210 = vmatmul.mubr.f32.gmra.mrb[0].mxu0 %v2704
    %v3211 = vpop.f32.mrb[0].mxu0
    %v3212 = vadd.f32 %v3067, %v3211
    %v3213 = vpop.f32.mrb[0].mxu0
    %3214 = vmatprep.mubr.f32.mxu0 0.0
    %3215 = vmatmul.mubr.f32.gmra.mrb[0].mxu0 %v2707
    %v3216 = vpop.f32.mrb[0].mxu0
    %v3217 = vadd.f32 %v3072, %v3216
    %v3218 = vpop.f32.mrb[0].mxu0
    %3219 = vmatprep.mubr.f32.mxu0 0.0
    %3220 = vmatmul.mubr.f32.gmra.mrb[0].mxu0 %v2710
    %v3221 = vpop.f32.mrb[0].mxu0
    %v3222 = vadd.f32 %v3077, %v3221
    %v3223 = vpop.f32.mrb[0].mxu0
    %3224 = vmatprep.mubr.f32.mxu0 0.0
    %3225 = vmatmul.mubr.f32.gmra.mrb[0].mxu0 %v2713
    %v3226 = vpop.f32.mrb[0].mxu0
    %v3227 = vadd.f32 %v3082, %v3226
    %v3228 = vpop.f32.mrb[0].mxu0
    %3229 = vdwg.mxu0
    %s3230 = scalar_lea.vmem %s4, 2
    %v3231 = vld [vmem:[%s3230] sm:$0x1]
    %v3233 = vlaneseq
    %v3234 = vshrl.u32 %v3233, 7
    %v3235 = vsub.s32 0, %v3234
    %v3236 = vrot.slane %v3231, %v3235
    %v3238 = vadd.f32 %v3152, %v3236
    %v3239 = vadd.f32 %v3157, %v3236
    %v3240 = vadd.f32 %v3162, %v3236
    %v3241 = vadd.f32 %v3167, %v3236
    %v3242 = vadd.f32 %v3172, %v3236
    %v3243 = vadd.f32 %v3177, %v3236
    %v3244 = vadd.f32 %v3182, %v3236
    %v3245 = vadd.f32 %v3187, %v3236
    %v3246 = vadd.f32 %v3192, %v3236
    %v3247 = vadd.f32 %v3197, %v3236
    %v3248 = vadd.f32 %v3202, %v3236
    %v3249 = vadd.f32 %v3207, %v3236
    %v3250 = vadd.f32 %v3212, %v3236
    %v3251 = vadd.f32 %v3217, %v3236
    %v3252 = vadd.f32 %v3222, %v3236
    %v3253 = vadd.f32 %v3227, %v3236
    %3254 = vst [vmem:[#allocation4] sm:$0xff] %v3238
    %3255 = vst [vmem:[#allocation4 + $0x8] sm:$0xff] %v3239
    %3256 = vst [vmem:[#allocation4 + $0x10] sm:$0xff] %v3240
    %3257 = vst [vmem:[#allocation4 + $0x18] sm:$0xff] %v3241
    %3258 = vst [vmem:[#allocation4 + $0x20] sm:$0xff] %v3242
    %3259 = vst [vmem:[#allocation4 + $0x28] sm:$0xff] %v3243
    %3260 = vst [vmem:[#allocation4 + $0x30] sm:$0xff] %v3244
    %3261 = vst [vmem:[#allocation4 + $0x38] sm:$0xff] %v3245
    %3262 = vst [vmem:[#allocation4 + $0x40] sm:$0xff] %v3246
    %3263 = vst [vmem:[#allocation4 + $0x48] sm:$0xff] %v3247
    %3264 = vst [vmem:[#allocation4 + $0x50] sm:$0xff] %v3248
    %3265 = vst [vmem:[#allocation4 + $0x58] sm:$0xff] %v3249
    %3266 = vst [vmem:[#allocation4 + $0x60] sm:$0xff] %v3250
    %3267 = vst [vmem:[#allocation4 + $0x68] sm:$0xff] %v3251
    %3268 = vst [vmem:[#allocation4 + $0x70] sm:$0xff] %v3252
    %3269 = vst [vmem:[#allocation4 + $0x78] sm:$0xff] %v3253
    %v3270 = vld [vmem:[#allocation4] sm:$0xff]
    %v3271 = vld [vmem:[#allocation4 + $0x8] sm:$0xff]
    %v3272 = vld [vmem:[#allocation4 + $0x10] sm:$0xff]
    %v3273 = vld [vmem:[#allocation4 + $0x18] sm:$0xff]
    %v3274 = vld [vmem:[#allocation4 + $0x20] sm:$0xff]
    %v3275 = vld [vmem:[#allocation4 + $0x28] sm:$0xff]
    %v3276 = vld [vmem:[#allocation4 + $0x30] sm:$0xff]
    %v3277 = vld [vmem:[#allocation4 + $0x38] sm:$0xff]
    %v3278 = vld [vmem:[#allocation4 + $0x40] sm:$0xff]
    %v3279 = vld [vmem:[#allocation4 + $0x48] sm:$0xff]
    %v3280 = vld [vmem:[#allocation4 + $0x50] sm:$0xff]
    %v3281 = vld [vmem:[#allocation4 + $0x58] sm:$0xff]
    %v3282 = vld [vmem:[#allocation4 + $0x60] sm:$0xff]
    %v3283 = vld [vmem:[#allocation4 + $0x68] sm:$0xff]
    %v3284 = vld [vmem:[#allocation4 + $0x70] sm:$0xff]
    %v3285 = vld [vmem:[#allocation4 + $0x78] sm:$0xff]
    %3286 = vst [vmem:[#allocation13] sm:$0xff] %v3270
    %3287 = vst [vmem:[#allocation13 + $0x8] sm:$0xff] %v3271
    %3288 = vst [vmem:[#allocation13 + $0x10] sm:$0xff] %v3272
    %3289 = vst [vmem:[#allocation13 + $0x18] sm:$0xff] %v3273
    %3290 = vst [vmem:[#allocation13 + $0x20] sm:$0xff] %v3274
    %3291 = vst [vmem:[#allocation13 + $0x28] sm:$0xff] %v3275
    %3292 = vst [vmem:[#allocation13 + $0x30] sm:$0xff] %v3276
    %3293 = vst [vmem:[#allocation13 + $0x38] sm:$0xff] %v3277
    %3294 = vst [vmem:[#allocation13 + $0x40] sm:$0xff] %v3278
    %3295 = vst [vmem:[#allocation13 + $0x48] sm:$0xff] %v3279
    %3296 = vst [vmem:[#allocation13 + $0x50] sm:$0xff] %v3280
    %3297 = vst [vmem:[#allocation13 + $0x58] sm:$0xff] %v3281
    %3298 = vst [vmem:[#allocation13 + $0x60] sm:$0xff] %v3282
    %3299 = vst [vmem:[#allocation13 + $0x68] sm:$0xff] %v3283
    %3300 = vst [vmem:[#allocation13 + $0x70] sm:$0xff] %v3284
    %3301 = vst [vmem:[#allocation13 + $0x78] sm:$0xff] %v3285
    // Predicated region
    $region38: #{tpu_custom_call.1} parent=1 // pred_check
      _
    $region39: #{tpu_custom_call.1} parent=1 // pred_check_branch
      %3303 = sbr.rel (0) target = $region41
    $region40: #{tpu_custom_call.1} parent=1 // pred_region
      %s3305 = ssub.s32 2048, 2048
      %3306 = vsyncadd [#allocation7], %s3305
      %s3307 = sshll.u32 [#allocation13], 4
      %s3308 = int_to_ptr.vmem [resolvable:$true] %s3307
      %3313 = dma.vmem_to_hbm [thread:$0]  %s3308, 2048, %s5, [#allocation7], 128, 128, 8
    $region41: #{tpu_custom_call.1} parent=1 // pred_fallthru
      _
    // Predicated region
    $region42: #{tpu_custom_call.1} parent=1 // pred_check
      _
    $region43: #{tpu_custom_call.1} parent=1 // pred_check_branch
      %3315 = sbr.rel (0) target = $region45
    $region44: #{tpu_custom_call.1} parent=1 // pred_region
      %3316 = dma.done [#allocation7], 2048
    $region45: #{tpu_custom_call.1} parent=1 // pred_fallthru
      _
    %3317 = vsyncpa [#allocation6], 1
    %3318 = vsyncpa [#allocation9], 1
    %3319 = vsyncpa [#allocation12], 1
    %3320 = vsyncpa [#allocation7], 1

</llo_original>
